<compile_context>
chip_gen: v7x
topology: tpu7x:2x2x1
jax: 0.10.0
libtpu: 0.0.40
codegen_flags: <defaults>
</compile_context>

<pallas_src>
import functools

import jax
import jax.numpy as jnp
from jax.experimental import pallas as pl
from jax.experimental.pallas import tpu as pltpu


def _round_up(x, m):
    return ((x + m - 1) // m) * m


# ---------------------------------------------------------------------------
# Kernel: whole sequence in one grid step.
# ---------------------------------------------------------------------------
def _gaussian_lstm_kernel(x2_ref, eps_ref, h0_ref, c0_ref, pack_ref,
                          out_ref, h_ref, c_ref, g0_scr, *,
                          n_layers, n_steps, batch, out_size, hp, i_rows,
                          off_cat, off_head, off_bias):
    L, T, B, O, HP = n_layers, n_steps, batch, out_size, hp

    # Hidden/cell state lives in the VMEM-resident output blocks for the whole kernel.
    h_ref[...] = h0_ref[...]
    c_ref[...] = c0_ref[...]

    # ---- prologue: hoisted, non-recurrent tall matmuls ----------------------
    # embed: (T*B, I_rows) @ (I_rows, HP) + b   (padded rows/lanes are zero)
    w_emb = pack_ref[0:i_rows, 0:HP]
    b_emb = pack_ref[off_bias:off_bias + 1, 0:HP]
    emb = jnp.dot(x2_ref[...], w_emb, preferred_element_type=jnp.float32) + b_emb

    # layer-0 input->gates for ALL timesteps in one (T*B)-row MXU call.
    w_ih0 = pack_ref[off_cat:off_cat + HP, :]
    b_cat0 = pack_ref[off_bias + 8:off_bias + 9, :]
    g0_scr[...] = jnp.dot(emb, w_ih0, preferred_element_type=jnp.float32) + b_cat0

    # Loop-invariant weight loads, hoisted out of the serial time loop.
    w_hh0 = pack_ref[off_cat + HP:off_cat + 2 * HP, :]
    w_ih, w_hh, b_cat = [], [], []
    for l in range(1, L):
        r = off_cat + 2 * HP * l
        w_ih.append(pack_ref[r:r + HP, :])
        w_hh.append(pack_ref[r + HP:r + 2 * HP, :])
        br = off_bias + 8 * (1 + l)
        b_cat.append(pack_ref[br:br + 1, :])
    w_head = pack_ref[off_head:off_head + HP, 0:HP]
    hr = off_bias + 8 * (1 + L)
    b_head = pack_ref[hr:hr + 1, 0:HP]

    def lstm_elementwise(gates, c_prev):
        # PyTorch LSTMCell gate order i, f, g, o; each gate occupies HP (=128k) lanes.
        i_g = jax.nn.sigmoid(gates[:, 0 * HP:1 * HP])
        f_g = jax.nn.sigmoid(gates[:, 1 * HP:2 * HP])
        g_g = jnp.tanh(gates[:, 2 * HP:3 * HP])
        o_g = jax.nn.sigmoid(gates[:, 3 * HP:4 * HP])
        c_new = f_g * c_prev + i_g * g_g
        h_new = o_g * jnp.tanh(c_new)
        return h_new, c_new

    # ---- serial recurrence over timesteps -----------------------------------
    def step(t, carry):
        row = t * B  # row offset of this timestep in the precomputed layer-0 gate slab

        # layer 0: precomputed ih gates + recurrent hh matmul.
        gates = g0_scr[pl.ds(row, B), :] + jnp.dot(
            h_ref[0], w_hh0, preferred_element_type=jnp.float32)
        h_new, c_new = lstm_elementwise(gates, c_ref[0])
        h_ref[0] = h_new
        c_ref[0] = c_new
        h_in = h_new

        # layers 1..L-1: two dots (no concat), summed bias.
        for l in range(1, L):
            gates = (jnp.dot(h_in, w_ih[l - 1], preferred_element_type=jnp.float32)
                     + jnp.dot(h_ref[l], w_hh[l - 1], preferred_element_type=jnp.float32)
                     + b_cat[l - 1])
            h_new, c_new = lstm_elementwise(gates, c_ref[l])
            h_ref[l] = h_new
            c_ref[l] = c_new
            h_in = h_new

        # fused mu|logvar head + reparameterize.
        mulv = jnp.dot(h_in, w_head, preferred_element_type=jnp.float32) + b_head
        mu = mulv[:, 0:O]
        lv = mulv[:, O:2 * O]
        z = eps_ref[t] * jnp.exp(0.5 * lv) + mu

        # Two direct stores into the lane-dense output slab (no concat):
        # layout per row: [ z (O) | mu (O) | logvar (O) | pad ... 128 ]
        out_ref[t, :, 0:O] = z
        out_ref[t, :, O:3 * O] = mulv[:, 0:2 * O]
        return carry

    jax.lax.fori_loop(0, T, step, 0, unroll=(T <= 16))


# ---------------------------------------------------------------------------
# Parameter packing (wrapper side, done once)
# ---------------------------------------------------------------------------
def pack_params(p, input_size, output_size, hidden_size, n_layers):
    I, O, H, L = input_size, output_size, hidden_size, n_layers
    HP = _round_up(H, 128)
    assert 2 * O <= HP, "fused mu|logvar head must fit in HP lanes"
    C = 4 * HP
    I_rows = _round_up(I, 8)

    off_cat = I_rows
    off_head = off_cat + L * 2 * HP
    off_bias = off_head + HP
    rows = off_bias + 8 * (2 + L)

    def pad_gate_mat(w):  # (H, 4H) -> (HP, 4HP), each gate block padded independently
        w = w.reshape(H, 4, H)
        w = jnp.pad(w, ((0, HP - H), (0, 0), (0, HP - H)))
        return w.reshape(HP, 4 * HP)

    def pad_gate_vec(b):  # (1, 4H) -> (1, 4HP)
        b = b.reshape(4, H)
        b = jnp.pad(b, ((0, 0), (0, HP - H)))
        return b.reshape(1, 4 * HP)

    pack = jnp.zeros((rows, C), jnp.float32)
    # embed
    pack = pack.at[0:I, 0:H].set(p["w_emb_t"])
    pack = pack.at[off_bias:off_bias + 1, 0:H].set(p["b_emb"])
    # per-layer [W_ih ; W_hh] (stored as two HP-row halves) and summed biases
    for l in range(L):
        r = off_cat + 2 * HP * l
        pack = pack.at[r:r + HP, :].set(pad_gate_mat(p["w_ih_t"][l]))
        pack = pack.at[r + HP:r + 2 * HP, :].set(pad_gate_mat(p["w_hh_t"][l]))
        br = off_bias + 8 * (1 + l)
        pack = pack.at[br:br + 1, :].set(pad_gate_vec(p["b_ih"][l] + p["b_hh"][l]))
    # fused mu|logvar head
    w_head = jnp.concatenate([p["w_mu_t"], p["w_lv_t"]], axis=1)   # (H, 2O)
    b_head = jnp.concatenate([p["b_mu"], p["b_lv"]], axis=1)       # (1, 2O)
    pack = pack.at[off_head:off_head + H, 0:2 * O].set(w_head)
    hr = off_bias + 8 * (1 + L)
    pack = pack.at[hr:hr + 1, 0:2 * O].set(b_head)

    meta = dict(I=I, O=O, H=H, HP=HP, L=L, I_rows=I_rows, rows=rows, cols=C,
                off_cat=off_cat, off_head=off_head, off_bias=off_bias)
    return pack, meta


# ---------------------------------------------------------------------------
# Wrappers
# ---------------------------------------------------------------------------
def gaussian_lstm_forward_seq(x_seq, eps_seq, hidden, pack, meta):
    """Run T per-frame forward steps fused inside ONE pallas_call (single grid step).

    x_seq: (T, B, I), eps_seq: (T, B, O), hidden: (h0, c0) each (L, B, H).
    Returns ((z, mu, logvar) each (T, B, O), (h_new, c_new) each (L, B, H)).
    """
    T, B, I = x_seq.shape
    O, H, HP, L = meta["O"], meta["H"], meta["HP"], meta["L"]
    I_rows = meta["I_rows"]
    OL = max(128, _round_up(3 * O, 128))   # lane-dense output slab width

    h0, c0 = hidden
    h0p = jnp.pad(h0.astype(jnp.float32), ((0, 0), (0, 0), (0, HP - H)))
    c0p = jnp.pad(c0.astype(jnp.float32), ((0, 0), (0, 0), (0, HP - H)))

    # Flatten time*batch for the hoisted tall matmuls; pad rows to sublane multiple and
    # lanes to the sublane-rounded weight rows (padding is zero -> contributes nothing).
    TB = T * B
    TBp = _round_up(TB, 8)
    x2 = x_seq.reshape(TB, I).astype(jnp.float32)
    x2 = jnp.pad(x2, ((0, TBp - TB), (0, I_rows - I)))

    kernel = functools.partial(
        _gaussian_lstm_kernel,
        n_layers=L, n_steps=T, batch=B, out_size=O, hp=HP, i_rows=I_rows,
        off_cat=meta["off_cat"], off_head=meta["off_head"], off_bias=meta["off_bias"])

    out_shape = (
        jax.ShapeDtypeStruct((T, B, OL), jnp.float32),   # [z | mu | logvar | pad]
        jax.ShapeDtypeStruct((L, B, HP), jnp.float32),   # h_new (padded)
        jax.ShapeDtypeStruct((L, B, HP), jnp.float32),   # c_new (padded)
    )
    in_specs = [
        pl.BlockSpec((TBp, I_rows), lambda i: (0, 0)),            # x (flattened T*B)
        pl.BlockSpec((T, B, O), lambda i: (0, 0, 0)),             # eps
        pl.BlockSpec((L, B, HP), lambda i: (0, 0, 0)),            # h0
        pl.BlockSpec((L, B, HP), lambda i: (0, 0, 0)),            # c0
        pl.BlockSpec((meta["rows"], meta["cols"]), lambda i: (0, 0)),  # packed weights
    ]
    out_specs = (
        pl.BlockSpec((T, B, OL), lambda i: (0, 0, 0)),
        pl.BlockSpec((L, B, HP), lambda i: (0, 0, 0)),
        pl.BlockSpec((L, B, HP), lambda i: (0, 0, 0)),
    )

    out, h_new, c_new = pl.pallas_call(
        kernel,
        grid=(1,),                                    # whole recurrence inside one step
        in_specs=in_specs,
        out_specs=out_specs,
        out_shape=out_shape,
        scratch_shapes=[pltpu.VMEM((TBp, 4 * HP), jnp.float32)],  # hoisted layer-0 gates
        compiler_params=pltpu.CompilerParams(dimension_semantics=("arbitrary",)),
    )(x2, eps_seq.astype(jnp.float32), h0p, c0p, pack)

    z = out[..., 0:O]
    mu = out[..., O:2 * O]
    lv = out[..., 2 * O:3 * O]
    return (z, mu, lv), (h_new[..., :H], c_new[..., :H])


def gaussian_lstm_forward(x, eps, hidden, pack, meta):
    """Single-step forward, matching one call of the PyTorch module's forward()."""
    (z, mu, lv), new_hidden = gaussian_lstm_forward_seq(
        x[None], eps[None], hidden, pack, meta)
    return (z[0], mu[0], lv[0]), new_hidden


# ---------------------------------------------------------------------------
# Pure-JAX reference matching the PyTorch module semantics
# ---------------------------------------------------------------------------
def ref_forward_step(x, eps, h_list, c_list, p, n_layers):
    h_in = x @ p["w_emb_t"] + p["b_emb"]
    H = h_in.shape[-1]
    new_h, new_c = [], []
    for l in range(n_layers):
        gates = (h_in @ p["w_ih_t"][l] + p["b_ih"][l]
                 + h_list[l] @ p["w_hh_t"][l] + p["b_hh"][l])
        i_g = jax.nn.sigmoid(gates[:, 0 * H:1 * H])
        f_g = jax.nn.sigmoid(gates[:, 1 * H:2 * H])
        g_g = jnp.tanh(gates[:, 2 * H:3 * H])
        o_g = jax.nn.sigmoid(gates[:, 3 * H:4 * H])
        c = f_g * c_list[l] + i_g * g_g
        h = o_g * jnp.tanh(c)
        new_h.append(h)
        new_c.append(c)
        h_in = h
    mu = h_in @ p["w_mu_t"] + p["b_mu"]
    lv = h_in @ p["w_lv_t"] + p["b_lv"]
    z = eps * jnp.exp(0.5 * lv) + mu
    return z, mu, lv, new_h, new_c


def ref_forward_seq(x_seq, eps_seq, hidden, p, n_layers):
    h_list = [hidden[0][l] for l in range(n_layers)]
    c_list = [hidden[1][l] for l in range(n_layers)]
    zs, mus, lvs = [], [], []
    for t in range(x_seq.shape[0]):
        z, mu, lv, h_list, c_list = ref_forward_step(
            x_seq[t], eps_seq[t], h_list, c_list, p, n_layers)
        zs.append(z); mus.append(mu); lvs.append(lv)
    return ((jnp.stack(zs), jnp.stack(mus), jnp.stack(lvs)),
            (jnp.stack(h_list), jnp.stack(c_list)))


def init_params(key, input_size, output_size, hidden_size, n_layers):
    """Deterministic synthetic parameters (PyTorch-default-style uniform init)."""
    ks = jax.random.split(key, 12)
    H, I, O, L = hidden_size, input_size, output_size, n_layers

    def u(k, shape, fan_in):
        s = 1.0 / jnp.sqrt(fan_in)
        return jax.random.uniform(k, shape, jnp.float32, -s, s)

    return {
        "w_emb_t": u(ks[0], (I, H), I),
        "b_emb":   u(ks[1], (1, H), I),
        "w_ih_t":  u(ks[2], (L, H, 4 * H), H),
        "w_hh_t":  u(ks[3], (L, H, 4 * H), H),
        "b_ih":    u(ks[4], (L, 1, 4 * H), H),
        "b_hh":    u(ks[5], (L, 1, 4 * H), H),
        "w_mu_t":  u(ks[6], (H, O), H),
        "b_mu":    u(ks[7], (1, O), H),
        "w_lv_t":  u(ks[8], (H, O), H),
        "b_lv":    u(ks[9], (1, O), H),
    }


if __name__ == "__main__":
    B, INPUT, OUTPUT, HIDDEN, N_LAYERS, T = 8, 16, 16, 32, 2, 6

    key = jax.random.PRNGKey(0)
    k_x, k_eps, k_p = jax.random.split(key, 3)

    x_seq = jax.random.normal(k_x, (T, B, INPUT), jnp.float32)
    # eps is the N(0,1) sample used by reparameterize (torch's .normal_()),
    # generated deterministically here and fed to the kernel.
    eps_seq = jax.random.normal(k_eps, (T, B, OUTPUT), jnp.float32)

    params = init_params(k_p, INPUT, OUTPUT, HIDDEN, N_LAYERS)
    pack, meta = pack_params(params, INPUT, OUTPUT, HIDDEN, N_LAYERS)

    # init_hidden: zeros for every layer.
    h0 = jnp.zeros((N_LAYERS, B, HIDDEN), jnp.float32)
    c0 = jnp.zeros((N_LAYERS, B, HIDDEN), jnp.float32)

    # T fused per-frame forward steps in one pallas_call (single grid step).
    (z, mu, logvar), (h_new, c_new) = gaussian_lstm_forward_seq(
        x_seq, eps_seq, (h0, c0), pack, meta)
    jax.block_until_ready((z, mu, logvar, h_new, c_new))

    (z_r, mu_r, lv_r), (h_r, c_r) = ref_forward_seq(
        x_seq, eps_seq, (h0, c0), params, N_LAYERS)

    for a, b, name in ((z, z_r, "z"), (mu, mu_r, "mu"), (logvar, lv_r, "logvar"),
                       (h_new, h_r, "h"), (c_new, c_r, "c")):
        assert jnp.allclose(a, b, atol=1e-4, rtol=1e-4), f"mismatch: {name}"

    # Also exercise the single-step wrapper (one module.forward() call).
    (z1, mu1, lv1), _ = gaussian_lstm_forward(x_seq[0], eps_seq[0], (h0, c0), pack, meta)
    assert jnp.allclose(z1, z_r[0], atol=1e-4, rtol=1e-4)
    assert jnp.allclose(mu1, mu_r[0], atol=1e-4, rtol=1e-4)
    assert jnp.allclose(lv1, lv_r[0], atol=1e-4, rtol=1e-4)

    print("KERNEL_OK")
</pallas_src>

<mosaic_0001>
module attributes {stable_mosaic.version = 11 : i64} {
  func.func @_gaussian_lstm_kernel(%arg0: i32, %arg1: memref<48x16xf32, #tpu.memory_space<vmem>>, %arg2: memref<6x8x16xf32, #tpu.memory_space<vmem>>, %arg3: memref<2x8x128xf32, #tpu.memory_space<vmem>>, %arg4: memref<2x8x128xf32, #tpu.memory_space<vmem>>, %arg5: memref<688x512xf32, #tpu.memory_space<vmem>>, %arg6: memref<6x8x128xf32, #tpu.memory_space<vmem>>, %arg7: memref<2x8x128xf32, #tpu.memory_space<vmem>>, %arg8: memref<2x8x128xf32, #tpu.memory_space<vmem>>, %arg9: memref<48x512xf32, #tpu.memory_space<vmem>>) attributes {dimension_semantics = [#tpu.dimension_semantics<arbitrary>], iteration_bounds = array<i64: 1>, scalar_prefetch = 0 : i64, scratch_operands = 1 : i64, tpu.core_type = #tpu.core_type<tc>, window_params = [{pipeline_mode = #tpu.pipeline_mode<synchronous>, transform_indices = @transform_0, window_bounds = array<i64: 48, 16>}, {pipeline_mode = #tpu.pipeline_mode<synchronous>, transform_indices = @transform_1, window_bounds = array<i64: 6, 8, 16>}, {pipeline_mode = #tpu.pipeline_mode<synchronous>, transform_indices = @transform_2, window_bounds = array<i64: 2, 8, 128>}, {pipeline_mode = #tpu.pipeline_mode<synchronous>, transform_indices = @transform_3, window_bounds = array<i64: 2, 8, 128>}, {pipeline_mode = #tpu.pipeline_mode<synchronous>, transform_indices = @transform_4, window_bounds = array<i64: 688, 512>}, {pipeline_mode = #tpu.pipeline_mode<synchronous>, transform_indices = @transform_5, window_bounds = array<i64: 6, 8, 128>}, {pipeline_mode = #tpu.pipeline_mode<synchronous>, transform_indices = @transform_6, window_bounds = array<i64: 2, 8, 128>}, {pipeline_mode = #tpu.pipeline_mode<synchronous>, transform_indices = @transform_7, window_bounds = array<i64: 2, 8, 128>}]} {
    %c0 = arith.constant 0 : index
    %c0_0 = arith.constant 0 : index
    %c0_1 = arith.constant 0 : index
    %0 = vector.load %arg3[%c0, %c0_0, %c0_1] : memref<2x8x128xf32, #tpu.memory_space<vmem>>, vector<2x8x128xf32>
    %c0_2 = arith.constant 0 : index
    %c0_3 = arith.constant 0 : index
    %c0_4 = arith.constant 0 : index
    %1 = vector.load %arg7[%c0_2, %c0_3, %c0_4] : memref<2x8x128xf32, #tpu.memory_space<vmem>>, vector<2x8x128xf32>
    tpu.vector_store %arg7[%c0_2, %c0_3, %c0_4], %0 {strides = array<i32>} : memref<2x8x128xf32, #tpu.memory_space<vmem>>, vector<2x8x128xf32>,
    %c0_5 = arith.constant 0 : index
    %c0_6 = arith.constant 0 : index
    %c0_7 = arith.constant 0 : index
    %2 = vector.load %arg4[%c0_5, %c0_6, %c0_7] : memref<2x8x128xf32, #tpu.memory_space<vmem>>, vector<2x8x128xf32>
    %c0_8 = arith.constant 0 : index
    %c0_9 = arith.constant 0 : index
    %c0_10 = arith.constant 0 : index
    %3 = vector.load %arg8[%c0_8, %c0_9, %c0_10] : memref<2x8x128xf32, #tpu.memory_space<vmem>>, vector<2x8x128xf32>
    tpu.vector_store %arg8[%c0_8, %c0_9, %c0_10], %2 {strides = array<i32>} : memref<2x8x128xf32, #tpu.memory_space<vmem>>, vector<2x8x128xf32>,
    %c0_11 = arith.constant 0 : index
    %c0_12 = arith.constant 0 : index
    %4 = vector.load %arg5[%c0_11, %c0_12] : memref<688x512xf32, #tpu.memory_space<vmem>>, vector<16x128xf32>
    %c656 = arith.constant 656 : index
    %c0_13 = arith.constant 0 : index
    %5 = vector.load %arg5[%c656, %c0_13] : memref<688x512xf32, #tpu.memory_space<vmem>>, vector<1x128xf32>
    %c0_14 = arith.constant 0 : index
    %c0_15 = arith.constant 0 : index
    %6 = vector.load %arg1[%c0_14, %c0_15] : memref<48x16xf32, #tpu.memory_space<vmem>>, vector<48x16xf32>
    %cst = arith.constant dense<0.000000e+00> : vector<48x128xf32>
    %7 = tpu.matmul %6, %4, %cst {dimension_numbers = #tpu.dot_dimension_numbers<[1], [0], [0], [1], [0, 0, 1, 1], [], []>} : vector<48x16xf32>, vector<16x128xf32>, vector<48x128xf32> -> vector<48x128xf32>
    %8 = vector.broadcast %5 : vector<1x128xf32> to vector<48x128xf32>
    %9 = arith.addf %7, %8 : vector<48x128xf32>
    %c16 = arith.constant 16 : index
    %c0_16 = arith.constant 0 : index
    %10 = vector.load %arg5[%c16, %c0_16] : memref<688x512xf32, #tpu.memory_space<vmem>>, vector<128x512xf32>
    %c664 = arith.constant 664 : index
    %c0_17 = arith.constant 0 : index
    %11 = vector.load %arg5[%c664, %c0_17] : memref<688x512xf32, #tpu.memory_space<vmem>>, vector<1x512xf32>
    %cst_18 = arith.constant dense<0.000000e+00> : vector<48x512xf32>
    %12 = tpu.matmul %9, %10, %cst_18 {dimension_numbers = #tpu.dot_dimension_numbers<[1], [0], [0], [1], [0, 0, 1, 1], [], []>} : vector<48x128xf32>, vector<128x512xf32>, vector<48x512xf32> -> vector<48x512xf32>
    %13 = vector.broadcast %11 : vector<1x512xf32> to vector<48x512xf32>
    %14 = arith.addf %12, %13 : vector<48x512xf32>
    %c0_19 = arith.constant 0 : index
    %c0_20 = arith.constant 0 : index
    %15 = vector.load %arg9[%c0_19, %c0_20] : memref<48x512xf32, #tpu.memory_space<vmem>>, vector<48x512xf32>
    tpu.vector_store %arg9[%c0_19, %c0_20], %14 {strides = array<i32>} : memref<48x512xf32, #tpu.memory_space<vmem>>, vector<48x512xf32>,
    %c144 = arith.constant 144 : index
    %c0_21 = arith.constant 0 : index
    %16 = vector.load %arg5[%c144, %c0_21] : memref<688x512xf32, #tpu.memory_space<vmem>>, vector<128x512xf32>
    %c272 = arith.constant 272 : index
    %c0_22 = arith.constant 0 : index
    %17 = vector.load %arg5[%c272, %c0_22] : memref<688x512xf32, #tpu.memory_space<vmem>>, vector<128x512xf32>
    %c400 = arith.constant 400 : index
    %c0_23 = arith.constant 0 : index
    %18 = vector.load %arg5[%c400, %c0_23] : memref<688x512xf32, #tpu.memory_space<vmem>>, vector<128x512xf32>
    %c672 = arith.constant 672 : index
    %c0_24 = arith.constant 0 : index
    %19 = vector.load %arg5[%c672, %c0_24] : memref<688x512xf32, #tpu.memory_space<vmem>>, vector<1x512xf32>
    %c528 = arith.constant 528 : index
    %c0_25 = arith.constant 0 : index
    %20 = vector.load %arg5[%c528, %c0_25] : memref<688x512xf32, #tpu.memory_space<vmem>>, vector<128x128xf32>
    %c680 = arith.constant 680 : index
    %c0_26 = arith.constant 0 : index
    %21 = vector.load %arg5[%c680, %c0_26] : memref<688x512xf32, #tpu.memory_space<vmem>>, vector<1x128xf32>
    %c0_i32 = arith.constant 0 : i32
    %c8_i32 = arith.constant 8 : i32
    %22 = arith.muli %c0_i32, %c8_i32 : i32
    %23 = arith.index_cast %22 : i32 to index
    %c0_27 = arith.constant 0 : index
    %24 = vector.load %arg9[%23, %c0_27] : memref<48x512xf32, #tpu.memory_space<vmem>>, vector<8x512xf32>
    %c0_28 = arith.constant 0 : index
    %c0_29 = arith.constant 0 : index
    %c0_30 = arith.constant 0 : index
    %25 = vector.load %arg7[%c0_28, %c0_29, %c0_30] : memref<2x8x128xf32, #tpu.memory_space<vmem>>, vector<1x8x128xf32>
    %26 = vector.shape_cast %25 : vector<1x8x128xf32> to vector<8x128xf32>
    %cst_31 = arith.constant dense<0.000000e+00> : vector<8x512xf32>
    %27 = tpu.matmul %26, %16, %cst_31 {dimension_numbers = #tpu.dot_dimension_numbers<[1], [0], [0], [1], [0, 0, 1, 1], [], []>} : vector<8x128xf32>, vector<128x512xf32>, vector<8x512xf32> -> vector<8x512xf32>
    %28 = arith.addf %24, %27 : vector<8x512xf32>
    %c0_32 = arith.constant 0 : index
    %c0_33 = arith.constant 0 : index
    %c0_34 = arith.constant 0 : index
    %29 = vector.load %arg8[%c0_32, %c0_33, %c0_34] : memref<2x8x128xf32, #tpu.memory_space<vmem>>, vector<1x8x128xf32>
    %30 = vector.shape_cast %29 : vector<1x8x128xf32> to vector<8x128xf32>
    %31 = vector.extract_strided_slice %28 {offsets = [0, 0], sizes = [8, 128], strides = [1, 1]} : vector<8x512xf32> to vector<8x128xf32>
    %32 = arith.negf %31 : vector<8x128xf32>
    %33 = math.exp %32 : vector<8x128xf32>
    %cst_35 = arith.constant 1.000000e+00 : f32
    %34 = vector.broadcast %cst_35 : f32 to vector<8x128xf32>
    %35 = arith.addf %34, %33 : vector<8x128xf32>
    %36 = arith.divf %34, %35 : vector<8x128xf32>
    %37 = vector.extract_strided_slice %28 {offsets = [0, 128], sizes = [8, 128], strides = [1, 1]} : vector<8x512xf32> to vector<8x128xf32>
    %38 = arith.negf %37 : vector<8x128xf32>
    %39 = math.exp %38 : vector<8x128xf32>
    %cst_36 = arith.constant 1.000000e+00 : f32
    %40 = vector.broadcast %cst_36 : f32 to vector<8x128xf32>
    %41 = arith.addf %40, %39 : vector<8x128xf32>
    %42 = arith.divf %40, %41 : vector<8x128xf32>
    %43 = vector.extract_strided_slice %28 {offsets = [0, 256], sizes = [8, 128], strides = [1, 1]} : vector<8x512xf32> to vector<8x128xf32>
    %44 = math.tanh %43 : vector<8x128xf32>
    %45 = vector.extract_strided_slice %28 {offsets = [0, 384], sizes = [8, 128], strides = [1, 1]} : vector<8x512xf32> to vector<8x128xf32>
    %46 = arith.negf %45 : vector<8x128xf32>
    %47 = math.exp %46 : vector<8x128xf32>
    %cst_37 = arith.constant 1.000000e+00 : f32
    %48 = vector.broadcast %cst_37 : f32 to vector<8x128xf32>
    %49 = arith.addf %48, %47 : vector<8x128xf32>
    %50 = arith.divf %48, %49 : vector<8x128xf32>
    %51 = arith.mulf %42, %30 : vector<8x128xf32>
    %52 = arith.mulf %36, %44 : vector<8x128xf32>
    %53 = arith.addf %51, %52 : vector<8x128xf32>
    %54 = math.tanh %53 : vector<8x128xf32>
    %55 = arith.mulf %50, %54 : vector<8x128xf32>
    %c0_38 = arith.constant 0 : index
    %c0_39 = arith.constant 0 : index
    %c0_40 = arith.constant 0 : index
    %56 = vector.load %arg7[%c0_38, %c0_39, %c0_40] : memref<2x8x128xf32, #tpu.memory_space<vmem>>, vector<1x8x128xf32>
    %57 = vector.shape_cast %56 : vector<1x8x128xf32> to vector<8x128xf32>
    %58 = vector.shape_cast %55 : vector<8x128xf32> to vector<1x8x128xf32>
    tpu.vector_store %arg7[%c0_38, %c0_39, %c0_40], %58 {strides = array<i32>} : memref<2x8x128xf32, #tpu.memory_space<vmem>>, vector<1x8x128xf32>,
    %c0_41 = arith.constant 0 : index
    %c0_42 = arith.constant 0 : index
    %c0_43 = arith.constant 0 : index
    %59 = vector.load %arg8[%c0_41, %c0_42, %c0_43] : memref<2x8x128xf32, #tpu.memory_space<vmem>>, vector<1x8x128xf32>
    %60 = vector.shape_cast %59 : vector<1x8x128xf32> to vector<8x128xf32>
    %61 = vector.shape_cast %53 : vector<8x128xf32> to vector<1x8x128xf32>
    tpu.vector_store %arg8[%c0_41, %c0_42, %c0_43], %61 {strides = array<i32>} : memref<2x8x128xf32, #tpu.memory_space<vmem>>, vector<1x8x128xf32>,
    %cst_44 = arith.constant dense<0.000000e+00> : vector<8x512xf32>
    %62 = tpu.matmul %55, %17, %cst_44 {dimension_numbers = #tpu.dot_dimension_numbers<[1], [0], [0], [1], [0, 0, 1, 1], [], []>} : vector<8x128xf32>, vector<128x512xf32>, vector<8x512xf32> -> vector<8x512xf32>
    %c1 = arith.constant 1 : index
    %c0_45 = arith.constant 0 : index
    %c0_46 = arith.constant 0 : index
    %63 = vector.load %arg7[%c1, %c0_45, %c0_46] : memref<2x8x128xf32, #tpu.memory_space<vmem>>, vector<1x8x128xf32>
    %64 = vector.shape_cast %63 : vector<1x8x128xf32> to vector<8x128xf32>
    %cst_47 = arith.constant dense<0.000000e+00> : vector<8x512xf32>
    %65 = tpu.matmul %64, %18, %cst_47 {dimension_numbers = #tpu.dot_dimension_numbers<[1], [0], [0], [1], [0, 0, 1, 1], [], []>} : vector<8x128xf32>, vector<128x512xf32>, vector<8x512xf32> -> vector<8x512xf32>
    %66 = arith.addf %62, %65 : vector<8x512xf32>
    %67 = vector.broadcast %19 : vector<1x512xf32> to vector<8x512xf32>
    %68 = arith.addf %66, %67 : vector<8x512xf32>
    %c1_48 = arith.constant 1 : index
    %c0_49 = arith.constant 0 : index
    %c0_50 = arith.constant 0 : index
    %69 = vector.load %arg8[%c1_48, %c0_49, %c0_50] : memref<2x8x128xf32, #tpu.memory_space<vmem>>, vector<1x8x128xf32>
    %70 = vector.shape_cast %69 : vector<1x8x128xf32> to vector<8x128xf32>
    %71 = vector.extract_strided_slice %68 {offsets = [0, 0], sizes = [8, 128], strides = [1, 1]} : vector<8x512xf32> to vector<8x128xf32>
    %72 = arith.negf %71 : vector<8x128xf32>
    %73 = math.exp %72 : vector<8x128xf32>
    %cst_51 = arith.constant 1.000000e+00 : f32
    %74 = vector.broadcast %cst_51 : f32 to vector<8x128xf32>
    %75 = arith.addf %74, %73 : vector<8x128xf32>
    %76 = arith.divf %74, %75 : vector<8x128xf32>
    %77 = vector.extract_strided_slice %68 {offsets = [0, 128], sizes = [8, 128], strides = [1, 1]} : vector<8x512xf32> to vector<8x128xf32>
    %78 = arith.negf %77 : vector<8x128xf32>
    %79 = math.exp %78 : vector<8x128xf32>
    %cst_52 = arith.constant 1.000000e+00 : f32
    %80 = vector.broadcast %cst_52 : f32 to vector<8x128xf32>
    %81 = arith.addf %80, %79 : vector<8x128xf32>
    %82 = arith.divf %80, %81 : vector<8x128xf32>
    %83 = vector.extract_strided_slice %68 {offsets = [0, 256], sizes = [8, 128], strides = [1, 1]} : vector<8x512xf32> to vector<8x128xf32>
    %84 = math.tanh %83 : vector<8x128xf32>
    %85 = vector.extract_strided_slice %68 {offsets = [0, 384], sizes = [8, 128], strides = [1, 1]} : vector<8x512xf32> to vector<8x128xf32>
    %86 = arith.negf %85 : vector<8x128xf32>
    %87 = math.exp %86 : vector<8x128xf32>
    %cst_53 = arith.constant 1.000000e+00 : f32
    %88 = vector.broadcast %cst_53 : f32 to vector<8x128xf32>
    %89 = arith.addf %88, %87 : vector<8x128xf32>
    %90 = arith.divf %88, %89 : vector<8x128xf32>
    %91 = arith.mulf %82, %70 : vector<8x128xf32>
    %92 = arith.mulf %76, %84 : vector<8x128xf32>
    %93 = arith.addf %91, %92 : vector<8x128xf32>
    %94 = math.tanh %93 : vector<8x128xf32>
    %95 = arith.mulf %90, %94 : vector<8x128xf32>
    %c1_54 = arith.constant 1 : index
    %c0_55 = arith.constant 0 : index
    %c0_56 = arith.constant 0 : index
    %96 = vector.load %arg7[%c1_54, %c0_55, %c0_56] : memref<2x8x128xf32, #tpu.memory_space<vmem>>, vector<1x8x128xf32>
    %97 = vector.shape_cast %96 : vector<1x8x128xf32> to vector<8x128xf32>
    %98 = vector.shape_cast %95 : vector<8x128xf32> to vector<1x8x128xf32>
    tpu.vector_store %arg7[%c1_54, %c0_55, %c0_56], %98 {strides = array<i32>} : memref<2x8x128xf32, #tpu.memory_space<vmem>>, vector<1x8x128xf32>,
    %c1_57 = arith.constant 1 : index
    %c0_58 = arith.constant 0 : index
    %c0_59 = arith.constant 0 : index
    %99 = vector.load %arg8[%c1_57, %c0_58, %c0_59] : memref<2x8x128xf32, #tpu.memory_space<vmem>>, vector<1x8x128xf32>
    %100 = vector.shape_cast %99 : vector<1x8x128xf32> to vector<8x128xf32>
    %101 = vector.shape_cast %93 : vector<8x128xf32> to vector<1x8x128xf32>
    tpu.vector_store %arg8[%c1_57, %c0_58, %c0_59], %101 {strides = array<i32>} : memref<2x8x128xf32, #tpu.memory_space<vmem>>, vector<1x8x128xf32>,
    %cst_60 = arith.constant dense<0.000000e+00> : vector<8x128xf32>
    %102 = tpu.matmul %95, %20, %cst_60 {dimension_numbers = #tpu.dot_dimension_numbers<[1], [0], [0], [1], [0, 0, 1, 1], [], []>} : vector<8x128xf32>, vector<128x128xf32>, vector<8x128xf32> -> vector<8x128xf32>
    %103 = vector.broadcast %21 : vector<1x128xf32> to vector<8x128xf32>
    %104 = arith.addf %102, %103 : vector<8x128xf32>
    %105 = vector.extract_strided_slice %104 {offsets = [0, 0], sizes = [8, 16], strides = [1, 1]} : vector<8x128xf32> to vector<8x16xf32>
    %106 = vector.extract_strided_slice %104 {offsets = [0, 16], sizes = [8, 16], strides = [1, 1]} : vector<8x128xf32> to vector<8x16xf32>
    %107 = arith.index_cast %c0_i32 : i32 to index
    %c0_61 = arith.constant 0 : index
    %c0_62 = arith.constant 0 : index
    %108 = vector.load %arg2[%107, %c0_61, %c0_62] : memref<6x8x16xf32, #tpu.memory_space<vmem>>, vector<1x8x16xf32>
    %109 = vector.shape_cast %108 : vector<1x8x16xf32> to vector<8x16xf32>
    %cst_63 = arith.constant 5.000000e-01 : f32
    %110 = vector.broadcast %cst_63 : f32 to vector<8x16xf32>
    %111 = arith.mulf %110, %106 : vector<8x16xf32>
    %112 = math.exp %111 : vector<8x16xf32>
    %113 = arith.mulf %109, %112 : vector<8x16xf32>
    %114 = arith.addf %113, %105 : vector<8x16xf32>
    %115 = arith.index_cast %c0_i32 : i32 to index
    %c0_64 = arith.constant 0 : index
    %c0_65 = arith.constant 0 : index
    %116 = vector.load %arg6[%115, %c0_64, %c0_65] : memref<6x8x128xf32, #tpu.memory_space<vmem>>, vector<1x8x16xf32>
    %117 = vector.shape_cast %116 : vector<1x8x16xf32> to vector<8x16xf32>
    %118 = vector.shape_cast %114 : vector<8x16xf32> to vector<1x8x16xf32>
    tpu.vector_store %arg6[%115, %c0_64, %c0_65], %118 {strides = array<i32>} : memref<6x8x128xf32, #tpu.memory_space<vmem>>, vector<1x8x16xf32>,
    %119 = vector.extract_strided_slice %104 {offsets = [0, 0], sizes = [8, 32], strides = [1, 1]} : vector<8x128xf32> to vector<8x32xf32>
    %120 = arith.index_cast %c0_i32 : i32 to index
    %c0_66 = arith.constant 0 : index
    %c16_67 = arith.constant 16 : index
    %121 = vector.load %arg6[%120, %c0_66, %c16_67] : memref<6x8x128xf32, #tpu.memory_space<vmem>>, vector<1x8x32xf32>
    %122 = vector.shape_cast %121 : vector<1x8x32xf32> to vector<8x32xf32>
    %123 = vector.shape_cast %119 : vector<8x32xf32> to vector<1x8x32xf32>
    tpu.vector_store %arg6[%120, %c0_66, %c16_67], %123 {strides = array<i32>} : memref<6x8x128xf32, #tpu.memory_space<vmem>>, vector<1x8x32xf32>,
    %c1_i32 = arith.constant 1 : i32
    %c8_i32_68 = arith.constant 8 : i32
    %124 = arith.muli %c1_i32, %c8_i32_68 : i32
    %125 = arith.index_cast %124 : i32 to index
    %c0_69 = arith.constant 0 : index
    %126 = vector.load %arg9[%125, %c0_69] : memref<48x512xf32, #tpu.memory_space<vmem>>, vector<8x512xf32>
    %c0_70 = arith.constant 0 : index
    %c0_71 = arith.constant 0 : index
    %c0_72 = arith.constant 0 : index
    %127 = vector.load %arg7[%c0_70, %c0_71, %c0_72] : memref<2x8x128xf32, #tpu.memory_space<vmem>>, vector<1x8x128xf32>
    %128 = vector.shape_cast %127 : vector<1x8x128xf32> to vector<8x128xf32>
    %cst_73 = arith.constant dense<0.000000e+00> : vector<8x512xf32>
    %129 = tpu.matmul %128, %16, %cst_73 {dimension_numbers = #tpu.dot_dimension_numbers<[1], [0], [0], [1], [0, 0, 1, 1], [], []>} : vector<8x128xf32>, vector<128x512xf32>, vector<8x512xf32> -> vector<8x512xf32>
    %130 = arith.addf %126, %129 : vector<8x512xf32>
    %c0_74 = arith.constant 0 : index
    %c0_75 = arith.constant 0 : index
    %c0_76 = arith.constant 0 : index
    %131 = vector.load %arg8[%c0_74, %c0_75, %c0_76] : memref<2x8x128xf32, #tpu.memory_space<vmem>>, vector<1x8x128xf32>
    %132 = vector.shape_cast %131 : vector<1x8x128xf32> to vector<8x128xf32>
    %133 = vector.extract_strided_slice %130 {offsets = [0, 0], sizes = [8, 128], strides = [1, 1]} : vector<8x512xf32> to vector<8x128xf32>
    %134 = arith.negf %133 : vector<8x128xf32>
    %135 = math.exp %134 : vector<8x128xf32>
    %cst_77 = arith.constant 1.000000e+00 : f32
    %136 = vector.broadcast %cst_77 : f32 to vector<8x128xf32>
    %137 = arith.addf %136, %135 : vector<8x128xf32>
    %138 = arith.divf %136, %137 : vector<8x128xf32>
    %139 = vector.extract_strided_slice %130 {offsets = [0, 128], sizes = [8, 128], strides = [1, 1]} : vector<8x512xf32> to vector<8x128xf32>
    %140 = arith.negf %139 : vector<8x128xf32>
    %141 = math.exp %140 : vector<8x128xf32>
    %cst_78 = arith.constant 1.000000e+00 : f32
    %142 = vector.broadcast %cst_78 : f32 to vector<8x128xf32>
    %143 = arith.addf %142, %141 : vector<8x128xf32>
    %144 = arith.divf %142, %143 : vector<8x128xf32>
    %145 = vector.extract_strided_slice %130 {offsets = [0, 256], sizes = [8, 128], strides = [1, 1]} : vector<8x512xf32> to vector<8x128xf32>
    %146 = math.tanh %145 : vector<8x128xf32>
    %147 = vector.extract_strided_slice %130 {offsets = [0, 384], sizes = [8, 128], strides = [1, 1]} : vector<8x512xf32> to vector<8x128xf32>
    %148 = arith.negf %147 : vector<8x128xf32>
    %149 = math.exp %148 : vector<8x128xf32>
    %cst_79 = arith.constant 1.000000e+00 : f32
    %150 = vector.broadcast %cst_79 : f32 to vector<8x128xf32>
    %151 = arith.addf %150, %149 : vector<8x128xf32>
    %152 = arith.divf %150, %151 : vector<8x128xf32>
    %153 = arith.mulf %144, %132 : vector<8x128xf32>
    %154 = arith.mulf %138, %146 : vector<8x128xf32>
    %155 = arith.addf %153, %154 : vector<8x128xf32>
    %156 = math.tanh %155 : vector<8x128xf32>
    %157 = arith.mulf %152, %156 : vector<8x128xf32>
    %c0_80 = arith.constant 0 : index
    %c0_81 = arith.constant 0 : index
    %c0_82 = arith.constant 0 : index
    %158 = vector.load %arg7[%c0_80, %c0_81, %c0_82] : memref<2x8x128xf32, #tpu.memory_space<vmem>>, vector<1x8x128xf32>
    %159 = vector.shape_cast %158 : vector<1x8x128xf32> to vector<8x128xf32>
    %160 = vector.shape_cast %157 : vector<8x128xf32> to vector<1x8x128xf32>
    tpu.vector_store %arg7[%c0_80, %c0_81, %c0_82], %160 {strides = array<i32>} : memref<2x8x128xf32, #tpu.memory_space<vmem>>, vector<1x8x128xf32>,
    %c0_83 = arith.constant 0 : index
    %c0_84 = arith.constant 0 : index
    %c0_85 = arith.constant 0 : index
    %161 = vector.load %arg8[%c0_83, %c0_84, %c0_85] : memref<2x8x128xf32, #tpu.memory_space<vmem>>, vector<1x8x128xf32>
    %162 = vector.shape_cast %161 : vector<1x8x128xf32> to vector<8x128xf32>
    %163 = vector.shape_cast %155 : vector<8x128xf32> to vector<1x8x128xf32>
    tpu.vector_store %arg8[%c0_83, %c0_84, %c0_85], %163 {strides = array<i32>} : memref<2x8x128xf32, #tpu.memory_space<vmem>>, vector<1x8x128xf32>,
    %cst_86 = arith.constant dense<0.000000e+00> : vector<8x512xf32>
    %164 = tpu.matmul %157, %17, %cst_86 {dimension_numbers = #tpu.dot_dimension_numbers<[1], [0], [0], [1], [0, 0, 1, 1], [], []>} : vector<8x128xf32>, vector<128x512xf32>, vector<8x512xf32> -> vector<8x512xf32>
    %c1_87 = arith.constant 1 : index
    %c0_88 = arith.constant 0 : index
    %c0_89 = arith.constant 0 : index
    %165 = vector.load %arg7[%c1_87, %c0_88, %c0_89] : memref<2x8x128xf32, #tpu.memory_space<vmem>>, vector<1x8x128xf32>
    %166 = vector.shape_cast %165 : vector<1x8x128xf32> to vector<8x128xf32>
    %cst_90 = arith.constant dense<0.000000e+00> : vector<8x512xf32>
    %167 = tpu.matmul %166, %18, %cst_90 {dimension_numbers = #tpu.dot_dimension_numbers<[1], [0], [0], [1], [0, 0, 1, 1], [], []>} : vector<8x128xf32>, vector<128x512xf32>, vector<8x512xf32> -> vector<8x512xf32>
    %168 = arith.addf %164, %167 : vector<8x512xf32>
    %169 = vector.broadcast %19 : vector<1x512xf32> to vector<8x512xf32>
    %170 = arith.addf %168, %169 : vector<8x512xf32>
    %c1_91 = arith.constant 1 : index
    %c0_92 = arith.constant 0 : index
    %c0_93 = arith.constant 0 : index
    %171 = vector.load %arg8[%c1_91, %c0_92, %c0_93] : memref<2x8x128xf32, #tpu.memory_space<vmem>>, vector<1x8x128xf32>
    %172 = vector.shape_cast %171 : vector<1x8x128xf32> to vector<8x128xf32>
    %173 = vector.extract_strided_slice %170 {offsets = [0, 0], sizes = [8, 128], strides = [1, 1]} : vector<8x512xf32> to vector<8x128xf32>
    %174 = arith.negf %173 : vector<8x128xf32>
    %175 = math.exp %174 : vector<8x128xf32>
    %cst_94 = arith.constant 1.000000e+00 : f32
    %176 = vector.broadcast %cst_94 : f32 to vector<8x128xf32>
    %177 = arith.addf %176, %175 : vector<8x128xf32>
    %178 = arith.divf %176, %177 : vector<8x128xf32>
    %179 = vector.extract_strided_slice %170 {offsets = [0, 128], sizes = [8, 128], strides = [1, 1]} : vector<8x512xf32> to vector<8x128xf32>
    %180 = arith.negf %179 : vector<8x128xf32>
    %181 = math.exp %180 : vector<8x128xf32>
    %cst_95 = arith.constant 1.000000e+00 : f32
    %182 = vector.broadcast %cst_95 : f32 to vector<8x128xf32>
    %183 = arith.addf %182, %181 : vector<8x128xf32>
    %184 = arith.divf %182, %183 : vector<8x128xf32>
    %185 = vector.extract_strided_slice %170 {offsets = [0, 256], sizes = [8, 128], strides = [1, 1]} : vector<8x512xf32> to vector<8x128xf32>
    %186 = math.tanh %185 : vector<8x128xf32>
    %187 = vector.extract_strided_slice %170 {offsets = [0, 384], sizes = [8, 128], strides = [1, 1]} : vector<8x512xf32> to vector<8x128xf32>
    %188 = arith.negf %187 : vector<8x128xf32>
    %189 = math.exp %188 : vector<8x128xf32>
    %cst_96 = arith.constant 1.000000e+00 : f32
    %190 = vector.broadcast %cst_96 : f32 to vector<8x128xf32>
    %191 = arith.addf %190, %189 : vector<8x128xf32>
    %192 = arith.divf %190, %191 : vector<8x128xf32>
    %193 = arith.mulf %184, %172 : vector<8x128xf32>
    %194 = arith.mulf %178, %186 : vector<8x128xf32>
    %195 = arith.addf %193, %194 : vector<8x128xf32>
    %196 = math.tanh %195 : vector<8x128xf32>
    %197 = arith.mulf %192, %196 : vector<8x128xf32>
    %c1_97 = arith.constant 1 : index
    %c0_98 = arith.constant 0 : index
    %c0_99 = arith.constant 0 : index
    %198 = vector.load %arg7[%c1_97, %c0_98, %c0_99] : memref<2x8x128xf32, #tpu.memory_space<vmem>>, vector<1x8x128xf32>
    %199 = vector.shape_cast %198 : vector<1x8x128xf32> to vector<8x128xf32>
    %200 = vector.shape_cast %197 : vector<8x128xf32> to vector<1x8x128xf32>
    tpu.vector_store %arg7[%c1_97, %c0_98, %c0_99], %200 {strides = array<i32>} : memref<2x8x128xf32, #tpu.memory_space<vmem>>, vector<1x8x128xf32>,
    %c1_100 = arith.constant 1 : index
    %c0_101 = arith.constant 0 : index
    %c0_102 = arith.constant 0 : index
    %201 = vector.load %arg8[%c1_100, %c0_101, %c0_102] : memref<2x8x128xf32, #tpu.memory_space<vmem>>, vector<1x8x128xf32>
    %202 = vector.shape_cast %201 : vector<1x8x128xf32> to vector<8x128xf32>
    %203 = vector.shape_cast %195 : vector<8x128xf32> to vector<1x8x128xf32>
    tpu.vector_store %arg8[%c1_100, %c0_101, %c0_102], %203 {strides = array<i32>} : memref<2x8x128xf32, #tpu.memory_space<vmem>>, vector<1x8x128xf32>,
    %cst_103 = arith.constant dense<0.000000e+00> : vector<8x128xf32>
    %204 = tpu.matmul %197, %20, %cst_103 {dimension_numbers = #tpu.dot_dimension_numbers<[1], [0], [0], [1], [0, 0, 1, 1], [], []>} : vector<8x128xf32>, vector<128x128xf32>, vector<8x128xf32> -> vector<8x128xf32>
    %205 = vector.broadcast %21 : vector<1x128xf32> to vector<8x128xf32>
    %206 = arith.addf %204, %205 : vector<8x128xf32>
    %207 = vector.extract_strided_slice %206 {offsets = [0, 0], sizes = [8, 16], strides = [1, 1]} : vector<8x128xf32> to vector<8x16xf32>
    %208 = vector.extract_strided_slice %206 {offsets = [0, 16], sizes = [8, 16], strides = [1, 1]} : vector<8x128xf32> to vector<8x16xf32>
    %209 = arith.index_cast %c1_i32 : i32 to index
    %c0_104 = arith.constant 0 : index
    %c0_105 = arith.constant 0 : index
    %210 = vector.load %arg2[%209, %c0_104, %c0_105] : memref<6x8x16xf32, #tpu.memory_space<vmem>>, vector<1x8x16xf32>
    %211 = vector.shape_cast %210 : vector<1x8x16xf32> to vector<8x16xf32>
    %cst_106 = arith.constant 5.000000e-01 : f32
    %212 = vector.broadcast %cst_106 : f32 to vector<8x16xf32>
    %213 = arith.mulf %212, %208 : vector<8x16xf32>
    %214 = math.exp %213 : vector<8x16xf32>
    %215 = arith.mulf %211, %214 : vector<8x16xf32>
    %216 = arith.addf %215, %207 : vector<8x16xf32>
    %217 = arith.index_cast %c1_i32 : i32 to index
    %c0_107 = arith.constant 0 : index
    %c0_108 = arith.constant 0 : index
    %218 = vector.load %arg6[%217, %c0_107, %c0_108] : memref<6x8x128xf32, #tpu.memory_space<vmem>>, vector<1x8x16xf32>
    %219 = vector.shape_cast %218 : vector<1x8x16xf32> to vector<8x16xf32>
    %220 = vector.shape_cast %216 : vector<8x16xf32> to vector<1x8x16xf32>
    tpu.vector_store %arg6[%217, %c0_107, %c0_108], %220 {strides = array<i32>} : memref<6x8x128xf32, #tpu.memory_space<vmem>>, vector<1x8x16xf32>,
    %221 = vector.extract_strided_slice %206 {offsets = [0, 0], sizes = [8, 32], strides = [1, 1]} : vector<8x128xf32> to vector<8x32xf32>
    %222 = arith.index_cast %c1_i32 : i32 to index
    %c0_109 = arith.constant 0 : index
    %c16_110 = arith.constant 16 : index
    %223 = vector.load %arg6[%222, %c0_109, %c16_110] : memref<6x8x128xf32, #tpu.memory_space<vmem>>, vector<1x8x32xf32>
    %224 = vector.shape_cast %223 : vector<1x8x32xf32> to vector<8x32xf32>
    %225 = vector.shape_cast %221 : vector<8x32xf32> to vector<1x8x32xf32>
    tpu.vector_store %arg6[%222, %c0_109, %c16_110], %225 {strides = array<i32>} : memref<6x8x128xf32, #tpu.memory_space<vmem>>, vector<1x8x32xf32>,
    %c2_i32 = arith.constant 2 : i32
    %c8_i32_111 = arith.constant 8 : i32
    %226 = arith.muli %c2_i32, %c8_i32_111 : i32
    %227 = arith.index_cast %226 : i32 to index
    %c0_112 = arith.constant 0 : index
    %228 = vector.load %arg9[%227, %c0_112] : memref<48x512xf32, #tpu.memory_space<vmem>>, vector<8x512xf32>
    %c0_113 = arith.constant 0 : index
    %c0_114 = arith.constant 0 : index
    %c0_115 = arith.constant 0 : index
    %229 = vector.load %arg7[%c0_113, %c0_114, %c0_115] : memref<2x8x128xf32, #tpu.memory_space<vmem>>, vector<1x8x128xf32>
    %230 = vector.shape_cast %229 : vector<1x8x128xf32> to vector<8x128xf32>
    %cst_116 = arith.constant dense<0.000000e+00> : vector<8x512xf32>
    %231 = tpu.matmul %230, %16, %cst_116 {dimension_numbers = #tpu.dot_dimension_numbers<[1], [0], [0], [1], [0, 0, 1, 1], [], []>} : vector<8x128xf32>, vector<128x512xf32>, vector<8x512xf32> -> vector<8x512xf32>
    %232 = arith.addf %228, %231 : vector<8x512xf32>
    %c0_117 = arith.constant 0 : index
    %c0_118 = arith.constant 0 : index
    %c0_119 = arith.constant 0 : index
    %233 = vector.load %arg8[%c0_117, %c0_118, %c0_119] : memref<2x8x128xf32, #tpu.memory_space<vmem>>, vector<1x8x128xf32>
    %234 = vector.shape_cast %233 : vector<1x8x128xf32> to vector<8x128xf32>
    %235 = vector.extract_strided_slice %232 {offsets = [0, 0], sizes = [8, 128], strides = [1, 1]} : vector<8x512xf32> to vector<8x128xf32>
    %236 = arith.negf %235 : vector<8x128xf32>
    %237 = math.exp %236 : vector<8x128xf32>
    %cst_120 = arith.constant 1.000000e+00 : f32
    %238 = vector.broadcast %cst_120 : f32 to vector<8x128xf32>
    %239 = arith.addf %238, %237 : vector<8x128xf32>
    %240 = arith.divf %238, %239 : vector<8x128xf32>
    %241 = vector.extract_strided_slice %232 {offsets = [0, 128], sizes = [8, 128], strides = [1, 1]} : vector<8x512xf32> to vector<8x128xf32>
    %242 = arith.negf %241 : vector<8x128xf32>
    %243 = math.exp %242 : vector<8x128xf32>
    %cst_121 = arith.constant 1.000000e+00 : f32
    %244 = vector.broadcast %cst_121 : f32 to vector<8x128xf32>
    %245 = arith.addf %244, %243 : vector<8x128xf32>
    %246 = arith.divf %244, %245 : vector<8x128xf32>
    %247 = vector.extract_strided_slice %232 {offsets = [0, 256], sizes = [8, 128], strides = [1, 1]} : vector<8x512xf32> to vector<8x128xf32>
    %248 = math.tanh %247 : vector<8x128xf32>
    %249 = vector.extract_strided_slice %232 {offsets = [0, 384], sizes = [8, 128], strides = [1, 1]} : vector<8x512xf32> to vector<8x128xf32>
    %250 = arith.negf %249 : vector<8x128xf32>
    %251 = math.exp %250 : vector<8x128xf32>
    %cst_122 = arith.constant 1.000000e+00 : f32
    %252 = vector.broadcast %cst_122 : f32 to vector<8x128xf32>
    %253 = arith.addf %252, %251 : vector<8x128xf32>
    %254 = arith.divf %252, %253 : vector<8x128xf32>
    %255 = arith.mulf %246, %234 : vector<8x128xf32>
    %256 = arith.mulf %240, %248 : vector<8x128xf32>
    %257 = arith.addf %255, %256 : vector<8x128xf32>
    %258 = math.tanh %257 : vector<8x128xf32>
    %259 = arith.mulf %254, %258 : vector<8x128xf32>
    %c0_123 = arith.constant 0 : index
    %c0_124 = arith.constant 0 : index
    %c0_125 = arith.constant 0 : index
    %260 = vector.load %arg7[%c0_123, %c0_124, %c0_125] : memref<2x8x128xf32, #tpu.memory_space<vmem>>, vector<1x8x128xf32>
    %261 = vector.shape_cast %260 : vector<1x8x128xf32> to vector<8x128xf32>
    %262 = vector.shape_cast %259 : vector<8x128xf32> to vector<1x8x128xf32>
    tpu.vector_store %arg7[%c0_123, %c0_124, %c0_125], %262 {strides = array<i32>} : memref<2x8x128xf32, #tpu.memory_space<vmem>>, vector<1x8x128xf32>,
    %c0_126 = arith.constant 0 : index
    %c0_127 = arith.constant 0 : index
    %c0_128 = arith.constant 0 : index
    %263 = vector.load %arg8[%c0_126, %c0_127, %c0_128] : memref<2x8x128xf32, #tpu.memory_space<vmem>>, vector<1x8x128xf32>
    %264 = vector.shape_cast %263 : vector<1x8x128xf32> to vector<8x128xf32>
    %265 = vector.shape_cast %257 : vector<8x128xf32> to vector<1x8x128xf32>
    tpu.vector_store %arg8[%c0_126, %c0_127, %c0_128], %265 {strides = array<i32>} : memref<2x8x128xf32, #tpu.memory_space<vmem>>, vector<1x8x128xf32>,
    %cst_129 = arith.constant dense<0.000000e+00> : vector<8x512xf32>
    %266 = tpu.matmul %259, %17, %cst_129 {dimension_numbers = #tpu.dot_dimension_numbers<[1], [0], [0], [1], [0, 0, 1, 1], [], []>} : vector<8x128xf32>, vector<128x512xf32>, vector<8x512xf32> -> vector<8x512xf32>
    %c1_130 = arith.constant 1 : index
    %c0_131 = arith.constant 0 : index
    %c0_132 = arith.constant 0 : index
    %267 = vector.load %arg7[%c1_130, %c0_131, %c0_132] : memref<2x8x128xf32, #tpu.memory_space<vmem>>, vector<1x8x128xf32>
    %268 = vector.shape_cast %267 : vector<1x8x128xf32> to vector<8x128xf32>
    %cst_133 = arith.constant dense<0.000000e+00> : vector<8x512xf32>
    %269 = tpu.matmul %268, %18, %cst_133 {dimension_numbers = #tpu.dot_dimension_numbers<[1], [0], [0], [1], [0, 0, 1, 1], [], []>} : vector<8x128xf32>, vector<128x512xf32>, vector<8x512xf32> -> vector<8x512xf32>
    %270 = arith.addf %266, %269 : vector<8x512xf32>
    %271 = vector.broadcast %19 : vector<1x512xf32> to vector<8x512xf32>
    %272 = arith.addf %270, %271 : vector<8x512xf32>
    %c1_134 = arith.constant 1 : index
    %c0_135 = arith.constant 0 : index
    %c0_136 = arith.constant 0 : index
    %273 = vector.load %arg8[%c1_134, %c0_135, %c0_136] : memref<2x8x128xf32, #tpu.memory_space<vmem>>, vector<1x8x128xf32>
    %274 = vector.shape_cast %273 : vector<1x8x128xf32> to vector<8x128xf32>
    %275 = vector.extract_strided_slice %272 {offsets = [0, 0], sizes = [8, 128], strides = [1, 1]} : vector<8x512xf32> to vector<8x128xf32>
    %276 = arith.negf %275 : vector<8x128xf32>
    %277 = math.exp %276 : vector<8x128xf32>
    %cst_137 = arith.constant 1.000000e+00 : f32
    %278 = vector.broadcast %cst_137 : f32 to vector<8x128xf32>
    %279 = arith.addf %278, %277 : vector<8x128xf32>
    %280 = arith.divf %278, %279 : vector<8x128xf32>
    %281 = vector.extract_strided_slice %272 {offsets = [0, 128], sizes = [8, 128], strides = [1, 1]} : vector<8x512xf32> to vector<8x128xf32>
    %282 = arith.negf %281 : vector<8x128xf32>
    %283 = math.exp %282 : vector<8x128xf32>
    %cst_138 = arith.constant 1.000000e+00 : f32
    %284 = vector.broadcast %cst_138 : f32 to vector<8x128xf32>
    %285 = arith.addf %284, %283 : vector<8x128xf32>
    %286 = arith.divf %284, %285 : vector<8x128xf32>
    %287 = vector.extract_strided_slice %272 {offsets = [0, 256], sizes = [8, 128], strides = [1, 1]} : vector<8x512xf32> to vector<8x128xf32>
    %288 = math.tanh %287 : vector<8x128xf32>
    %289 = vector.extract_strided_slice %272 {offsets = [0, 384], sizes = [8, 128], strides = [1, 1]} : vector<8x512xf32> to vector<8x128xf32>
    %290 = arith.negf %289 : vector<8x128xf32>
    %291 = math.exp %290 : vector<8x128xf32>
    %cst_139 = arith.constant 1.000000e+00 : f32
    %292 = vector.broadcast %cst_139 : f32 to vector<8x128xf32>
    %293 = arith.addf %292, %291 : vector<8x128xf32>
    %294 = arith.divf %292, %293 : vector<8x128xf32>
    %295 = arith.mulf %286, %274 : vector<8x128xf32>
    %296 = arith.mulf %280, %288 : vector<8x128xf32>
    %297 = arith.addf %295, %296 : vector<8x128xf32>
    %298 = math.tanh %297 : vector<8x128xf32>
    %299 = arith.mulf %294, %298 : vector<8x128xf32>
    %c1_140 = arith.constant 1 : index
    %c0_141 = arith.constant 0 : index
    %c0_142 = arith.constant 0 : index
    %300 = vector.load %arg7[%c1_140, %c0_141, %c0_142] : memref<2x8x128xf32, #tpu.memory_space<vmem>>, vector<1x8x128xf32>
    %301 = vector.shape_cast %300 : vector<1x8x128xf32> to vector<8x128xf32>
    %302 = vector.shape_cast %299 : vector<8x128xf32> to vector<1x8x128xf32>
    tpu.vector_store %arg7[%c1_140, %c0_141, %c0_142], %302 {strides = array<i32>} : memref<2x8x128xf32, #tpu.memory_space<vmem>>, vector<1x8x128xf32>,
    %c1_143 = arith.constant 1 : index
    %c0_144 = arith.constant 0 : index
    %c0_145 = arith.constant 0 : index
    %303 = vector.load %arg8[%c1_143, %c0_144, %c0_145] : memref<2x8x128xf32, #tpu.memory_space<vmem>>, vector<1x8x128xf32>
    %304 = vector.shape_cast %303 : vector<1x8x128xf32> to vector<8x128xf32>
    %305 = vector.shape_cast %297 : vector<8x128xf32> to vector<1x8x128xf32>
    tpu.vector_store %arg8[%c1_143, %c0_144, %c0_145], %305 {strides = array<i32>} : memref<2x8x128xf32, #tpu.memory_space<vmem>>, vector<1x8x128xf32>,
    %cst_146 = arith.constant dense<0.000000e+00> : vector<8x128xf32>
    %306 = tpu.matmul %299, %20, %cst_146 {dimension_numbers = #tpu.dot_dimension_numbers<[1], [0], [0], [1], [0, 0, 1, 1], [], []>} : vector<8x128xf32>, vector<128x128xf32>, vector<8x128xf32> -> vector<8x128xf32>
    %307 = vector.broadcast %21 : vector<1x128xf32> to vector<8x128xf32>
    %308 = arith.addf %306, %307 : vector<8x128xf32>
    %309 = vector.extract_strided_slice %308 {offsets = [0, 0], sizes = [8, 16], strides = [1, 1]} : vector<8x128xf32> to vector<8x16xf32>
    %310 = vector.extract_strided_slice %308 {offsets = [0, 16], sizes = [8, 16], strides = [1, 1]} : vector<8x128xf32> to vector<8x16xf32>
    %311 = arith.index_cast %c2_i32 : i32 to index
    %c0_147 = arith.constant 0 : index
    %c0_148 = arith.constant 0 : index
    %312 = vector.load %arg2[%311, %c0_147, %c0_148] : memref<6x8x16xf32, #tpu.memory_space<vmem>>, vector<1x8x16xf32>
    %313 = vector.shape_cast %312 : vector<1x8x16xf32> to vector<8x16xf32>
    %cst_149 = arith.constant 5.000000e-01 : f32
    %314 = vector.broadcast %cst_149 : f32 to vector<8x16xf32>
    %315 = arith.mulf %314, %310 : vector<8x16xf32>
    %316 = math.exp %315 : vector<8x16xf32>
    %317 = arith.mulf %313, %316 : vector<8x16xf32>
    %318 = arith.addf %317, %309 : vector<8x16xf32>
    %319 = arith.index_cast %c2_i32 : i32 to index
    %c0_150 = arith.constant 0 : index
    %c0_151 = arith.constant 0 : index
    %320 = vector.load %arg6[%319, %c0_150, %c0_151] : memref<6x8x128xf32, #tpu.memory_space<vmem>>, vector<1x8x16xf32>
    %321 = vector.shape_cast %320 : vector<1x8x16xf32> to vector<8x16xf32>
    %322 = vector.shape_cast %318 : vector<8x16xf32> to vector<1x8x16xf32>
    tpu.vector_store %arg6[%319, %c0_150, %c0_151], %322 {strides = array<i32>} : memref<6x8x128xf32, #tpu.memory_space<vmem>>, vector<1x8x16xf32>,
    %323 = vector.extract_strided_slice %308 {offsets = [0, 0], sizes = [8, 32], strides = [1, 1]} : vector<8x128xf32> to vector<8x32xf32>
    %324 = arith.index_cast %c2_i32 : i32 to index
    %c0_152 = arith.constant 0 : index
    %c16_153 = arith.constant 16 : index
    %325 = vector.load %arg6[%324, %c0_152, %c16_153] : memref<6x8x128xf32, #tpu.memory_space<vmem>>, vector<1x8x32xf32>
    %326 = vector.shape_cast %325 : vector<1x8x32xf32> to vector<8x32xf32>
    %327 = vector.shape_cast %323 : vector<8x32xf32> to vector<1x8x32xf32>
    tpu.vector_store %arg6[%324, %c0_152, %c16_153], %327 {strides = array<i32>} : memref<6x8x128xf32, #tpu.memory_space<vmem>>, vector<1x8x32xf32>,
    %c3_i32 = arith.constant 3 : i32
    %c8_i32_154 = arith.constant 8 : i32
    %328 = arith.muli %c3_i32, %c8_i32_154 : i32
    %329 = arith.index_cast %328 : i32 to index
    %c0_155 = arith.constant 0 : index
    %330 = vector.load %arg9[%329, %c0_155] : memref<48x512xf32, #tpu.memory_space<vmem>>, vector<8x512xf32>
    %c0_156 = arith.constant 0 : index
    %c0_157 = arith.constant 0 : index
    %c0_158 = arith.constant 0 : index
    %331 = vector.load %arg7[%c0_156, %c0_157, %c0_158] : memref<2x8x128xf32, #tpu.memory_space<vmem>>, vector<1x8x128xf32>
    %332 = vector.shape_cast %331 : vector<1x8x128xf32> to vector<8x128xf32>
    %cst_159 = arith.constant dense<0.000000e+00> : vector<8x512xf32>
    %333 = tpu.matmul %332, %16, %cst_159 {dimension_numbers = #tpu.dot_dimension_numbers<[1], [0], [0], [1], [0, 0, 1, 1], [], []>} : vector<8x128xf32>, vector<128x512xf32>, vector<8x512xf32> -> vector<8x512xf32>
    %334 = arith.addf %330, %333 : vector<8x512xf32>
    %c0_160 = arith.constant 0 : index
    %c0_161 = arith.constant 0 : index
    %c0_162 = arith.constant 0 : index
    %335 = vector.load %arg8[%c0_160, %c0_161, %c0_162] : memref<2x8x128xf32, #tpu.memory_space<vmem>>, vector<1x8x128xf32>
    %336 = vector.shape_cast %335 : vector<1x8x128xf32> to vector<8x128xf32>
    %337 = vector.extract_strided_slice %334 {offsets = [0, 0], sizes = [8, 128], strides = [1, 1]} : vector<8x512xf32> to vector<8x128xf32>
    %338 = arith.negf %337 : vector<8x128xf32>
    %339 = math.exp %338 : vector<8x128xf32>
    %cst_163 = arith.constant 1.000000e+00 : f32
    %340 = vector.broadcast %cst_163 : f32 to vector<8x128xf32>
    %341 = arith.addf %340, %339 : vector<8x128xf32>
    %342 = arith.divf %340, %341 : vector<8x128xf32>
    %343 = vector.extract_strided_slice %334 {offsets = [0, 128], sizes = [8, 128], strides = [1, 1]} : vector<8x512xf32> to vector<8x128xf32>
    %344 = arith.negf %343 : vector<8x128xf32>
    %345 = math.exp %344 : vector<8x128xf32>
    %cst_164 = arith.constant 1.000000e+00 : f32
    %346 = vector.broadcast %cst_164 : f32 to vector<8x128xf32>
    %347 = arith.addf %346, %345 : vector<8x128xf32>
    %348 = arith.divf %346, %347 : vector<8x128xf32>
    %349 = vector.extract_strided_slice %334 {offsets = [0, 256], sizes = [8, 128], strides = [1, 1]} : vector<8x512xf32> to vector<8x128xf32>
    %350 = math.tanh %349 : vector<8x128xf32>
    %351 = vector.extract_strided_slice %334 {offsets = [0, 384], sizes = [8, 128], strides = [1, 1]} : vector<8x512xf32> to vector<8x128xf32>
    %352 = arith.negf %351 : vector<8x128xf32>
    %353 = math.exp %352 : vector<8x128xf32>
    %cst_165 = arith.constant 1.000000e+00 : f32
    %354 = vector.broadcast %cst_165 : f32 to vector<8x128xf32>
    %355 = arith.addf %354, %353 : vector<8x128xf32>
    %356 = arith.divf %354, %355 : vector<8x128xf32>
    %357 = arith.mulf %348, %336 : vector<8x128xf32>
    %358 = arith.mulf %342, %350 : vector<8x128xf32>
    %359 = arith.addf %357, %358 : vector<8x128xf32>
    %360 = math.tanh %359 : vector<8x128xf32>
    %361 = arith.mulf %356, %360 : vector<8x128xf32>
    %c0_166 = arith.constant 0 : index
    %c0_167 = arith.constant 0 : index
    %c0_168 = arith.constant 0 : index
    %362 = vector.load %arg7[%c0_166, %c0_167, %c0_168] : memref<2x8x128xf32, #tpu.memory_space<vmem>>, vector<1x8x128xf32>
    %363 = vector.shape_cast %362 : vector<1x8x128xf32> to vector<8x128xf32>
    %364 = vector.shape_cast %361 : vector<8x128xf32> to vector<1x8x128xf32>
    tpu.vector_store %arg7[%c0_166, %c0_167, %c0_168], %364 {strides = array<i32>} : memref<2x8x128xf32, #tpu.memory_space<vmem>>, vector<1x8x128xf32>,
    %c0_169 = arith.constant 0 : index
    %c0_170 = arith.constant 0 : index
    %c0_171 = arith.constant 0 : index
    %365 = vector.load %arg8[%c0_169, %c0_170, %c0_171] : memref<2x8x128xf32, #tpu.memory_space<vmem>>, vector<1x8x128xf32>
    %366 = vector.shape_cast %365 : vector<1x8x128xf32> to vector<8x128xf32>
    %367 = vector.shape_cast %359 : vector<8x128xf32> to vector<1x8x128xf32>
    tpu.vector_store %arg8[%c0_169, %c0_170, %c0_171], %367 {strides = array<i32>} : memref<2x8x128xf32, #tpu.memory_space<vmem>>, vector<1x8x128xf32>,
    %cst_172 = arith.constant dense<0.000000e+00> : vector<8x512xf32>
    %368 = tpu.matmul %361, %17, %cst_172 {dimension_numbers = #tpu.dot_dimension_numbers<[1], [0], [0], [1], [0, 0, 1, 1], [], []>} : vector<8x128xf32>, vector<128x512xf32>, vector<8x512xf32> -> vector<8x512xf32>
    %c1_173 = arith.constant 1 : index
    %c0_174 = arith.constant 0 : index
    %c0_175 = arith.constant 0 : index
    %369 = vector.load %arg7[%c1_173, %c0_174, %c0_175] : memref<2x8x128xf32, #tpu.memory_space<vmem>>, vector<1x8x128xf32>
    %370 = vector.shape_cast %369 : vector<1x8x128xf32> to vector<8x128xf32>
    %cst_176 = arith.constant dense<0.000000e+00> : vector<8x512xf32>
    %371 = tpu.matmul %370, %18, %cst_176 {dimension_numbers = #tpu.dot_dimension_numbers<[1], [0], [0], [1], [0, 0, 1, 1], [], []>} : vector<8x128xf32>, vector<128x512xf32>, vector<8x512xf32> -> vector<8x512xf32>
    %372 = arith.addf %368, %371 : vector<8x512xf32>
    %373 = vector.broadcast %19 : vector<1x512xf32> to vector<8x512xf32>
    %374 = arith.addf %372, %373 : vector<8x512xf32>
    %c1_177 = arith.constant 1 : index
    %c0_178 = arith.constant 0 : index
    %c0_179 = arith.constant 0 : index
    %375 = vector.load %arg8[%c1_177, %c0_178, %c0_179] : memref<2x8x128xf32, #tpu.memory_space<vmem>>, vector<1x8x128xf32>
    %376 = vector.shape_cast %375 : vector<1x8x128xf32> to vector<8x128xf32>
    %377 = vector.extract_strided_slice %374 {offsets = [0, 0], sizes = [8, 128], strides = [1, 1]} : vector<8x512xf32> to vector<8x128xf32>
    %378 = arith.negf %377 : vector<8x128xf32>
    %379 = math.exp %378 : vector<8x128xf32>
    %cst_180 = arith.constant 1.000000e+00 : f32
    %380 = vector.broadcast %cst_180 : f32 to vector<8x128xf32>
    %381 = arith.addf %380, %379 : vector<8x128xf32>
    %382 = arith.divf %380, %381 : vector<8x128xf32>
    %383 = vector.extract_strided_slice %374 {offsets = [0, 128], sizes = [8, 128], strides = [1, 1]} : vector<8x512xf32> to vector<8x128xf32>
    %384 = arith.negf %383 : vector<8x128xf32>
    %385 = math.exp %384 : vector<8x128xf32>
    %cst_181 = arith.constant 1.000000e+00 : f32
    %386 = vector.broadcast %cst_181 : f32 to vector<8x128xf32>
    %387 = arith.addf %386, %385 : vector<8x128xf32>
    %388 = arith.divf %386, %387 : vector<8x128xf32>
    %389 = vector.extract_strided_slice %374 {offsets = [0, 256], sizes = [8, 128], strides = [1, 1]} : vector<8x512xf32> to vector<8x128xf32>
    %390 = math.tanh %389 : vector<8x128xf32>
    %391 = vector.extract_strided_slice %374 {offsets = [0, 384], sizes = [8, 128], strides = [1, 1]} : vector<8x512xf32> to vector<8x128xf32>
    %392 = arith.negf %391 : vector<8x128xf32>
    %393 = math.exp %392 : vector<8x128xf32>
    %cst_182 = arith.constant 1.000000e+00 : f32
    %394 = vector.broadcast %cst_182 : f32 to vector<8x128xf32>
    %395 = arith.addf %394, %393 : vector<8x128xf32>
    %396 = arith.divf %394, %395 : vector<8x128xf32>
    %397 = arith.mulf %388, %376 : vector<8x128xf32>
    %398 = arith.mulf %382, %390 : vector<8x128xf32>
    %399 = arith.addf %397, %398 : vector<8x128xf32>
    %400 = math.tanh %399 : vector<8x128xf32>
    %401 = arith.mulf %396, %400 : vector<8x128xf32>
    %c1_183 = arith.constant 1 : index
    %c0_184 = arith.constant 0 : index
    %c0_185 = arith.constant 0 : index
    %402 = vector.load %arg7[%c1_183, %c0_184, %c0_185] : memref<2x8x128xf32, #tpu.memory_space<vmem>>, vector<1x8x128xf32>
    %403 = vector.shape_cast %402 : vector<1x8x128xf32> to vector<8x128xf32>
    %404 = vector.shape_cast %401 : vector<8x128xf32> to vector<1x8x128xf32>
    tpu.vector_store %arg7[%c1_183, %c0_184, %c0_185], %404 {strides = array<i32>} : memref<2x8x128xf32, #tpu.memory_space<vmem>>, vector<1x8x128xf32>,
    %c1_186 = arith.constant 1 : index
    %c0_187 = arith.constant 0 : index
    %c0_188 = arith.constant 0 : index
    %405 = vector.load %arg8[%c1_186, %c0_187, %c0_188] : memref<2x8x128xf32, #tpu.memory_space<vmem>>, vector<1x8x128xf32>
    %406 = vector.shape_cast %405 : vector<1x8x128xf32> to vector<8x128xf32>
    %407 = vector.shape_cast %399 : vector<8x128xf32> to vector<1x8x128xf32>
    tpu.vector_store %arg8[%c1_186, %c0_187, %c0_188], %407 {strides = array<i32>} : memref<2x8x128xf32, #tpu.memory_space<vmem>>, vector<1x8x128xf32>,
    %cst_189 = arith.constant dense<0.000000e+00> : vector<8x128xf32>
    %408 = tpu.matmul %401, %20, %cst_189 {dimension_numbers = #tpu.dot_dimension_numbers<[1], [0], [0], [1], [0, 0, 1, 1], [], []>} : vector<8x128xf32>, vector<128x128xf32>, vector<8x128xf32> -> vector<8x128xf32>
    %409 = vector.broadcast %21 : vector<1x128xf32> to vector<8x128xf32>
    %410 = arith.addf %408, %409 : vector<8x128xf32>
    %411 = vector.extract_strided_slice %410 {offsets = [0, 0], sizes = [8, 16], strides = [1, 1]} : vector<8x128xf32> to vector<8x16xf32>
    %412 = vector.extract_strided_slice %410 {offsets = [0, 16], sizes = [8, 16], strides = [1, 1]} : vector<8x128xf32> to vector<8x16xf32>
    %413 = arith.index_cast %c3_i32 : i32 to index
    %c0_190 = arith.constant 0 : index
    %c0_191 = arith.constant 0 : index
    %414 = vector.load %arg2[%413, %c0_190, %c0_191] : memref<6x8x16xf32, #tpu.memory_space<vmem>>, vector<1x8x16xf32>
    %415 = vector.shape_cast %414 : vector<1x8x16xf32> to vector<8x16xf32>
    %cst_192 = arith.constant 5.000000e-01 : f32
    %416 = vector.broadcast %cst_192 : f32 to vector<8x16xf32>
    %417 = arith.mulf %416, %412 : vector<8x16xf32>
    %418 = math.exp %417 : vector<8x16xf32>
    %419 = arith.mulf %415, %418 : vector<8x16xf32>
    %420 = arith.addf %419, %411 : vector<8x16xf32>
    %421 = arith.index_cast %c3_i32 : i32 to index
    %c0_193 = arith.constant 0 : index
    %c0_194 = arith.constant 0 : index
    %422 = vector.load %arg6[%421, %c0_193, %c0_194] : memref<6x8x128xf32, #tpu.memory_space<vmem>>, vector<1x8x16xf32>
    %423 = vector.shape_cast %422 : vector<1x8x16xf32> to vector<8x16xf32>
    %424 = vector.shape_cast %420 : vector<8x16xf32> to vector<1x8x16xf32>
    tpu.vector_store %arg6[%421, %c0_193, %c0_194], %424 {strides = array<i32>} : memref<6x8x128xf32, #tpu.memory_space<vmem>>, vector<1x8x16xf32>,
    %425 = vector.extract_strided_slice %410 {offsets = [0, 0], sizes = [8, 32], strides = [1, 1]} : vector<8x128xf32> to vector<8x32xf32>
    %426 = arith.index_cast %c3_i32 : i32 to index
    %c0_195 = arith.constant 0 : index
    %c16_196 = arith.constant 16 : index
    %427 = vector.load %arg6[%426, %c0_195, %c16_196] : memref<6x8x128xf32, #tpu.memory_space<vmem>>, vector<1x8x32xf32>
    %428 = vector.shape_cast %427 : vector<1x8x32xf32> to vector<8x32xf32>
    %429 = vector.shape_cast %425 : vector<8x32xf32> to vector<1x8x32xf32>
    tpu.vector_store %arg6[%426, %c0_195, %c16_196], %429 {strides = array<i32>} : memref<6x8x128xf32, #tpu.memory_space<vmem>>, vector<1x8x32xf32>,
    %c4_i32 = arith.constant 4 : i32
    %c8_i32_197 = arith.constant 8 : i32
    %430 = arith.muli %c4_i32, %c8_i32_197 : i32
    %431 = arith.index_cast %430 : i32 to index
    %c0_198 = arith.constant 0 : index
    %432 = vector.load %arg9[%431, %c0_198] : memref<48x512xf32, #tpu.memory_space<vmem>>, vector<8x512xf32>
    %c0_199 = arith.constant 0 : index
    %c0_200 = arith.constant 0 : index
    %c0_201 = arith.constant 0 : index
    %433 = vector.load %arg7[%c0_199, %c0_200, %c0_201] : memref<2x8x128xf32, #tpu.memory_space<vmem>>, vector<1x8x128xf32>
    %434 = vector.shape_cast %433 : vector<1x8x128xf32> to vector<8x128xf32>
    %cst_202 = arith.constant dense<0.000000e+00> : vector<8x512xf32>
    %435 = tpu.matmul %434, %16, %cst_202 {dimension_numbers = #tpu.dot_dimension_numbers<[1], [0], [0], [1], [0, 0, 1, 1], [], []>} : vector<8x128xf32>, vector<128x512xf32>, vector<8x512xf32> -> vector<8x512xf32>
    %436 = arith.addf %432, %435 : vector<8x512xf32>
    %c0_203 = arith.constant 0 : index
    %c0_204 = arith.constant 0 : index
    %c0_205 = arith.constant 0 : index
    %437 = vector.load %arg8[%c0_203, %c0_204, %c0_205] : memref<2x8x128xf32, #tpu.memory_space<vmem>>, vector<1x8x128xf32>
    %438 = vector.shape_cast %437 : vector<1x8x128xf32> to vector<8x128xf32>
    %439 = vector.extract_strided_slice %436 {offsets = [0, 0], sizes = [8, 128], strides = [1, 1]} : vector<8x512xf32> to vector<8x128xf32>
    %440 = arith.negf %439 : vector<8x128xf32>
    %441 = math.exp %440 : vector<8x128xf32>
    %cst_206 = arith.constant 1.000000e+00 : f32
    %442 = vector.broadcast %cst_206 : f32 to vector<8x128xf32>
    %443 = arith.addf %442, %441 : vector<8x128xf32>
    %444 = arith.divf %442, %443 : vector<8x128xf32>
    %445 = vector.extract_strided_slice %436 {offsets = [0, 128], sizes = [8, 128], strides = [1, 1]} : vector<8x512xf32> to vector<8x128xf32>
    %446 = arith.negf %445 : vector<8x128xf32>
    %447 = math.exp %446 : vector<8x128xf32>
    %cst_207 = arith.constant 1.000000e+00 : f32
    %448 = vector.broadcast %cst_207 : f32 to vector<8x128xf32>
    %449 = arith.addf %448, %447 : vector<8x128xf32>
    %450 = arith.divf %448, %449 : vector<8x128xf32>
    %451 = vector.extract_strided_slice %436 {offsets = [0, 256], sizes = [8, 128], strides = [1, 1]} : vector<8x512xf32> to vector<8x128xf32>
    %452 = math.tanh %451 : vector<8x128xf32>
    %453 = vector.extract_strided_slice %436 {offsets = [0, 384], sizes = [8, 128], strides = [1, 1]} : vector<8x512xf32> to vector<8x128xf32>
    %454 = arith.negf %453 : vector<8x128xf32>
    %455 = math.exp %454 : vector<8x128xf32>
    %cst_208 = arith.constant 1.000000e+00 : f32
    %456 = vector.broadcast %cst_208 : f32 to vector<8x128xf32>
    %457 = arith.addf %456, %455 : vector<8x128xf32>
    %458 = arith.divf %456, %457 : vector<8x128xf32>
    %459 = arith.mulf %450, %438 : vector<8x128xf32>
    %460 = arith.mulf %444, %452 : vector<8x128xf32>
    %461 = arith.addf %459, %460 : vector<8x128xf32>
    %462 = math.tanh %461 : vector<8x128xf32>
    %463 = arith.mulf %458, %462 : vector<8x128xf32>
    %c0_209 = arith.constant 0 : index
    %c0_210 = arith.constant 0 : index
    %c0_211 = arith.constant 0 : index
    %464 = vector.load %arg7[%c0_209, %c0_210, %c0_211] : memref<2x8x128xf32, #tpu.memory_space<vmem>>, vector<1x8x128xf32>
    %465 = vector.shape_cast %464 : vector<1x8x128xf32> to vector<8x128xf32>
    %466 = vector.shape_cast %463 : vector<8x128xf32> to vector<1x8x128xf32>
    tpu.vector_store %arg7[%c0_209, %c0_210, %c0_211], %466 {strides = array<i32>} : memref<2x8x128xf32, #tpu.memory_space<vmem>>, vector<1x8x128xf32>,
    %c0_212 = arith.constant 0 : index
    %c0_213 = arith.constant 0 : index
    %c0_214 = arith.constant 0 : index
    %467 = vector.load %arg8[%c0_212, %c0_213, %c0_214] : memref<2x8x128xf32, #tpu.memory_space<vmem>>, vector<1x8x128xf32>
    %468 = vector.shape_cast %467 : vector<1x8x128xf32> to vector<8x128xf32>
    %469 = vector.shape_cast %461 : vector<8x128xf32> to vector<1x8x128xf32>
    tpu.vector_store %arg8[%c0_212, %c0_213, %c0_214], %469 {strides = array<i32>} : memref<2x8x128xf32, #tpu.memory_space<vmem>>, vector<1x8x128xf32>,
    %cst_215 = arith.constant dense<0.000000e+00> : vector<8x512xf32>
    %470 = tpu.matmul %463, %17, %cst_215 {dimension_numbers = #tpu.dot_dimension_numbers<[1], [0], [0], [1], [0, 0, 1, 1], [], []>} : vector<8x128xf32>, vector<128x512xf32>, vector<8x512xf32> -> vector<8x512xf32>
    %c1_216 = arith.constant 1 : index
    %c0_217 = arith.constant 0 : index
    %c0_218 = arith.constant 0 : index
    %471 = vector.load %arg7[%c1_216, %c0_217, %c0_218] : memref<2x8x128xf32, #tpu.memory_space<vmem>>, vector<1x8x128xf32>
    %472 = vector.shape_cast %471 : vector<1x8x128xf32> to vector<8x128xf32>
    %cst_219 = arith.constant dense<0.000000e+00> : vector<8x512xf32>
    %473 = tpu.matmul %472, %18, %cst_219 {dimension_numbers = #tpu.dot_dimension_numbers<[1], [0], [0], [1], [0, 0, 1, 1], [], []>} : vector<8x128xf32>, vector<128x512xf32>, vector<8x512xf32> -> vector<8x512xf32>
    %474 = arith.addf %470, %473 : vector<8x512xf32>
    %475 = vector.broadcast %19 : vector<1x512xf32> to vector<8x512xf32>
    %476 = arith.addf %474, %475 : vector<8x512xf32>
    %c1_220 = arith.constant 1 : index
    %c0_221 = arith.constant 0 : index
    %c0_222 = arith.constant 0 : index
    %477 = vector.load %arg8[%c1_220, %c0_221, %c0_222] : memref<2x8x128xf32, #tpu.memory_space<vmem>>, vector<1x8x128xf32>
    %478 = vector.shape_cast %477 : vector<1x8x128xf32> to vector<8x128xf32>
    %479 = vector.extract_strided_slice %476 {offsets = [0, 0], sizes = [8, 128], strides = [1, 1]} : vector<8x512xf32> to vector<8x128xf32>
    %480 = arith.negf %479 : vector<8x128xf32>
    %481 = math.exp %480 : vector<8x128xf32>
    %cst_223 = arith.constant 1.000000e+00 : f32
    %482 = vector.broadcast %cst_223 : f32 to vector<8x128xf32>
    %483 = arith.addf %482, %481 : vector<8x128xf32>
    %484 = arith.divf %482, %483 : vector<8x128xf32>
    %485 = vector.extract_strided_slice %476 {offsets = [0, 128], sizes = [8, 128], strides = [1, 1]} : vector<8x512xf32> to vector<8x128xf32>
    %486 = arith.negf %485 : vector<8x128xf32>
    %487 = math.exp %486 : vector<8x128xf32>
    %cst_224 = arith.constant 1.000000e+00 : f32
    %488 = vector.broadcast %cst_224 : f32 to vector<8x128xf32>
    %489 = arith.addf %488, %487 : vector<8x128xf32>
    %490 = arith.divf %488, %489 : vector<8x128xf32>
    %491 = vector.extract_strided_slice %476 {offsets = [0, 256], sizes = [8, 128], strides = [1, 1]} : vector<8x512xf32> to vector<8x128xf32>
    %492 = math.tanh %491 : vector<8x128xf32>
    %493 = vector.extract_strided_slice %476 {offsets = [0, 384], sizes = [8, 128], strides = [1, 1]} : vector<8x512xf32> to vector<8x128xf32>
    %494 = arith.negf %493 : vector<8x128xf32>
    %495 = math.exp %494 : vector<8x128xf32>
    %cst_225 = arith.constant 1.000000e+00 : f32
    %496 = vector.broadcast %cst_225 : f32 to vector<8x128xf32>
    %497 = arith.addf %496, %495 : vector<8x128xf32>
    %498 = arith.divf %496, %497 : vector<8x128xf32>
    %499 = arith.mulf %490, %478 : vector<8x128xf32>
    %500 = arith.mulf %484, %492 : vector<8x128xf32>
    %501 = arith.addf %499, %500 : vector<8x128xf32>
    %502 = math.tanh %501 : vector<8x128xf32>
    %503 = arith.mulf %498, %502 : vector<8x128xf32>
    %c1_226 = arith.constant 1 : index
    %c0_227 = arith.constant 0 : index
    %c0_228 = arith.constant 0 : index
    %504 = vector.load %arg7[%c1_226, %c0_227, %c0_228] : memref<2x8x128xf32, #tpu.memory_space<vmem>>, vector<1x8x128xf32>
    %505 = vector.shape_cast %504 : vector<1x8x128xf32> to vector<8x128xf32>
    %506 = vector.shape_cast %503 : vector<8x128xf32> to vector<1x8x128xf32>
    tpu.vector_store %arg7[%c1_226, %c0_227, %c0_228], %506 {strides = array<i32>} : memref<2x8x128xf32, #tpu.memory_space<vmem>>, vector<1x8x128xf32>,
    %c1_229 = arith.constant 1 : index
    %c0_230 = arith.constant 0 : index
    %c0_231 = arith.constant 0 : index
    %507 = vector.load %arg8[%c1_229, %c0_230, %c0_231] : memref<2x8x128xf32, #tpu.memory_space<vmem>>, vector<1x8x128xf32>
    %508 = vector.shape_cast %507 : vector<1x8x128xf32> to vector<8x128xf32>
    %509 = vector.shape_cast %501 : vector<8x128xf32> to vector<1x8x128xf32>
    tpu.vector_store %arg8[%c1_229, %c0_230, %c0_231], %509 {strides = array<i32>} : memref<2x8x128xf32, #tpu.memory_space<vmem>>, vector<1x8x128xf32>,
    %cst_232 = arith.constant dense<0.000000e+00> : vector<8x128xf32>
    %510 = tpu.matmul %503, %20, %cst_232 {dimension_numbers = #tpu.dot_dimension_numbers<[1], [0], [0], [1], [0, 0, 1, 1], [], []>} : vector<8x128xf32>, vector<128x128xf32>, vector<8x128xf32> -> vector<8x128xf32>
    %511 = vector.broadcast %21 : vector<1x128xf32> to vector<8x128xf32>
    %512 = arith.addf %510, %511 : vector<8x128xf32>
    %513 = vector.extract_strided_slice %512 {offsets = [0, 0], sizes = [8, 16], strides = [1, 1]} : vector<8x128xf32> to vector<8x16xf32>
    %514 = vector.extract_strided_slice %512 {offsets = [0, 16], sizes = [8, 16], strides = [1, 1]} : vector<8x128xf32> to vector<8x16xf32>
    %515 = arith.index_cast %c4_i32 : i32 to index
    %c0_233 = arith.constant 0 : index
    %c0_234 = arith.constant 0 : index
    %516 = vector.load %arg2[%515, %c0_233, %c0_234] : memref<6x8x16xf32, #tpu.memory_space<vmem>>, vector<1x8x16xf32>
    %517 = vector.shape_cast %516 : vector<1x8x16xf32> to vector<8x16xf32>
    %cst_235 = arith.constant 5.000000e-01 : f32
    %518 = vector.broadcast %cst_235 : f32 to vector<8x16xf32>
    %519 = arith.mulf %518, %514 : vector<8x16xf32>
    %520 = math.exp %519 : vector<8x16xf32>
    %521 = arith.mulf %517, %520 : vector<8x16xf32>
    %522 = arith.addf %521, %513 : vector<8x16xf32>
    %523 = arith.index_cast %c4_i32 : i32 to index
    %c0_236 = arith.constant 0 : index
    %c0_237 = arith.constant 0 : index
    %524 = vector.load %arg6[%523, %c0_236, %c0_237] : memref<6x8x128xf32, #tpu.memory_space<vmem>>, vector<1x8x16xf32>
    %525 = vector.shape_cast %524 : vector<1x8x16xf32> to vector<8x16xf32>
    %526 = vector.shape_cast %522 : vector<8x16xf32> to vector<1x8x16xf32>
    tpu.vector_store %arg6[%523, %c0_236, %c0_237], %526 {strides = array<i32>} : memref<6x8x128xf32, #tpu.memory_space<vmem>>, vector<1x8x16xf32>,
    %527 = vector.extract_strided_slice %512 {offsets = [0, 0], sizes = [8, 32], strides = [1, 1]} : vector<8x128xf32> to vector<8x32xf32>
    %528 = arith.index_cast %c4_i32 : i32 to index
    %c0_238 = arith.constant 0 : index
    %c16_239 = arith.constant 16 : index
    %529 = vector.load %arg6[%528, %c0_238, %c16_239] : memref<6x8x128xf32, #tpu.memory_space<vmem>>, vector<1x8x32xf32>
    %530 = vector.shape_cast %529 : vector<1x8x32xf32> to vector<8x32xf32>
    %531 = vector.shape_cast %527 : vector<8x32xf32> to vector<1x8x32xf32>
    tpu.vector_store %arg6[%528, %c0_238, %c16_239], %531 {strides = array<i32>} : memref<6x8x128xf32, #tpu.memory_space<vmem>>, vector<1x8x32xf32>,
    %c5_i32 = arith.constant 5 : i32
    %c8_i32_240 = arith.constant 8 : i32
    %532 = arith.muli %c5_i32, %c8_i32_240 : i32
    %533 = arith.index_cast %532 : i32 to index
    %c0_241 = arith.constant 0 : index
    %534 = vector.load %arg9[%533, %c0_241] : memref<48x512xf32, #tpu.memory_space<vmem>>, vector<8x512xf32>
    %c0_242 = arith.constant 0 : index
    %c0_243 = arith.constant 0 : index
    %c0_244 = arith.constant 0 : index
    %535 = vector.load %arg7[%c0_242, %c0_243, %c0_244] : memref<2x8x128xf32, #tpu.memory_space<vmem>>, vector<1x8x128xf32>
    %536 = vector.shape_cast %535 : vector<1x8x128xf32> to vector<8x128xf32>
    %cst_245 = arith.constant dense<0.000000e+00> : vector<8x512xf32>
    %537 = tpu.matmul %536, %16, %cst_245 {dimension_numbers = #tpu.dot_dimension_numbers<[1], [0], [0], [1], [0, 0, 1, 1], [], []>} : vector<8x128xf32>, vector<128x512xf32>, vector<8x512xf32> -> vector<8x512xf32>
    %538 = arith.addf %534, %537 : vector<8x512xf32>
    %c0_246 = arith.constant 0 : index
    %c0_247 = arith.constant 0 : index
    %c0_248 = arith.constant 0 : index
    %539 = vector.load %arg8[%c0_246, %c0_247, %c0_248] : memref<2x8x128xf32, #tpu.memory_space<vmem>>, vector<1x8x128xf32>
    %540 = vector.shape_cast %539 : vector<1x8x128xf32> to vector<8x128xf32>
    %541 = vector.extract_strided_slice %538 {offsets = [0, 0], sizes = [8, 128], strides = [1, 1]} : vector<8x512xf32> to vector<8x128xf32>
    %542 = arith.negf %541 : vector<8x128xf32>
    %543 = math.exp %542 : vector<8x128xf32>
    %cst_249 = arith.constant 1.000000e+00 : f32
    %544 = vector.broadcast %cst_249 : f32 to vector<8x128xf32>
    %545 = arith.addf %544, %543 : vector<8x128xf32>
    %546 = arith.divf %544, %545 : vector<8x128xf32>
    %547 = vector.extract_strided_slice %538 {offsets = [0, 128], sizes = [8, 128], strides = [1, 1]} : vector<8x512xf32> to vector<8x128xf32>
    %548 = arith.negf %547 : vector<8x128xf32>
    %549 = math.exp %548 : vector<8x128xf32>
    %cst_250 = arith.constant 1.000000e+00 : f32
    %550 = vector.broadcast %cst_250 : f32 to vector<8x128xf32>
    %551 = arith.addf %550, %549 : vector<8x128xf32>
    %552 = arith.divf %550, %551 : vector<8x128xf32>
    %553 = vector.extract_strided_slice %538 {offsets = [0, 256], sizes = [8, 128], strides = [1, 1]} : vector<8x512xf32> to vector<8x128xf32>
    %554 = math.tanh %553 : vector<8x128xf32>
    %555 = vector.extract_strided_slice %538 {offsets = [0, 384], sizes = [8, 128], strides = [1, 1]} : vector<8x512xf32> to vector<8x128xf32>
    %556 = arith.negf %555 : vector<8x128xf32>
    %557 = math.exp %556 : vector<8x128xf32>
    %cst_251 = arith.constant 1.000000e+00 : f32
    %558 = vector.broadcast %cst_251 : f32 to vector<8x128xf32>
    %559 = arith.addf %558, %557 : vector<8x128xf32>
    %560 = arith.divf %558, %559 : vector<8x128xf32>
    %561 = arith.mulf %552, %540 : vector<8x128xf32>
    %562 = arith.mulf %546, %554 : vector<8x128xf32>
    %563 = arith.addf %561, %562 : vector<8x128xf32>
    %564 = math.tanh %563 : vector<8x128xf32>
    %565 = arith.mulf %560, %564 : vector<8x128xf32>
    %c0_252 = arith.constant 0 : index
    %c0_253 = arith.constant 0 : index
    %c0_254 = arith.constant 0 : index
    %566 = vector.load %arg7[%c0_252, %c0_253, %c0_254] : memref<2x8x128xf32, #tpu.memory_space<vmem>>, vector<1x8x128xf32>
    %567 = vector.shape_cast %566 : vector<1x8x128xf32> to vector<8x128xf32>
    %568 = vector.shape_cast %565 : vector<8x128xf32> to vector<1x8x128xf32>
    tpu.vector_store %arg7[%c0_252, %c0_253, %c0_254], %568 {strides = array<i32>} : memref<2x8x128xf32, #tpu.memory_space<vmem>>, vector<1x8x128xf32>,
    %c0_255 = arith.constant 0 : index
    %c0_256 = arith.constant 0 : index
    %c0_257 = arith.constant 0 : index
    %569 = vector.load %arg8[%c0_255, %c0_256, %c0_257] : memref<2x8x128xf32, #tpu.memory_space<vmem>>, vector<1x8x128xf32>
    %570 = vector.shape_cast %569 : vector<1x8x128xf32> to vector<8x128xf32>
    %571 = vector.shape_cast %563 : vector<8x128xf32> to vector<1x8x128xf32>
    tpu.vector_store %arg8[%c0_255, %c0_256, %c0_257], %571 {strides = array<i32>} : memref<2x8x128xf32, #tpu.memory_space<vmem>>, vector<1x8x128xf32>,
    %cst_258 = arith.constant dense<0.000000e+00> : vector<8x512xf32>
    %572 = tpu.matmul %565, %17, %cst_258 {dimension_numbers = #tpu.dot_dimension_numbers<[1], [0], [0], [1], [0, 0, 1, 1], [], []>} : vector<8x128xf32>, vector<128x512xf32>, vector<8x512xf32> -> vector<8x512xf32>
    %c1_259 = arith.constant 1 : index
    %c0_260 = arith.constant 0 : index
    %c0_261 = arith.constant 0 : index
    %573 = vector.load %arg7[%c1_259, %c0_260, %c0_261] : memref<2x8x128xf32, #tpu.memory_space<vmem>>, vector<1x8x128xf32>
    %574 = vector.shape_cast %573 : vector<1x8x128xf32> to vector<8x128xf32>
    %cst_262 = arith.constant dense<0.000000e+00> : vector<8x512xf32>
    %575 = tpu.matmul %574, %18, %cst_262 {dimension_numbers = #tpu.dot_dimension_numbers<[1], [0], [0], [1], [0, 0, 1, 1], [], []>} : vector<8x128xf32>, vector<128x512xf32>, vector<8x512xf32> -> vector<8x512xf32>
    %576 = arith.addf %572, %575 : vector<8x512xf32>
    %577 = vector.broadcast %19 : vector<1x512xf32> to vector<8x512xf32>
    %578 = arith.addf %576, %577 : vector<8x512xf32>
    %c1_263 = arith.constant 1 : index
    %c0_264 = arith.constant 0 : index
    %c0_265 = arith.constant 0 : index
    %579 = vector.load %arg8[%c1_263, %c0_264, %c0_265] : memref<2x8x128xf32, #tpu.memory_space<vmem>>, vector<1x8x128xf32>
    %580 = vector.shape_cast %579 : vector<1x8x128xf32> to vector<8x128xf32>
    %581 = vector.extract_strided_slice %578 {offsets = [0, 0], sizes = [8, 128], strides = [1, 1]} : vector<8x512xf32> to vector<8x128xf32>
    %582 = arith.negf %581 : vector<8x128xf32>
    %583 = math.exp %582 : vector<8x128xf32>
    %cst_266 = arith.constant 1.000000e+00 : f32
    %584 = vector.broadcast %cst_266 : f32 to vector<8x128xf32>
    %585 = arith.addf %584, %583 : vector<8x128xf32>
    %586 = arith.divf %584, %585 : vector<8x128xf32>
    %587 = vector.extract_strided_slice %578 {offsets = [0, 128], sizes = [8, 128], strides = [1, 1]} : vector<8x512xf32> to vector<8x128xf32>
    %588 = arith.negf %587 : vector<8x128xf32>
    %589 = math.exp %588 : vector<8x128xf32>
    %cst_267 = arith.constant 1.000000e+00 : f32
    %590 = vector.broadcast %cst_267 : f32 to vector<8x128xf32>
    %591 = arith.addf %590, %589 : vector<8x128xf32>
    %592 = arith.divf %590, %591 : vector<8x128xf32>
    %593 = vector.extract_strided_slice %578 {offsets = [0, 256], sizes = [8, 128], strides = [1, 1]} : vector<8x512xf32> to vector<8x128xf32>
    %594 = math.tanh %593 : vector<8x128xf32>
    %595 = vector.extract_strided_slice %578 {offsets = [0, 384], sizes = [8, 128], strides = [1, 1]} : vector<8x512xf32> to vector<8x128xf32>
    %596 = arith.negf %595 : vector<8x128xf32>
    %597 = math.exp %596 : vector<8x128xf32>
    %cst_268 = arith.constant 1.000000e+00 : f32
    %598 = vector.broadcast %cst_268 : f32 to vector<8x128xf32>
    %599 = arith.addf %598, %597 : vector<8x128xf32>
    %600 = arith.divf %598, %599 : vector<8x128xf32>
    %601 = arith.mulf %592, %580 : vector<8x128xf32>
    %602 = arith.mulf %586, %594 : vector<8x128xf32>
    %603 = arith.addf %601, %602 : vector<8x128xf32>
    %604 = math.tanh %603 : vector<8x128xf32>
    %605 = arith.mulf %600, %604 : vector<8x128xf32>
    %c1_269 = arith.constant 1 : index
    %c0_270 = arith.constant 0 : index
    %c0_271 = arith.constant 0 : index
    %606 = vector.load %arg7[%c1_269, %c0_270, %c0_271] : memref<2x8x128xf32, #tpu.memory_space<vmem>>, vector<1x8x128xf32>
    %607 = vector.shape_cast %606 : vector<1x8x128xf32> to vector<8x128xf32>
    %608 = vector.shape_cast %605 : vector<8x128xf32> to vector<1x8x128xf32>
    tpu.vector_store %arg7[%c1_269, %c0_270, %c0_271], %608 {strides = array<i32>} : memref<2x8x128xf32, #tpu.memory_space<vmem>>, vector<1x8x128xf32>,
    %c1_272 = arith.constant 1 : index
    %c0_273 = arith.constant 0 : index
    %c0_274 = arith.constant 0 : index
    %609 = vector.load %arg8[%c1_272, %c0_273, %c0_274] : memref<2x8x128xf32, #tpu.memory_space<vmem>>, vector<1x8x128xf32>
    %610 = vector.shape_cast %609 : vector<1x8x128xf32> to vector<8x128xf32>
    %611 = vector.shape_cast %603 : vector<8x128xf32> to vector<1x8x128xf32>
    tpu.vector_store %arg8[%c1_272, %c0_273, %c0_274], %611 {strides = array<i32>} : memref<2x8x128xf32, #tpu.memory_space<vmem>>, vector<1x8x128xf32>,
    %cst_275 = arith.constant dense<0.000000e+00> : vector<8x128xf32>
    %612 = tpu.matmul %605, %20, %cst_275 {dimension_numbers = #tpu.dot_dimension_numbers<[1], [0], [0], [1], [0, 0, 1, 1], [], []>} : vector<8x128xf32>, vector<128x128xf32>, vector<8x128xf32> -> vector<8x128xf32>
    %613 = vector.broadcast %21 : vector<1x128xf32> to vector<8x128xf32>
    %614 = arith.addf %612, %613 : vector<8x128xf32>
    %615 = vector.extract_strided_slice %614 {offsets = [0, 0], sizes = [8, 16], strides = [1, 1]} : vector<8x128xf32> to vector<8x16xf32>
    %616 = vector.extract_strided_slice %614 {offsets = [0, 16], sizes = [8, 16], strides = [1, 1]} : vector<8x128xf32> to vector<8x16xf32>
    %617 = arith.index_cast %c5_i32 : i32 to index
    %c0_276 = arith.constant 0 : index
    %c0_277 = arith.constant 0 : index
    %618 = vector.load %arg2[%617, %c0_276, %c0_277] : memref<6x8x16xf32, #tpu.memory_space<vmem>>, vector<1x8x16xf32>
    %619 = vector.shape_cast %618 : vector<1x8x16xf32> to vector<8x16xf32>
    %cst_278 = arith.constant 5.000000e-01 : f32
    %620 = vector.broadcast %cst_278 : f32 to vector<8x16xf32>
    %621 = arith.mulf %620, %616 : vector<8x16xf32>
    %622 = math.exp %621 : vector<8x16xf32>
    %623 = arith.mulf %619, %622 : vector<8x16xf32>
    %624 = arith.addf %623, %615 : vector<8x16xf32>
    %625 = arith.index_cast %c5_i32 : i32 to index
    %c0_279 = arith.constant 0 : index
    %c0_280 = arith.constant 0 : index
    %626 = vector.load %arg6[%625, %c0_279, %c0_280] : memref<6x8x128xf32, #tpu.memory_space<vmem>>, vector<1x8x16xf32>
    %627 = vector.shape_cast %626 : vector<1x8x16xf32> to vector<8x16xf32>
    %628 = vector.shape_cast %624 : vector<8x16xf32> to vector<1x8x16xf32>
    tpu.vector_store %arg6[%625, %c0_279, %c0_280], %628 {strides = array<i32>} : memref<6x8x128xf32, #tpu.memory_space<vmem>>, vector<1x8x16xf32>,
    %629 = vector.extract_strided_slice %614 {offsets = [0, 0], sizes = [8, 32], strides = [1, 1]} : vector<8x128xf32> to vector<8x32xf32>
    %630 = arith.index_cast %c5_i32 : i32 to index
    %c0_281 = arith.constant 0 : index
    %c16_282 = arith.constant 16 : index
    %631 = vector.load %arg6[%630, %c0_281, %c16_282] : memref<6x8x128xf32, #tpu.memory_space<vmem>>, vector<1x8x32xf32>
    %632 = vector.shape_cast %631 : vector<1x8x32xf32> to vector<8x32xf32>
    %633 = vector.shape_cast %629 : vector<8x32xf32> to vector<1x8x32xf32>
    tpu.vector_store %arg6[%630, %c0_281, %c16_282], %633 {strides = array<i32>} : memref<6x8x128xf32, #tpu.memory_space<vmem>>, vector<1x8x32xf32>,
    %c6_i32 = arith.constant 6 : i32
    return
  }
  func.func @transform_0(%arg0: i32) -> (i32, i32) {
    %c0_i32 = arith.constant 0 : i32
    %c0_i32_0 = arith.constant 0 : i32
    %c0_i32_1 = arith.constant 0 : i32
    return %c0_i32, %c0_i32_0 : i32, i32
  }
  func.func @transform_1(%arg0: i32) -> (i32, i32, i32) {
    %c0_i32 = arith.constant 0 : i32
    %c0_i32_0 = arith.constant 0 : i32
    %c0_i32_1 = arith.constant 0 : i32
    %c0_i32_2 = arith.constant 0 : i32
    return %c0_i32, %c0_i32_0, %c0_i32_1 : i32, i32, i32
  }
  func.func @transform_2(%arg0: i32) -> (i32, i32, i32) {
    %c0_i32 = arith.constant 0 : i32
    %c0_i32_0 = arith.constant 0 : i32
    %c0_i32_1 = arith.constant 0 : i32
    %c0_i32_2 = arith.constant 0 : i32
    return %c0_i32, %c0_i32_0, %c0_i32_1 : i32, i32, i32
  }
  func.func @transform_3(%arg0: i32) -> (i32, i32, i32) {
    %c0_i32 = arith.constant 0 : i32
    %c0_i32_0 = arith.constant 0 : i32
    %c0_i32_1 = arith.constant 0 : i32
    %c0_i32_2 = arith.constant 0 : i32
    return %c0_i32, %c0_i32_0, %c0_i32_1 : i32, i32, i32
  }
  func.func @transform_4(%arg0: i32) -> (i32, i32) {
    %c0_i32 = arith.constant 0 : i32
    %c0_i32_0 = arith.constant 0 : i32
    %c0_i32_1 = arith.constant 0 : i32
    return %c0_i32, %c0_i32_0 : i32, i32
  }
  func.func @transform_5(%arg0: i32) -> (i32, i32, i32) {
    %c0_i32 = arith.constant 0 : i32
    %c0_i32_0 = arith.constant 0 : i32
    %c0_i32_1 = arith.constant 0 : i32
    %c0_i32_2 = arith.constant 0 : i32
    return %c0_i32, %c0_i32_0, %c0_i32_1 : i32, i32, i32
  }
  func.func @transform_6(%arg0: i32) -> (i32, i32, i32) {
    %c0_i32 = arith.constant 0 : i32
    %c0_i32_0 = arith.constant 0 : i32
    %c0_i32_1 = arith.constant 0 : i32
    %c0_i32_2 = arith.constant 0 : i32
    return %c0_i32, %c0_i32_0, %c0_i32_1 : i32, i32, i32
  }
  func.func @transform_7(%arg0: i32) -> (i32, i32, i32) {
    %c0_i32 = arith.constant 0 : i32
    %c0_i32_0 = arith.constant 0 : i32
    %c0_i32_1 = arith.constant 0 : i32
    %c0_i32_2 = arith.constant 0 : i32
    return %c0_i32, %c0_i32_0, %c0_i32_1 : i32, i32, i32
  }
}

</mosaic_0001>

<llo_original>
// kernel: tpu_custom_call.1
$region0: #{tpu_custom_call.1}
  #allocation0 [shape = 'u32[]', space=smem, size = 0x4, offset = 0x4, fixed_abs, tag = 'smem constant byte address 0x4 - core index']
  #allocation1 [shape = 'u32[144,128]{1,0:T(1,128)}', space=vmem, size = 0x12000, scoped, tag = 'internal scratch']
  #allocation2 [shape = 'f32[48,512]{1,0:T(8,128)}', space=vmem, size = 0x18000, scoped, tag = 'scratch operand']
  %s0 = inlined_call_operand.vmem [shape: f32[48,16], index: 0, kind: input, shape index: {}]
  %s1 = inlined_call_operand.hbm [shape: f32[6,8,16], index: 1, kind: input, shape index: {}]
  %s2 = inlined_call_operand.hbm [shape: f32[2,8,128], index: 2, kind: input, shape index: {}]
  %s3 = inlined_call_operand.hbm [shape: f32[2,8,128], index: 3, kind: input, shape index: {}]
  %s4 = inlined_call_operand.hbm [shape: f32[688,512], index: 4, kind: input, shape index: {}]
  %s5 = inlined_call_operand.hbm [shape: f32[6,8,128], index: 5, kind: output, shape index: {0}]
  %s6 = inlined_call_operand.hbm [shape: f32[2,8,128], index: 6, kind: output, shape index: {1}]
  %s7 = inlined_call_operand.hbm [shape: f32[2,8,128], index: 7, kind: output, shape index: {2}]
  %8 = xla_tuple %s5, %s6, %s7
  %s9 = sld [smem:[#allocation0]]
  $region62: #{tpu_custom_call.1} parent=0
    _
  %s11 = ssub.s32 1, %s9
  %s12 = scalar_select 0, %s11, %s9
  $region1: #{tpu_custom_call.1} parent=0
    #allocation3 [shape = 'u8[24576]{0}', space=vmem, size = 0x6000, scoped, tag = 'input window, operand 1, single buffered']
    #allocation4 [shape = 's32[1]{0}', space=sflag, size = 0x4, scoped, tag = 'scoped memory for tpu_custom_call.1']
    #allocation5 [shape = 's32[1]{0}', space=sflag, size = 0x4, scoped, tag = 'scoped memory for tpu_custom_call.1']
    #allocation6 [shape = 'u8[8192]{0}', space=vmem, size = 0x2000, scoped, tag = 'input window, operand 2, single buffered']
    #allocation7 [shape = 's32[1]{0}', space=sflag, size = 0x4, scoped, tag = 'scoped memory for tpu_custom_call.1']
    #allocation8 [shape = 'u8[8192]{0}', space=vmem, size = 0x2000, scoped, tag = 'input window, operand 3, single buffered']
    #allocation9 [shape = 'u8[1409024]{0}', space=vmem, size = 0x158000, scoped, tag = 'input window, operand 4, single buffered']
    #allocation10 [shape = 's32[1]{0}', space=sflag, size = 0x4, scoped, tag = 'scoped memory for tpu_custom_call.1']
    #allocation11 [shape = 'u8[24576]{0}', space=vmem, size = 0x6000, scoped, tag = 'output window, operand 0, single buffered']
    #allocation12 [shape = 'u8[8192]{0}', space=vmem, size = 0x2000, scoped, tag = 'output window, operand 1, single buffered']
    #allocation13 [shape = 's32[1]{0}', space=sflag, size = 0x4, scoped, tag = 'scoped memory for tpu_custom_call.1']
    #allocation14 [shape = 'u8[8192]{0}', space=vmem, size = 0x2000, scoped, tag = 'output window, operand 2, single buffered']
    %13 = vsyncpa [#allocation4], 0
    %14 = vsyncpa [#allocation7], 0
    %15 = vsyncpa [#allocation10], 0
    %16 = vsyncpa [#allocation5], 0
    %17 = vsyncpa [#allocation13], 0
    // Predicated region
    $region2: #{tpu_custom_call.1} parent=1 // pred_check
      _
    $region3: #{tpu_custom_call.1} parent=1 // pred_check_branch
      %19 = sbr.rel (0) target = $region5
    $region4: #{tpu_custom_call.1} parent=1 // pred_region
      _
    $region5: #{tpu_custom_call.1} parent=1 // pred_fallthru
      _
    // Predicated region
    $region6: #{tpu_custom_call.1} parent=1 // pred_check
      _
    $region7: #{tpu_custom_call.1} parent=1 // pred_check_branch
      %21 = sbr.rel (0) target = $region9
    $region8: #{tpu_custom_call.1} parent=1 // pred_region
      %s23 = ssub.s32 768, 768
      %24 = vsyncadd [#allocation4], %s23
      %s25 = sshll.u32 [#allocation3], 4
      %s26 = int_to_ptr.vmem [resolvable:$true] %s25
      %31 = dma.hbm_to_vmem [thread:$0]  %s1, 768, %s26, [#allocation4], 128, 128, 8
    $region9: #{tpu_custom_call.1} parent=1 // pred_fallthru
      _
    // Predicated region
    $region10: #{tpu_custom_call.1} parent=1 // pred_check
      _
    $region11: #{tpu_custom_call.1} parent=1 // pred_check_branch
      %33 = sbr.rel (0) target = $region13
    $region12: #{tpu_custom_call.1} parent=1 // pred_region
      %s35 = ssub.s32 256, 256
      %36 = vsyncadd [#allocation7], %s35
      %s37 = sshll.u32 [#allocation6], 4
      %s38 = int_to_ptr.vmem [resolvable:$true] %s37
      %43 = dma.hbm_to_vmem [thread:$0]  %s2, 256, %s38, [#allocation7], 128, 128, 8
    $region13: #{tpu_custom_call.1} parent=1 // pred_fallthru
      _
    // Predicated region
    $region14: #{tpu_custom_call.1} parent=1 // pred_check
      _
    $region15: #{tpu_custom_call.1} parent=1 // pred_check_branch
      %45 = sbr.rel (0) target = $region17
    $region16: #{tpu_custom_call.1} parent=1 // pred_region
      %s47 = ssub.s32 256, 256
      %48 = vsyncadd [#allocation7], %s47
      %s49 = sshll.u32 [#allocation8], 4
      %s50 = int_to_ptr.vmem [resolvable:$true] %s49
      %55 = dma.hbm_to_vmem [thread:$0]  %s3, 256, %s50, [#allocation7], 128, 128, 8
    $region17: #{tpu_custom_call.1} parent=1 // pred_fallthru
      _
    // Predicated region
    $region18: #{tpu_custom_call.1} parent=1 // pred_check
      _
    $region19: #{tpu_custom_call.1} parent=1 // pred_check_branch
      %57 = sbr.rel (0) target = $region21
    $region20: #{tpu_custom_call.1} parent=1 // pred_region
      %s59 = ssub.s32 44032, 44032
      %60 = vsyncadd [#allocation10], %s59
      %s61 = sshll.u32 [#allocation9], 4
      %s62 = int_to_ptr.vmem [resolvable:$true] %s61
      %67 = dma.hbm_to_vmem [thread:$0]  %s4, 44032, %s62, [#allocation10], 512, 512, 32
    $region21: #{tpu_custom_call.1} parent=1 // pred_fallthru
      _
    // Predicated region
    $region22: #{tpu_custom_call.1} parent=1 // pred_check
      _
    $region23: #{tpu_custom_call.1} parent=1 // pred_check_branch
      %69 = sbr.rel (0) target = $region25
    $region24: #{tpu_custom_call.1} parent=1 // pred_region
      %70 = dma.done [#allocation4], 768
    $region25: #{tpu_custom_call.1} parent=1 // pred_fallthru
      _
    // Predicated region
    $region26: #{tpu_custom_call.1} parent=1 // pred_check
      _
    $region27: #{tpu_custom_call.1} parent=1 // pred_check_branch
      %72 = sbr.rel (0) target = $region29
    $region28: #{tpu_custom_call.1} parent=1 // pred_region
      %73 = dma.done [#allocation7], 256
    $region29: #{tpu_custom_call.1} parent=1 // pred_fallthru
      _
    // Predicated region
    $region30: #{tpu_custom_call.1} parent=1 // pred_check
      _
    $region31: #{tpu_custom_call.1} parent=1 // pred_check_branch
      %75 = sbr.rel (0) target = $region33
    $region32: #{tpu_custom_call.1} parent=1 // pred_region
      %76 = dma.done [#allocation7], 256
    $region33: #{tpu_custom_call.1} parent=1 // pred_fallthru
      _
    // Predicated region
    $region34: #{tpu_custom_call.1} parent=1 // pred_check
      _
    $region35: #{tpu_custom_call.1} parent=1 // pred_check_branch
      %78 = sbr.rel (0) target = $region37
    $region36: #{tpu_custom_call.1} parent=1 // pred_region
      %79 = dma.done [#allocation10], 44032
    $region37: #{tpu_custom_call.1} parent=1 // pred_fallthru
      _
    %v80 = vld [vmem:[#allocation6] sm:$0xff]
    %v81 = vld [vmem:[#allocation6 + $0x8] sm:$0xff]
    %82 = vst [vmem:[#allocation12] sm:$0xff] %v80
    %83 = vst [vmem:[#allocation12 + $0x8] sm:$0xff] %v81
    %v84 = vld [vmem:[#allocation8] sm:$0xff]
    %v85 = vld [vmem:[#allocation8 + $0x8] sm:$0xff]
    %86 = vst [vmem:[#allocation14] sm:$0xff] %v84
    %87 = vst [vmem:[#allocation14 + $0x8] sm:$0xff] %v85
    %v88 = vld [vmem:[#allocation9] sm:$0xff]
    %v89 = vld [vmem:[#allocation9 + $0x20] sm:$0xff]
    %v90 = vld [vmem:[#allocation9 + $0xa40] ss:$0 sm:$0xff]
    %v91 = vld [vmem:[%s0] sm:$0xff]
    %v92 = vld [vmem:[%s0 + $0x8] sm:$0xff]
    %v93 = vld [vmem:[%s0 + $0x10] sm:$0xff]
    %v94 = vld [vmem:[%s0 + $0x18] sm:$0xff]
    %v95 = vld [vmem:[%s0 + $0x20] sm:$0xff]
    %v96 = vld [vmem:[%s0 + $0x28] sm:$0xff]
    %vm97 = vcmask 130048
    %v99 = vsel %vm97, %v91, 0
    %v102 = vsel %vm97, %v92, 0
    %v105 = vsel %vm97, %v93, 0
    %v108 = vsel %vm97, %v94, 0
    %v111 = vsel %vm97, %v95, 0
    %v114 = vsel %vm97, %v96, 0
    %116 = vmatprep.subr.mxu0 0.0
    %117 = vmatpush1.msra.mxu0 %v88
    %118 = vmatprep.subr.mxu0 0.0
    %119 = vmatpush1.msra.mxu0 %v89
    %120 = vmatprep.subr.mxu0 0.0
    %121 = vmatpush1.msra.mxu0 0.0
    %122 = vmatprep.subr.mxu0 0.0
    %123 = vmatpush1.msra.mxu0 0.0
    %124 = vmatprep.subr.mxu0 0.0
    %125 = vmatpush1.msra.mxu0 0.0
    %126 = vmatprep.subr.mxu0 0.0
    %127 = vmatpush1.msra.mxu0 0.0
    %128 = vmatprep.subr.mxu0 0.0
    %129 = vmatpush1.msra.mxu0 0.0
    %130 = vmatprep.subr.mxu0 0.0
    %131 = vmatpush1.msra.mxu0 0.0
    %132 = vmatprep.subr.mxu0 0.0
    %133 = vmatpush1.msra.mxu0 0.0
    %134 = vmatprep.subr.mxu0 0.0
    %135 = vmatpush1.msra.mxu0 0.0
    %136 = vmatprep.subr.mxu0 0.0
    %137 = vmatpush1.msra.mxu0 0.0
    %138 = vmatprep.subr.mxu0 0.0
    %139 = vmatpush1.msra.mxu0 0.0
    %140 = vmatprep.subr.mxu0 0.0
    %141 = vmatpush1.msra.mxu0 0.0
    %142 = vmatprep.subr.mxu0 0.0
    %143 = vmatpush1.msra.mxu0 0.0
    %144 = vmatprep.subr.mxu0 0.0
    %145 = vmatpush1.msra.mxu0 0.0
    %146 = vmatprep.subr.mxu0 0.0
    %147 = vmatpush1.msra.mxu0 0.0
    %148 = vmatprep.subr.mxu0 0.0
    %149 = vmatpush1.msra.mxu0 0.0
    %150 = vmatprep.subr.mxu0 0.0
    %151 = vmatpush1.msra.mxu0 0.0
    %152 = vmatprep.subr.mxu0 0.0
    %153 = vmatpush1.msra.mxu0 0.0
    %154 = vmatprep.subr.mxu0 0.0
    %155 = vmatpush1.msra.mxu0 0.0
    %156 = vmatprep.subr.mxu0 0.0
    %157 = vmatpush1.msra.mxu0 0.0
    %158 = vmatprep.subr.mxu0 0.0
    %159 = vmatpush1.msra.mxu0 0.0
    %160 = vmatprep.subr.mxu0 0.0
    %161 = vmatpush1.msra.mxu0 0.0
    %162 = vmatprep.subr.mxu0 0.0
    %163 = vmatpush1.msra.mxu0 0.0
    %164 = vmatprep.subr.mxu0 0.0
    %165 = vmatpush1.msra.mxu0 0.0
    %166 = vmatprep.subr.mxu0 0.0
    %167 = vmatpush1.msra.mxu0 0.0
    %168 = vmatprep.subr.mxu0 0.0
    %169 = vmatpush1.msra.mxu0 0.0
    %170 = vmatprep.subr.mxu0 0.0
    %171 = vmatpush1.msra.mxu0 0.0
    %172 = vmatprep.subr.mxu0 0.0
    %173 = vmatpush1.msra.mxu0 0.0
    %174 = vmatprep.subr.mxu0 0.0
    %175 = vmatpush1.msra.mxu0 0.0
    %176 = vmatprep.subr.mxu0 0.0
    %177 = vmatpush1.msra.mxu0 0.0
    %178 = vmatprep.subr.mxu0 0.0
    %179 = vmatpush1.msra.mxu0 0.0
    %180 = vmatprep.mubr.f32.mxu0 0.0
    %181 = vmatmul.mubr.f32.gmra.mrb[0].mxu0 %v99
    %v182 = vpop.f32.mrb[0].mxu0
    %v183 = vadd.f32 %v90, %v182
    %v184 = vpop.f32.mrb[0].mxu0
    %185 = vmatprep.mubr.f32.mxu0 0.0
    %186 = vmatmul.mubr.f32.gmra.mrb[0].mxu0 %v102
    %v187 = vpop.f32.mrb[0].mxu0
    %v188 = vadd.f32 %v90, %v187
    %v189 = vpop.f32.mrb[0].mxu0
    %190 = vmatprep.mubr.f32.mxu0 0.0
    %191 = vmatmul.mubr.f32.gmra.mrb[0].mxu0 %v105
    %v192 = vpop.f32.mrb[0].mxu0
    %v193 = vadd.f32 %v90, %v192
    %v194 = vpop.f32.mrb[0].mxu0
    %195 = vmatprep.mubr.f32.mxu0 0.0
    %196 = vmatmul.mubr.f32.gmra.mrb[0].mxu0 %v108
    %v197 = vpop.f32.mrb[0].mxu0
    %v198 = vadd.f32 %v90, %v197
    %v199 = vpop.f32.mrb[0].mxu0
    %200 = vmatprep.mubr.f32.mxu0 0.0
    %201 = vmatmul.mubr.f32.gmra.mrb[0].mxu0 %v111
    %v202 = vpop.f32.mrb[0].mxu0
    %v203 = vadd.f32 %v90, %v202
    %v204 = vpop.f32.mrb[0].mxu0
    %205 = vmatprep.mubr.f32.mxu0 0.0
    %206 = vmatmul.mubr.f32.gmra.mrb[0].mxu0 %v114
    %v207 = vpop.f32.mrb[0].mxu0
    %v208 = vadd.f32 %v90, %v207
    %v209 = vpop.f32.mrb[0].mxu0
    %210 = vdwg.mxu0
    %v211 = vld [vmem:[#allocation9 + $0x40] sm:$0xff]
    %v212 = vld [vmem:[#allocation9 + $0x48] sm:$0xff]
    %v213 = vld [vmem:[#allocation9 + $0x50] sm:$0xff]
    %v214 = vld [vmem:[#allocation9 + $0x58] sm:$0xff]
    %v215 = vld [vmem:[#allocation9 + $0x60] sm:$0xff]
    %v216 = vld [vmem:[#allocation9 + $0x68] sm:$0xff]
    %v217 = vld [vmem:[#allocation9 + $0x70] sm:$0xff]
    %v218 = vld [vmem:[#allocation9 + $0x78] sm:$0xff]
    %v219 = vld [vmem:[#allocation9 + $0x80] sm:$0xff]
    %v220 = vld [vmem:[#allocation9 + $0x88] sm:$0xff]
    %v221 = vld [vmem:[#allocation9 + $0x90] sm:$0xff]
    %v222 = vld [vmem:[#allocation9 + $0x98] sm:$0xff]
    %v223 = vld [vmem:[#allocation9 + $0xa0] sm:$0xff]
    %v224 = vld [vmem:[#allocation9 + $0xa8] sm:$0xff]
    %v225 = vld [vmem:[#allocation9 + $0xb0] sm:$0xff]
    %v226 = vld [vmem:[#allocation9 + $0xb8] sm:$0xff]
    %v227 = vld [vmem:[#allocation9 + $0xc0] sm:$0xff]
    %v228 = vld [vmem:[#allocation9 + $0xc8] sm:$0xff]
    %v229 = vld [vmem:[#allocation9 + $0xd0] sm:$0xff]
    %v230 = vld [vmem:[#allocation9 + $0xd8] sm:$0xff]
    %v231 = vld [vmem:[#allocation9 + $0xe0] sm:$0xff]
    %v232 = vld [vmem:[#allocation9 + $0xe8] sm:$0xff]
    %v233 = vld [vmem:[#allocation9 + $0xf0] sm:$0xff]
    %v234 = vld [vmem:[#allocation9 + $0xf8] sm:$0xff]
    %v235 = vld [vmem:[#allocation9 + $0x100] sm:$0xff]
    %v236 = vld [vmem:[#allocation9 + $0x108] sm:$0xff]
    %v237 = vld [vmem:[#allocation9 + $0x110] sm:$0xff]
    %v238 = vld [vmem:[#allocation9 + $0x118] sm:$0xff]
    %v239 = vld [vmem:[#allocation9 + $0x120] sm:$0xff]
    %v240 = vld [vmem:[#allocation9 + $0x128] sm:$0xff]
    %v241 = vld [vmem:[#allocation9 + $0x130] sm:$0xff]
    %v242 = vld [vmem:[#allocation9 + $0x138] sm:$0xff]
    %v243 = vld [vmem:[#allocation9 + $0x140] sm:$0xff]
    %v244 = vld [vmem:[#allocation9 + $0x148] sm:$0xff]
    %v245 = vld [vmem:[#allocation9 + $0x150] sm:$0xff]
    %v246 = vld [vmem:[#allocation9 + $0x158] sm:$0xff]
    %v247 = vld [vmem:[#allocation9 + $0x160] sm:$0xff]
    %v248 = vld [vmem:[#allocation9 + $0x168] sm:$0xff]
    %v249 = vld [vmem:[#allocation9 + $0x170] sm:$0xff]
    %v250 = vld [vmem:[#allocation9 + $0x178] sm:$0xff]
    %v251 = vld [vmem:[#allocation9 + $0x180] sm:$0xff]
    %v252 = vld [vmem:[#allocation9 + $0x188] sm:$0xff]
    %v253 = vld [vmem:[#allocation9 + $0x190] sm:$0xff]
    %v254 = vld [vmem:[#allocation9 + $0x198] sm:$0xff]
    %v255 = vld [vmem:[#allocation9 + $0x1a0] sm:$0xff]
    %v256 = vld [vmem:[#allocation9 + $0x1a8] sm:$0xff]
    %v257 = vld [vmem:[#allocation9 + $0x1b0] sm:$0xff]
    %v258 = vld [vmem:[#allocation9 + $0x1b8] sm:$0xff]
    %v259 = vld [vmem:[#allocation9 + $0x1c0] sm:$0xff]
    %v260 = vld [vmem:[#allocation9 + $0x1c8] sm:$0xff]
    %v261 = vld [vmem:[#allocation9 + $0x1d0] sm:$0xff]
    %v262 = vld [vmem:[#allocation9 + $0x1d8] sm:$0xff]
    %v263 = vld [vmem:[#allocation9 + $0x1e0] sm:$0xff]
    %v264 = vld [vmem:[#allocation9 + $0x1e8] sm:$0xff]
    %v265 = vld [vmem:[#allocation9 + $0x1f0] sm:$0xff]
    %v266 = vld [vmem:[#allocation9 + $0x1f8] sm:$0xff]
    %v267 = vld [vmem:[#allocation9 + $0x200] sm:$0xff]
    %v268 = vld [vmem:[#allocation9 + $0x208] sm:$0xff]
    %v269 = vld [vmem:[#allocation9 + $0x210] sm:$0xff]
    %v270 = vld [vmem:[#allocation9 + $0x218] sm:$0xff]
    %v271 = vld [vmem:[#allocation9 + $0x220] sm:$0xff]
    %v272 = vld [vmem:[#allocation9 + $0x228] sm:$0xff]
    %v273 = vld [vmem:[#allocation9 + $0x230] sm:$0xff]
    %v274 = vld [vmem:[#allocation9 + $0x238] sm:$0xff]
    %s275 = scalar_lea.vmem [#allocation9], 2656
    %v276 = vld [vmem:[%s275] ss:$8 sm:$0xf]
    %v278 = vlaneseq
    %v279 = vshrl.u32 %v278, 7
    %v280 = vsub.s32 0, %v279
    %v281 = vrot.slane %v276, %v280
    %v282 = vlaneseq
    %v283 = vshrl.u32 %v282, 7
    %v284 = vsub.s32 1, %v283
    %v285 = vrot.slane %v276, %v284
    %v286 = vlaneseq
    %v287 = vshrl.u32 %v286, 7
    %v288 = vsub.s32 2, %v287
    %v289 = vrot.slane %v276, %v288
    %v290 = vlaneseq
    %v291 = vshrl.u32 %v290, 7
    %v292 = vsub.s32 3, %v291
    %v293 = vrot.slane %v276, %v292
    %298 = vmatprep.subr.mxu0 %v212
    %299 = vmatpush1.msra.mxu0 %v211
    %300 = vmatprep.subr.mxu0 %v216
    %301 = vmatpush1.msra.mxu0 %v215
    %302 = vmatprep.subr.mxu0 %v220
    %303 = vmatpush1.msra.mxu0 %v219
    %304 = vmatprep.subr.mxu0 %v224
    %305 = vmatpush1.msra.mxu0 %v223
    %306 = vmatprep.subr.mxu0 %v228
    %307 = vmatpush1.msra.mxu0 %v227
    %308 = vmatprep.subr.mxu0 %v232
    %309 = vmatpush1.msra.mxu0 %v231
    %310 = vmatprep.subr.mxu0 %v236
    %311 = vmatpush1.msra.mxu0 %v235
    %312 = vmatprep.subr.mxu0 %v240
    %313 = vmatpush1.msra.mxu0 %v239
    %314 = vmatprep.subr.mxu0 %v244
    %315 = vmatpush1.msra.mxu0 %v243
    %316 = vmatprep.subr.mxu0 %v248
    %317 = vmatpush1.msra.mxu0 %v247
    %318 = vmatprep.subr.mxu0 %v252
    %319 = vmatpush1.msra.mxu0 %v251
    %320 = vmatprep.subr.mxu0 %v256
    %321 = vmatpush1.msra.mxu0 %v255
    %322 = vmatprep.subr.mxu0 %v260
    %323 = vmatpush1.msra.mxu0 %v259
    %324 = vmatprep.subr.mxu0 %v264
    %325 = vmatpush1.msra.mxu0 %v263
    %326 = vmatprep.subr.mxu0 %v268
    %327 = vmatpush1.msra.mxu0 %v267
    %328 = vmatprep.subr.mxu0 %v272
    %329 = vmatpush1.msra.mxu0 %v271
    %330 = vmatprep.subr.mxu0 0.0
    %331 = vmatpush1.msra.mxu0 0.0
    %332 = vmatprep.subr.mxu0 0.0
    %333 = vmatpush1.msra.mxu0 0.0
    %334 = vmatprep.subr.mxu0 0.0
    %335 = vmatpush1.msra.mxu0 0.0
    %336 = vmatprep.subr.mxu0 0.0
    %337 = vmatpush1.msra.mxu0 0.0
    %338 = vmatprep.subr.mxu0 0.0
    %339 = vmatpush1.msra.mxu0 0.0
    %340 = vmatprep.subr.mxu0 0.0
    %341 = vmatpush1.msra.mxu0 0.0
    %342 = vmatprep.subr.mxu0 0.0
    %343 = vmatpush1.msra.mxu0 0.0
    %344 = vmatprep.subr.mxu0 0.0
    %345 = vmatpush1.msra.mxu0 0.0
    %346 = vmatprep.subr.mxu0 0.0
    %347 = vmatpush1.msra.mxu0 0.0
    %348 = vmatprep.subr.mxu0 0.0
    %349 = vmatpush1.msra.mxu0 0.0
    %350 = vmatprep.subr.mxu0 0.0
    %351 = vmatpush1.msra.mxu0 0.0
    %352 = vmatprep.subr.mxu0 0.0
    %353 = vmatpush1.msra.mxu0 0.0
    %354 = vmatprep.subr.mxu0 0.0
    %355 = vmatpush1.msra.mxu0 0.0
    %356 = vmatprep.subr.mxu0 0.0
    %357 = vmatpush1.msra.mxu0 0.0
    %358 = vmatprep.subr.mxu0 0.0
    %359 = vmatpush1.msra.mxu0 0.0
    %360 = vmatprep.subr.mxu0 0.0
    %361 = vmatpush1.msra.mxu0 0.0
    %362 = vmatprep.mubr.f32.mxu0 0.0
    %363 = vmatmul.mubr.f32.gmra.mrb[0].mxu0 %v183
    %v364 = vpop.f32.mrb[0].mxu0
    %v365 = vadd.f32 %v281, %v364
    %v366 = vpop.f32.mrb[0].mxu0
    %v367 = vadd.f32 %v285, %v366
    %368 = vmatprep.mubr.f32.mxu0 0.0
    %369 = vmatmul.mubr.f32.gmra.mrb[0].mxu0 %v188
    %v370 = vpop.f32.mrb[0].mxu0
    %v371 = vadd.f32 %v281, %v370
    %v372 = vpop.f32.mrb[0].mxu0
    %v373 = vadd.f32 %v285, %v372
    %374 = vmatprep.mubr.f32.mxu0 0.0
    %375 = vmatmul.mubr.f32.gmra.mrb[0].mxu0 %v193
    %v376 = vpop.f32.mrb[0].mxu0
    %v377 = vadd.f32 %v281, %v376
    %v378 = vpop.f32.mrb[0].mxu0
    %v379 = vadd.f32 %v285, %v378
    %380 = vmatprep.mubr.f32.mxu0 0.0
    %381 = vmatmul.mubr.f32.gmra.mrb[0].mxu0 %v198
    %v382 = vpop.f32.mrb[0].mxu0
    %v383 = vadd.f32 %v281, %v382
    %v384 = vpop.f32.mrb[0].mxu0
    %v385 = vadd.f32 %v285, %v384
    %386 = vmatprep.mubr.f32.mxu0 0.0
    %387 = vmatmul.mubr.f32.gmra.mrb[0].mxu0 %v203
    %v388 = vpop.f32.mrb[0].mxu0
    %v389 = vadd.f32 %v281, %v388
    %v390 = vpop.f32.mrb[0].mxu0
    %v391 = vadd.f32 %v285, %v390
    %392 = vmatprep.mubr.f32.mxu0 0.0
    %393 = vmatmul.mubr.f32.gmra.mrb[0].mxu0 %v208
    %v394 = vpop.f32.mrb[0].mxu0
    %v395 = vadd.f32 %v281, %v394
    %v396 = vpop.f32.mrb[0].mxu0
    %v397 = vadd.f32 %v285, %v396
    %398 = vdwg.mxu0
    %399 = vmatprep.subr.mxu0 %v214
    %400 = vmatpush1.msra.mxu0 %v213
    %401 = vmatprep.subr.mxu0 %v218
    %402 = vmatpush1.msra.mxu0 %v217
    %403 = vmatprep.subr.mxu0 %v222
    %404 = vmatpush1.msra.mxu0 %v221
    %405 = vmatprep.subr.mxu0 %v226
    %406 = vmatpush1.msra.mxu0 %v225
    %407 = vmatprep.subr.mxu0 %v230
    %408 = vmatpush1.msra.mxu0 %v229
    %409 = vmatprep.subr.mxu0 %v234
    %410 = vmatpush1.msra.mxu0 %v233
    %411 = vmatprep.subr.mxu0 %v238
    %412 = vmatpush1.msra.mxu0 %v237
    %413 = vmatprep.subr.mxu0 %v242
    %414 = vmatpush1.msra.mxu0 %v241
    %415 = vmatprep.subr.mxu0 %v246
    %416 = vmatpush1.msra.mxu0 %v245
    %417 = vmatprep.subr.mxu0 %v250
    %418 = vmatpush1.msra.mxu0 %v249
    %419 = vmatprep.subr.mxu0 %v254
    %420 = vmatpush1.msra.mxu0 %v253
    %421 = vmatprep.subr.mxu0 %v258
    %422 = vmatpush1.msra.mxu0 %v257
    %423 = vmatprep.subr.mxu0 %v262
    %424 = vmatpush1.msra.mxu0 %v261
    %425 = vmatprep.subr.mxu0 %v266
    %426 = vmatpush1.msra.mxu0 %v265
    %427 = vmatprep.subr.mxu0 %v270
    %428 = vmatpush1.msra.mxu0 %v269
    %429 = vmatprep.subr.mxu0 %v274
    %430 = vmatpush1.msra.mxu0 %v273
    %431 = vmatprep.subr.mxu0 0.0
    %432 = vmatpush1.msra.mxu0 0.0
    %433 = vmatprep.subr.mxu0 0.0
    %434 = vmatpush1.msra.mxu0 0.0
    %435 = vmatprep.subr.mxu0 0.0
    %436 = vmatpush1.msra.mxu0 0.0
    %437 = vmatprep.subr.mxu0 0.0
    %438 = vmatpush1.msra.mxu0 0.0
    %439 = vmatprep.subr.mxu0 0.0
    %440 = vmatpush1.msra.mxu0 0.0
    %441 = vmatprep.subr.mxu0 0.0
    %442 = vmatpush1.msra.mxu0 0.0
    %443 = vmatprep.subr.mxu0 0.0
    %444 = vmatpush1.msra.mxu0 0.0
    %445 = vmatprep.subr.mxu0 0.0
    %446 = vmatpush1.msra.mxu0 0.0
    %447 = vmatprep.subr.mxu0 0.0
    %448 = vmatpush1.msra.mxu0 0.0
    %449 = vmatprep.subr.mxu0 0.0
    %450 = vmatpush1.msra.mxu0 0.0
    %451 = vmatprep.subr.mxu0 0.0
    %452 = vmatpush1.msra.mxu0 0.0
    %453 = vmatprep.subr.mxu0 0.0
    %454 = vmatpush1.msra.mxu0 0.0
    %455 = vmatprep.subr.mxu0 0.0
    %456 = vmatpush1.msra.mxu0 0.0
    %457 = vmatprep.subr.mxu0 0.0
    %458 = vmatpush1.msra.mxu0 0.0
    %459 = vmatprep.subr.mxu0 0.0
    %460 = vmatpush1.msra.mxu0 0.0
    %461 = vmatprep.subr.mxu0 0.0
    %462 = vmatpush1.msra.mxu0 0.0
    %463 = vmatprep.mubr.f32.mxu0 0.0
    %464 = vmatmul.mubr.f32.gmra.mrb[0].mxu0 %v183
    %v465 = vpop.f32.mrb[0].mxu0
    %v466 = vadd.f32 %v289, %v465
    %v467 = vpop.f32.mrb[0].mxu0
    %v468 = vadd.f32 %v293, %v467
    %469 = vmatprep.mubr.f32.mxu0 0.0
    %470 = vmatmul.mubr.f32.gmra.mrb[0].mxu0 %v188
    %v471 = vpop.f32.mrb[0].mxu0
    %v472 = vadd.f32 %v289, %v471
    %v473 = vpop.f32.mrb[0].mxu0
    %v474 = vadd.f32 %v293, %v473
    %475 = vmatprep.mubr.f32.mxu0 0.0
    %476 = vmatmul.mubr.f32.gmra.mrb[0].mxu0 %v193
    %v477 = vpop.f32.mrb[0].mxu0
    %v478 = vadd.f32 %v289, %v477
    %v479 = vpop.f32.mrb[0].mxu0
    %v480 = vadd.f32 %v293, %v479
    %481 = vmatprep.mubr.f32.mxu0 0.0
    %482 = vmatmul.mubr.f32.gmra.mrb[0].mxu0 %v198
    %v483 = vpop.f32.mrb[0].mxu0
    %v484 = vadd.f32 %v289, %v483
    %v485 = vpop.f32.mrb[0].mxu0
    %v486 = vadd.f32 %v293, %v485
    %487 = vmatprep.mubr.f32.mxu0 0.0
    %488 = vmatmul.mubr.f32.gmra.mrb[0].mxu0 %v203
    %v489 = vpop.f32.mrb[0].mxu0
    %v490 = vadd.f32 %v289, %v489
    %v491 = vpop.f32.mrb[0].mxu0
    %v492 = vadd.f32 %v293, %v491
    %493 = vmatprep.mubr.f32.mxu0 0.0
    %494 = vmatmul.mubr.f32.gmra.mrb[0].mxu0 %v208
    %v495 = vpop.f32.mrb[0].mxu0
    %v496 = vadd.f32 %v289, %v495
    %v497 = vpop.f32.mrb[0].mxu0
    %v498 = vadd.f32 %v293, %v497
    %499 = vdwg.mxu0
    %500 = vst [vmem:[#allocation2] sm:$0xff] %v365
    %501 = vst [vmem:[#allocation2 + $0x8] sm:$0xff] %v367
    %502 = vst [vmem:[#allocation2 + $0x10] sm:$0xff] %v466
    %503 = vst [vmem:[#allocation2 + $0x18] sm:$0xff] %v468
    %504 = vst [vmem:[#allocation2 + $0x20] sm:$0xff] %v371
    %505 = vst [vmem:[#allocation2 + $0x28] sm:$0xff] %v373
    %506 = vst [vmem:[#allocation2 + $0x30] sm:$0xff] %v472
    %507 = vst [vmem:[#allocation2 + $0x38] sm:$0xff] %v474
    %508 = vst [vmem:[#allocation2 + $0x40] sm:$0xff] %v377
    %509 = vst [vmem:[#allocation2 + $0x48] sm:$0xff] %v379
    %510 = vst [vmem:[#allocation2 + $0x50] sm:$0xff] %v478
    %511 = vst [vmem:[#allocation2 + $0x58] sm:$0xff] %v480
    %512 = vst [vmem:[#allocation2 + $0x60] sm:$0xff] %v383
    %513 = vst [vmem:[#allocation2 + $0x68] sm:$0xff] %v385
    %514 = vst [vmem:[#allocation2 + $0x70] sm:$0xff] %v484
    %515 = vst [vmem:[#allocation2 + $0x78] sm:$0xff] %v486
    %516 = vst [vmem:[#allocation2 + $0x80] sm:$0xff] %v389
    %517 = vst [vmem:[#allocation2 + $0x88] sm:$0xff] %v391
    %518 = vst [vmem:[#allocation2 + $0x90] sm:$0xff] %v490
    %519 = vst [vmem:[#allocation2 + $0x98] sm:$0xff] %v492
    %520 = vst [vmem:[#allocation2 + $0xa0] sm:$0xff] %v395
    %521 = vst [vmem:[#allocation2 + $0xa8] sm:$0xff] %v397
    %522 = vst [vmem:[#allocation2 + $0xb0] sm:$0xff] %v496
    %523 = vst [vmem:[#allocation2 + $0xb8] sm:$0xff] %v498
    %v524 = vld [vmem:[#allocation9 + $0x240] sm:$0xff]
    %v525 = vld [vmem:[#allocation9 + $0x248] sm:$0xff]
    %v526 = vld [vmem:[#allocation9 + $0x250] sm:$0xff]
    %v527 = vld [vmem:[#allocation9 + $0x258] sm:$0xff]
    %v528 = vld [vmem:[#allocation9 + $0x260] sm:$0xff]
    %v529 = vld [vmem:[#allocation9 + $0x268] sm:$0xff]
    %v530 = vld [vmem:[#allocation9 + $0x270] sm:$0xff]
    %v531 = vld [vmem:[#allocation9 + $0x278] sm:$0xff]
    %v532 = vld [vmem:[#allocation9 + $0x280] sm:$0xff]
    %v533 = vld [vmem:[#allocation9 + $0x288] sm:$0xff]
    %v534 = vld [vmem:[#allocation9 + $0x290] sm:$0xff]
    %v535 = vld [vmem:[#allocation9 + $0x298] sm:$0xff]
    %v536 = vld [vmem:[#allocation9 + $0x2a0] sm:$0xff]
    %v537 = vld [vmem:[#allocation9 + $0x2a8] sm:$0xff]
    %v538 = vld [vmem:[#allocation9 + $0x2b0] sm:$0xff]
    %v539 = vld [vmem:[#allocation9 + $0x2b8] sm:$0xff]
    %v540 = vld [vmem:[#allocation9 + $0x2c0] sm:$0xff]
    %v541 = vld [vmem:[#allocation9 + $0x2c8] sm:$0xff]
    %v542 = vld [vmem:[#allocation9 + $0x2d0] sm:$0xff]
    %v543 = vld [vmem:[#allocation9 + $0x2d8] sm:$0xff]
    %v544 = vld [vmem:[#allocation9 + $0x2e0] sm:$0xff]
    %v545 = vld [vmem:[#allocation9 + $0x2e8] sm:$0xff]
    %v546 = vld [vmem:[#allocation9 + $0x2f0] sm:$0xff]
    %v547 = vld [vmem:[#allocation9 + $0x2f8] sm:$0xff]
    %v548 = vld [vmem:[#allocation9 + $0x300] sm:$0xff]
    %v549 = vld [vmem:[#allocation9 + $0x308] sm:$0xff]
    %v550 = vld [vmem:[#allocation9 + $0x310] sm:$0xff]
    %v551 = vld [vmem:[#allocation9 + $0x318] sm:$0xff]
    %v552 = vld [vmem:[#allocation9 + $0x320] sm:$0xff]
    %v553 = vld [vmem:[#allocation9 + $0x328] sm:$0xff]
    %v554 = vld [vmem:[#allocation9 + $0x330] sm:$0xff]
    %v555 = vld [vmem:[#allocation9 + $0x338] sm:$0xff]
    %v556 = vld [vmem:[#allocation9 + $0x340] sm:$0xff]
    %v557 = vld [vmem:[#allocation9 + $0x348] sm:$0xff]
    %v558 = vld [vmem:[#allocation9 + $0x350] sm:$0xff]
    %v559 = vld [vmem:[#allocation9 + $0x358] sm:$0xff]
    %v560 = vld [vmem:[#allocation9 + $0x360] sm:$0xff]
    %v561 = vld [vmem:[#allocation9 + $0x368] sm:$0xff]
    %v562 = vld [vmem:[#allocation9 + $0x370] sm:$0xff]
    %v563 = vld [vmem:[#allocation9 + $0x378] sm:$0xff]
    %v564 = vld [vmem:[#allocation9 + $0x380] sm:$0xff]
    %v565 = vld [vmem:[#allocation9 + $0x388] sm:$0xff]
    %v566 = vld [vmem:[#allocation9 + $0x390] sm:$0xff]
    %v567 = vld [vmem:[#allocation9 + $0x398] sm:$0xff]
    %v568 = vld [vmem:[#allocation9 + $0x3a0] sm:$0xff]
    %v569 = vld [vmem:[#allocation9 + $0x3a8] sm:$0xff]
    %v570 = vld [vmem:[#allocation9 + $0x3b0] sm:$0xff]
    %v571 = vld [vmem:[#allocation9 + $0x3b8] sm:$0xff]
    %v572 = vld [vmem:[#allocation9 + $0x3c0] sm:$0xff]
    %v573 = vld [vmem:[#allocation9 + $0x3c8] sm:$0xff]
    %v574 = vld [vmem:[#allocation9 + $0x3d0] sm:$0xff]
    %v575 = vld [vmem:[#allocation9 + $0x3d8] sm:$0xff]
    %v576 = vld [vmem:[#allocation9 + $0x3e0] sm:$0xff]
    %v577 = vld [vmem:[#allocation9 + $0x3e8] sm:$0xff]
    %v578 = vld [vmem:[#allocation9 + $0x3f0] sm:$0xff]
    %v579 = vld [vmem:[#allocation9 + $0x3f8] sm:$0xff]
    %v580 = vld [vmem:[#allocation9 + $0x400] sm:$0xff]
    %v581 = vld [vmem:[#allocation9 + $0x408] sm:$0xff]
    %v582 = vld [vmem:[#allocation9 + $0x410] sm:$0xff]
    %v583 = vld [vmem:[#allocation9 + $0x418] sm:$0xff]
    %v584 = vld [vmem:[#allocation9 + $0x420] sm:$0xff]
    %v585 = vld [vmem:[#allocation9 + $0x428] sm:$0xff]
    %v586 = vld [vmem:[#allocation9 + $0x430] sm:$0xff]
    %v587 = vld [vmem:[#allocation9 + $0x438] sm:$0xff]
    %v588 = vld [vmem:[#allocation9 + $0x440] sm:$0xff]
    %v589 = vld [vmem:[#allocation9 + $0x448] sm:$0xff]
    %v590 = vld [vmem:[#allocation9 + $0x450] sm:$0xff]
    %v591 = vld [vmem:[#allocation9 + $0x458] sm:$0xff]
    %v592 = vld [vmem:[#allocation9 + $0x460] sm:$0xff]
    %v593 = vld [vmem:[#allocation9 + $0x468] sm:$0xff]
    %v594 = vld [vmem:[#allocation9 + $0x470] sm:$0xff]
    %v595 = vld [vmem:[#allocation9 + $0x478] sm:$0xff]
    %v596 = vld [vmem:[#allocation9 + $0x480] sm:$0xff]
    %v597 = vld [vmem:[#allocation9 + $0x488] sm:$0xff]
    %v598 = vld [vmem:[#allocation9 + $0x490] sm:$0xff]
    %v599 = vld [vmem:[#allocation9 + $0x498] sm:$0xff]
    %v600 = vld [vmem:[#allocation9 + $0x4a0] sm:$0xff]
    %v601 = vld [vmem:[#allocation9 + $0x4a8] sm:$0xff]
    %v602 = vld [vmem:[#allocation9 + $0x4b0] sm:$0xff]
    %v603 = vld [vmem:[#allocation9 + $0x4b8] sm:$0xff]
    %v604 = vld [vmem:[#allocation9 + $0x4c0] sm:$0xff]
    %v605 = vld [vmem:[#allocation9 + $0x4c8] sm:$0xff]
    %v606 = vld [vmem:[#allocation9 + $0x4d0] sm:$0xff]
    %v607 = vld [vmem:[#allocation9 + $0x4d8] sm:$0xff]
    %v608 = vld [vmem:[#allocation9 + $0x4e0] sm:$0xff]
    %v609 = vld [vmem:[#allocation9 + $0x4e8] sm:$0xff]
    %v610 = vld [vmem:[#allocation9 + $0x4f0] sm:$0xff]
    %v611 = vld [vmem:[#allocation9 + $0x4f8] sm:$0xff]
    %v612 = vld [vmem:[#allocation9 + $0x500] sm:$0xff]
    %v613 = vld [vmem:[#allocation9 + $0x508] sm:$0xff]
    %v614 = vld [vmem:[#allocation9 + $0x510] sm:$0xff]
    %v615 = vld [vmem:[#allocation9 + $0x518] sm:$0xff]
    %v616 = vld [vmem:[#allocation9 + $0x520] sm:$0xff]
    %v617 = vld [vmem:[#allocation9 + $0x528] sm:$0xff]
    %v618 = vld [vmem:[#allocation9 + $0x530] sm:$0xff]
    %v619 = vld [vmem:[#allocation9 + $0x538] sm:$0xff]
    %v620 = vld [vmem:[#allocation9 + $0x540] sm:$0xff]
    %v621 = vld [vmem:[#allocation9 + $0x548] sm:$0xff]
    %v622 = vld [vmem:[#allocation9 + $0x550] sm:$0xff]
    %v623 = vld [vmem:[#allocation9 + $0x558] sm:$0xff]
    %v624 = vld [vmem:[#allocation9 + $0x560] sm:$0xff]
    %v625 = vld [vmem:[#allocation9 + $0x568] sm:$0xff]
    %v626 = vld [vmem:[#allocation9 + $0x570] sm:$0xff]
    %v627 = vld [vmem:[#allocation9 + $0x578] sm:$0xff]
    %v628 = vld [vmem:[#allocation9 + $0x580] sm:$0xff]
    %v629 = vld [vmem:[#allocation9 + $0x588] sm:$0xff]
    %v630 = vld [vmem:[#allocation9 + $0x590] sm:$0xff]
    %v631 = vld [vmem:[#allocation9 + $0x598] sm:$0xff]
    %v632 = vld [vmem:[#allocation9 + $0x5a0] sm:$0xff]
    %v633 = vld [vmem:[#allocation9 + $0x5a8] sm:$0xff]
    %v634 = vld [vmem:[#allocation9 + $0x5b0] sm:$0xff]
    %v635 = vld [vmem:[#allocation9 + $0x5b8] sm:$0xff]
    %v636 = vld [vmem:[#allocation9 + $0x5c0] sm:$0xff]
    %v637 = vld [vmem:[#allocation9 + $0x5c8] sm:$0xff]
    %v638 = vld [vmem:[#allocation9 + $0x5d0] sm:$0xff]
    %v639 = vld [vmem:[#allocation9 + $0x5d8] sm:$0xff]
    %v640 = vld [vmem:[#allocation9 + $0x5e0] sm:$0xff]
    %v641 = vld [vmem:[#allocation9 + $0x5e8] sm:$0xff]
    %v642 = vld [vmem:[#allocation9 + $0x5f0] sm:$0xff]
    %v643 = vld [vmem:[#allocation9 + $0x5f8] sm:$0xff]
    %v644 = vld [vmem:[#allocation9 + $0x600] sm:$0xff]
    %v645 = vld [vmem:[#allocation9 + $0x608] sm:$0xff]
    %v646 = vld [vmem:[#allocation9 + $0x610] sm:$0xff]
    %v647 = vld [vmem:[#allocation9 + $0x618] sm:$0xff]
    %v648 = vld [vmem:[#allocation9 + $0x620] sm:$0xff]
    %v649 = vld [vmem:[#allocation9 + $0x628] sm:$0xff]
    %v650 = vld [vmem:[#allocation9 + $0x630] sm:$0xff]
    %v651 = vld [vmem:[#allocation9 + $0x638] sm:$0xff]
    %v652 = vld [vmem:[#allocation9 + $0x640] sm:$0xff]
    %v653 = vld [vmem:[#allocation9 + $0x648] sm:$0xff]
    %v654 = vld [vmem:[#allocation9 + $0x650] sm:$0xff]
    %v655 = vld [vmem:[#allocation9 + $0x658] sm:$0xff]
    %v656 = vld [vmem:[#allocation9 + $0x660] sm:$0xff]
    %v657 = vld [vmem:[#allocation9 + $0x668] sm:$0xff]
    %v658 = vld [vmem:[#allocation9 + $0x670] sm:$0xff]
    %v659 = vld [vmem:[#allocation9 + $0x678] sm:$0xff]
    %v660 = vld [vmem:[#allocation9 + $0x680] sm:$0xff]
    %v661 = vld [vmem:[#allocation9 + $0x688] sm:$0xff]
    %v662 = vld [vmem:[#allocation9 + $0x690] sm:$0xff]
    %v663 = vld [vmem:[#allocation9 + $0x698] sm:$0xff]
    %v664 = vld [vmem:[#allocation9 + $0x6a0] sm:$0xff]
    %v665 = vld [vmem:[#allocation9 + $0x6a8] sm:$0xff]
    %v666 = vld [vmem:[#allocation9 + $0x6b0] sm:$0xff]
    %v667 = vld [vmem:[#allocation9 + $0x6b8] sm:$0xff]
    %v668 = vld [vmem:[#allocation9 + $0x6c0] sm:$0xff]
    %v669 = vld [vmem:[#allocation9 + $0x6c8] sm:$0xff]
    %v670 = vld [vmem:[#allocation9 + $0x6d0] sm:$0xff]
    %v671 = vld [vmem:[#allocation9 + $0x6d8] sm:$0xff]
    %v672 = vld [vmem:[#allocation9 + $0x6e0] sm:$0xff]
    %v673 = vld [vmem:[#allocation9 + $0x6e8] sm:$0xff]
    %v674 = vld [vmem:[#allocation9 + $0x6f0] sm:$0xff]
    %v675 = vld [vmem:[#allocation9 + $0x6f8] sm:$0xff]
    %v676 = vld [vmem:[#allocation9 + $0x700] sm:$0xff]
    %v677 = vld [vmem:[#allocation9 + $0x708] sm:$0xff]
    %v678 = vld [vmem:[#allocation9 + $0x710] sm:$0xff]
    %v679 = vld [vmem:[#allocation9 + $0x718] sm:$0xff]
    %v680 = vld [vmem:[#allocation9 + $0x720] sm:$0xff]
    %v681 = vld [vmem:[#allocation9 + $0x728] sm:$0xff]
    %v682 = vld [vmem:[#allocation9 + $0x730] sm:$0xff]
    %v683 = vld [vmem:[#allocation9 + $0x738] sm:$0xff]
    %v684 = vld [vmem:[#allocation9 + $0x740] sm:$0xff]
    %v685 = vld [vmem:[#allocation9 + $0x748] sm:$0xff]
    %v686 = vld [vmem:[#allocation9 + $0x750] sm:$0xff]
    %v687 = vld [vmem:[#allocation9 + $0x758] sm:$0xff]
    %v688 = vld [vmem:[#allocation9 + $0x760] sm:$0xff]
    %v689 = vld [vmem:[#allocation9 + $0x768] sm:$0xff]
    %v690 = vld [vmem:[#allocation9 + $0x770] sm:$0xff]
    %v691 = vld [vmem:[#allocation9 + $0x778] sm:$0xff]
    %v692 = vld [vmem:[#allocation9 + $0x780] sm:$0xff]
    %v693 = vld [vmem:[#allocation9 + $0x788] sm:$0xff]
    %v694 = vld [vmem:[#allocation9 + $0x790] sm:$0xff]
    %v695 = vld [vmem:[#allocation9 + $0x798] sm:$0xff]
    %v696 = vld [vmem:[#allocation9 + $0x7a0] sm:$0xff]
    %v697 = vld [vmem:[#allocation9 + $0x7a8] sm:$0xff]
    %v698 = vld [vmem:[#allocation9 + $0x7b0] sm:$0xff]
    %v699 = vld [vmem:[#allocation9 + $0x7b8] sm:$0xff]
    %v700 = vld [vmem:[#allocation9 + $0x7c0] sm:$0xff]
    %v701 = vld [vmem:[#allocation9 + $0x7c8] sm:$0xff]
    %v702 = vld [vmem:[#allocation9 + $0x7d0] sm:$0xff]
    %v703 = vld [vmem:[#allocation9 + $0x7d8] sm:$0xff]
    %v704 = vld [vmem:[#allocation9 + $0x7e0] sm:$0xff]
    %v705 = vld [vmem:[#allocation9 + $0x7e8] sm:$0xff]
    %v706 = vld [vmem:[#allocation9 + $0x7f0] sm:$0xff]
    %v707 = vld [vmem:[#allocation9 + $0x7f8] sm:$0xff]
    %v708 = vld [vmem:[#allocation9 + $0x800] sm:$0xff]
    %v709 = vld [vmem:[#allocation9 + $0x808] sm:$0xff]
    %v710 = vld [vmem:[#allocation9 + $0x810] sm:$0xff]
    %v711 = vld [vmem:[#allocation9 + $0x818] sm:$0xff]
    %v712 = vld [vmem:[#allocation9 + $0x820] sm:$0xff]
    %v713 = vld [vmem:[#allocation9 + $0x828] sm:$0xff]
    %v714 = vld [vmem:[#allocation9 + $0x830] sm:$0xff]
    %v715 = vld [vmem:[#allocation9 + $0x838] sm:$0xff]
    %s716 = scalar_lea.vmem [#allocation9], 2688
    %v717 = vld [vmem:[%s716] ss:$8 sm:$0xf]
    %v718 = vld [vmem:[#allocation9 + $0x840] sm:$0xff]
    %v719 = vld [vmem:[#allocation9 + $0x860] sm:$0xff]
    %v720 = vld [vmem:[#allocation9 + $0x880] sm:$0xff]
    %v721 = vld [vmem:[#allocation9 + $0x8a0] sm:$0xff]
    %v722 = vld [vmem:[#allocation9 + $0x8c0] sm:$0xff]
    %v723 = vld [vmem:[#allocation9 + $0x8e0] sm:$0xff]
    %v724 = vld [vmem:[#allocation9 + $0x900] sm:$0xff]
    %v725 = vld [vmem:[#allocation9 + $0x920] sm:$0xff]
    %v726 = vld [vmem:[#allocation9 + $0x940] sm:$0xff]
    %v727 = vld [vmem:[#allocation9 + $0x960] sm:$0xff]
    %v728 = vld [vmem:[#allocation9 + $0x980] sm:$0xff]
    %v729 = vld [vmem:[#allocation9 + $0x9a0] sm:$0xff]
    %v730 = vld [vmem:[#allocation9 + $0x9c0] sm:$0xff]
    %v731 = vld [vmem:[#allocation9 + $0x9e0] sm:$0xff]
    %v732 = vld [vmem:[#allocation9 + $0xa00] sm:$0xff]
    %v733 = vld [vmem:[#allocation9 + $0xa20] sm:$0xff]
    %v734 = vld [vmem:[#allocation9 + $0xaa0] ss:$0 sm:$0xff]
    %v735 = vld [vmem:[#allocation2] sm:$0xff]
    %v736 = vld [vmem:[#allocation2 + $0x8] sm:$0xff]
    %v737 = vld [vmem:[#allocation2 + $0x10] sm:$0xff]
    %v738 = vld [vmem:[#allocation2 + $0x18] sm:$0xff]
    %v739 = vld [vmem:[#allocation12] sm:$0xff]
    %740 = vmatprep.subr.mxu0 %v525
    %741 = vmatpush1.msra.mxu0 %v524
    %742 = vmatprep.subr.mxu0 %v529
    %743 = vmatpush1.msra.mxu0 %v528
    %744 = vmatprep.subr.mxu0 %v533
    %745 = vmatpush1.msra.mxu0 %v532
    %746 = vmatprep.subr.mxu0 %v537
    %747 = vmatpush1.msra.mxu0 %v536
    %748 = vmatprep.subr.mxu0 %v541
    %749 = vmatpush1.msra.mxu0 %v540
    %750 = vmatprep.subr.mxu0 %v545
    %751 = vmatpush1.msra.mxu0 %v544
    %752 = vmatprep.subr.mxu0 %v549
    %753 = vmatpush1.msra.mxu0 %v548
    %754 = vmatprep.subr.mxu0 %v553
    %755 = vmatpush1.msra.mxu0 %v552
    %756 = vmatprep.subr.mxu0 %v557
    %757 = vmatpush1.msra.mxu0 %v556
    %758 = vmatprep.subr.mxu0 %v561
    %759 = vmatpush1.msra.mxu0 %v560
    %760 = vmatprep.subr.mxu0 %v565
    %761 = vmatpush1.msra.mxu0 %v564
    %762 = vmatprep.subr.mxu0 %v569
    %763 = vmatpush1.msra.mxu0 %v568
    %764 = vmatprep.subr.mxu0 %v573
    %765 = vmatpush1.msra.mxu0 %v572
    %766 = vmatprep.subr.mxu0 %v577
    %767 = vmatpush1.msra.mxu0 %v576
    %768 = vmatprep.subr.mxu0 %v581
    %769 = vmatpush1.msra.mxu0 %v580
    %770 = vmatprep.subr.mxu0 %v585
    %771 = vmatpush1.msra.mxu0 %v584
    %772 = vmatprep.subr.mxu0 0.0
    %773 = vmatpush1.msra.mxu0 0.0
    %774 = vmatprep.subr.mxu0 0.0
    %775 = vmatpush1.msra.mxu0 0.0
    %776 = vmatprep.subr.mxu0 0.0
    %777 = vmatpush1.msra.mxu0 0.0
    %778 = vmatprep.subr.mxu0 0.0
    %779 = vmatpush1.msra.mxu0 0.0
    %780 = vmatprep.subr.mxu0 0.0
    %781 = vmatpush1.msra.mxu0 0.0
    %782 = vmatprep.subr.mxu0 0.0
    %783 = vmatpush1.msra.mxu0 0.0
    %784 = vmatprep.subr.mxu0 0.0
    %785 = vmatpush1.msra.mxu0 0.0
    %786 = vmatprep.subr.mxu0 0.0
    %787 = vmatpush1.msra.mxu0 0.0
    %788 = vmatprep.subr.mxu0 0.0
    %789 = vmatpush1.msra.mxu0 0.0
    %790 = vmatprep.subr.mxu0 0.0
    %791 = vmatpush1.msra.mxu0 0.0
    %792 = vmatprep.subr.mxu0 0.0
    %793 = vmatpush1.msra.mxu0 0.0
    %794 = vmatprep.subr.mxu0 0.0
    %795 = vmatpush1.msra.mxu0 0.0
    %796 = vmatprep.subr.mxu0 0.0
    %797 = vmatpush1.msra.mxu0 0.0
    %798 = vmatprep.subr.mxu0 0.0
    %799 = vmatpush1.msra.mxu0 0.0
    %800 = vmatprep.subr.mxu0 0.0
    %801 = vmatpush1.msra.mxu0 0.0
    %802 = vmatprep.subr.mxu0 0.0
    %803 = vmatpush1.msra.mxu0 0.0
    %804 = vmatprep.mubr.f32.mxu0 0.0
    %805 = vmatmul.mubr.f32.gmra.mrb[0].mxu0 %v739
    %v806 = vpop.f32.mrb[0].mxu0
    %v807 = vadd.f32 0.0, %v806
    %v808 = vpop.f32.mrb[0].mxu0
    %v809 = vadd.f32 0.0, %v808
    %810 = vdwg.mxu0
    %811 = vmatprep.subr.mxu0 %v527
    %812 = vmatpush1.msra.mxu0 %v526
    %813 = vmatprep.subr.mxu0 %v531
    %814 = vmatpush1.msra.mxu0 %v530
    %815 = vmatprep.subr.mxu0 %v535
    %816 = vmatpush1.msra.mxu0 %v534
    %817 = vmatprep.subr.mxu0 %v539
    %818 = vmatpush1.msra.mxu0 %v538
    %819 = vmatprep.subr.mxu0 %v543
    %820 = vmatpush1.msra.mxu0 %v542
    %821 = vmatprep.subr.mxu0 %v547
    %822 = vmatpush1.msra.mxu0 %v546
    %823 = vmatprep.subr.mxu0 %v551
    %824 = vmatpush1.msra.mxu0 %v550
    %825 = vmatprep.subr.mxu0 %v555
    %826 = vmatpush1.msra.mxu0 %v554
    %827 = vmatprep.subr.mxu0 %v559
    %828 = vmatpush1.msra.mxu0 %v558
    %829 = vmatprep.subr.mxu0 %v563
    %830 = vmatpush1.msra.mxu0 %v562
    %831 = vmatprep.subr.mxu0 %v567
    %832 = vmatpush1.msra.mxu0 %v566
    %833 = vmatprep.subr.mxu0 %v571
    %834 = vmatpush1.msra.mxu0 %v570
    %835 = vmatprep.subr.mxu0 %v575
    %836 = vmatpush1.msra.mxu0 %v574
    %837 = vmatprep.subr.mxu0 %v579
    %838 = vmatpush1.msra.mxu0 %v578
    %839 = vmatprep.subr.mxu0 %v583
    %840 = vmatpush1.msra.mxu0 %v582
    %841 = vmatprep.subr.mxu0 %v587
    %842 = vmatpush1.msra.mxu0 %v586
    %843 = vmatprep.subr.mxu0 0.0
    %844 = vmatpush1.msra.mxu0 0.0
    %845 = vmatprep.subr.mxu0 0.0
    %846 = vmatpush1.msra.mxu0 0.0
    %847 = vmatprep.subr.mxu0 0.0
    %848 = vmatpush1.msra.mxu0 0.0
    %849 = vmatprep.subr.mxu0 0.0
    %850 = vmatpush1.msra.mxu0 0.0
    %851 = vmatprep.subr.mxu0 0.0
    %852 = vmatpush1.msra.mxu0 0.0
    %853 = vmatprep.subr.mxu0 0.0
    %854 = vmatpush1.msra.mxu0 0.0
    %855 = vmatprep.subr.mxu0 0.0
    %856 = vmatpush1.msra.mxu0 0.0
    %857 = vmatprep.subr.mxu0 0.0
    %858 = vmatpush1.msra.mxu0 0.0
    %859 = vmatprep.subr.mxu0 0.0
    %860 = vmatpush1.msra.mxu0 0.0
    %861 = vmatprep.subr.mxu0 0.0
    %862 = vmatpush1.msra.mxu0 0.0
    %863 = vmatprep.subr.mxu0 0.0
    %864 = vmatpush1.msra.mxu0 0.0
    %865 = vmatprep.subr.mxu0 0.0
    %866 = vmatpush1.msra.mxu0 0.0
    %867 = vmatprep.subr.mxu0 0.0
    %868 = vmatpush1.msra.mxu0 0.0
    %869 = vmatprep.subr.mxu0 0.0
    %870 = vmatpush1.msra.mxu0 0.0
    %871 = vmatprep.subr.mxu0 0.0
    %872 = vmatpush1.msra.mxu0 0.0
    %873 = vmatprep.subr.mxu0 0.0
    %874 = vmatpush1.msra.mxu0 0.0
    %875 = vmatprep.mubr.f32.mxu0 0.0
    %876 = vmatmul.mubr.f32.gmra.mrb[0].mxu0 %v739
    %v877 = vpop.f32.mrb[0].mxu0
    %v878 = vadd.f32 0.0, %v877
    %v879 = vpop.f32.mrb[0].mxu0
    %v880 = vadd.f32 0.0, %v879
    %881 = vdwg.mxu0
    %v882 = vadd.f32 %v735, %v807
    %v883 = vadd.f32 %v736, %v809
    %v884 = vadd.f32 %v737, %v878
    %v885 = vadd.f32 %v738, %v880
    %v886 = vld [vmem:[#allocation14] sm:$0xff]
    %v887 = vxor.u32 %v882, 2147483648
    %v888 = vmul.f32 %v887, 1.442695
    %v889 = vpow.pop %v888
    %v890 = vadd.f32 %v889, 1.0
    %v891 = vrcp.pop %v890
    %v892 = vmul.f32 1.0, %v891
    %v893 = vxor.u32 %v883, 2147483648
    %v894 = vmul.f32 %v893, 1.442695
    %v895 = vpow.pop %v894
    %v896 = vadd.f32 %v895, 1.0
    %v897 = vrcp.pop %v896
    %v898 = vmul.f32 1.0, %v897
    %v899 = vtanh.pop %v884
    %v900 = vxor.u32 %v885, 2147483648
    %v901 = vmul.f32 %v900, 1.442695
    %v902 = vpow.pop %v901
    %v903 = vadd.f32 %v902, 1.0
    %v904 = vrcp.pop %v903
    %v905 = vmul.f32 1.0, %v904
    %v906 = vmul.f32 %v898, %v886
    %v907 = vmul.f32 %v892, %v899
    %v908 = vadd.f32 %v906, %v907
    %v909 = vtanh.pop %v908
    %v910 = vmul.f32 %v905, %v909
    %911 = vst [vmem:[#allocation12] sm:$0xff] %v910
    %912 = vst [vmem:[#allocation14] sm:$0xff] %v908
    %s913 = scalar_lea.vmem [#allocation12], 8
    %v914 = vld [vmem:[%s913] sm:$0xff]
    %915 = vmatprep.subr.mxu0 %v653
    %916 = vmatpush1.msra.mxu0 %v652
    %917 = vmatprep.subr.mxu0 %v657
    %918 = vmatpush1.msra.mxu0 %v656
    %919 = vmatprep.subr.mxu0 %v661
    %920 = vmatpush1.msra.mxu0 %v660
    %921 = vmatprep.subr.mxu0 %v665
    %922 = vmatpush1.msra.mxu0 %v664
    %923 = vmatprep.subr.mxu0 %v669
    %924 = vmatpush1.msra.mxu0 %v668
    %925 = vmatprep.subr.mxu0 %v673
    %926 = vmatpush1.msra.mxu0 %v672
    %927 = vmatprep.subr.mxu0 %v677
    %928 = vmatpush1.msra.mxu0 %v676
    %929 = vmatprep.subr.mxu0 %v681
    %930 = vmatpush1.msra.mxu0 %v680
    %931 = vmatprep.subr.mxu0 %v685
    %932 = vmatpush1.msra.mxu0 %v684
    %933 = vmatprep.subr.mxu0 %v689
    %934 = vmatpush1.msra.mxu0 %v688
    %935 = vmatprep.subr.mxu0 %v693
    %936 = vmatpush1.msra.mxu0 %v692
    %937 = vmatprep.subr.mxu0 %v697
    %938 = vmatpush1.msra.mxu0 %v696
    %939 = vmatprep.subr.mxu0 %v701
    %940 = vmatpush1.msra.mxu0 %v700
    %941 = vmatprep.subr.mxu0 %v705
    %942 = vmatpush1.msra.mxu0 %v704
    %943 = vmatprep.subr.mxu0 %v709
    %944 = vmatpush1.msra.mxu0 %v708
    %945 = vmatprep.subr.mxu0 %v713
    %946 = vmatpush1.msra.mxu0 %v712
    %947 = vmatprep.subr.mxu0 0.0
    %948 = vmatpush1.msra.mxu0 0.0
    %949 = vmatprep.subr.mxu0 0.0
    %950 = vmatpush1.msra.mxu0 0.0
    %951 = vmatprep.subr.mxu0 0.0
    %952 = vmatpush1.msra.mxu0 0.0
    %953 = vmatprep.subr.mxu0 0.0
    %954 = vmatpush1.msra.mxu0 0.0
    %955 = vmatprep.subr.mxu0 0.0
    %956 = vmatpush1.msra.mxu0 0.0
    %957 = vmatprep.subr.mxu0 0.0
    %958 = vmatpush1.msra.mxu0 0.0
    %959 = vmatprep.subr.mxu0 0.0
    %960 = vmatpush1.msra.mxu0 0.0
    %961 = vmatprep.subr.mxu0 0.0
    %962 = vmatpush1.msra.mxu0 0.0
    %963 = vmatprep.subr.mxu0 0.0
    %964 = vmatpush1.msra.mxu0 0.0
    %965 = vmatprep.subr.mxu0 0.0
    %966 = vmatpush1.msra.mxu0 0.0
    %967 = vmatprep.subr.mxu0 0.0
    %968 = vmatpush1.msra.mxu0 0.0
    %969 = vmatprep.subr.mxu0 0.0
    %970 = vmatpush1.msra.mxu0 0.0
    %971 = vmatprep.subr.mxu0 0.0
    %972 = vmatpush1.msra.mxu0 0.0
    %973 = vmatprep.subr.mxu0 0.0
    %974 = vmatpush1.msra.mxu0 0.0
    %975 = vmatprep.subr.mxu0 0.0
    %976 = vmatpush1.msra.mxu0 0.0
    %977 = vmatprep.subr.mxu0 0.0
    %978 = vmatpush1.msra.mxu0 0.0
    %979 = vmatprep.mubr.f32.mxu0 0.0
    %980 = vmatmul.mubr.f32.gmra.mrb[0].mxu0 %v914
    %v981 = vpop.f32.mrb[0].mxu0
    %v982 = vadd.f32 0.0, %v981
    %v983 = vpop.f32.mrb[0].mxu0
    %v984 = vadd.f32 0.0, %v983
    %985 = vdwg.mxu0
    %986 = vmatprep.subr.mxu0 %v655
    %987 = vmatpush1.msra.mxu0 %v654
    %988 = vmatprep.subr.mxu0 %v659
    %989 = vmatpush1.msra.mxu0 %v658
    %990 = vmatprep.subr.mxu0 %v663
    %991 = vmatpush1.msra.mxu0 %v662
    %992 = vmatprep.subr.mxu0 %v667
    %993 = vmatpush1.msra.mxu0 %v666
    %994 = vmatprep.subr.mxu0 %v671
    %995 = vmatpush1.msra.mxu0 %v670
    %996 = vmatprep.subr.mxu0 %v675
    %997 = vmatpush1.msra.mxu0 %v674
    %998 = vmatprep.subr.mxu0 %v679
    %999 = vmatpush1.msra.mxu0 %v678
    %1000 = vmatprep.subr.mxu0 %v683
    %1001 = vmatpush1.msra.mxu0 %v682
    %1002 = vmatprep.subr.mxu0 %v687
    %1003 = vmatpush1.msra.mxu0 %v686
    %1004 = vmatprep.subr.mxu0 %v691
    %1005 = vmatpush1.msra.mxu0 %v690
    %1006 = vmatprep.subr.mxu0 %v695
    %1007 = vmatpush1.msra.mxu0 %v694
    %1008 = vmatprep.subr.mxu0 %v699
    %1009 = vmatpush1.msra.mxu0 %v698
    %1010 = vmatprep.subr.mxu0 %v703
    %1011 = vmatpush1.msra.mxu0 %v702
    %1012 = vmatprep.subr.mxu0 %v707
    %1013 = vmatpush1.msra.mxu0 %v706
    %1014 = vmatprep.subr.mxu0 %v711
    %1015 = vmatpush1.msra.mxu0 %v710
    %1016 = vmatprep.subr.mxu0 %v715
    %1017 = vmatpush1.msra.mxu0 %v714
    %1018 = vmatprep.subr.mxu0 0.0
    %1019 = vmatpush1.msra.mxu0 0.0
    %1020 = vmatprep.subr.mxu0 0.0
    %1021 = vmatpush1.msra.mxu0 0.0
    %1022 = vmatprep.subr.mxu0 0.0
    %1023 = vmatpush1.msra.mxu0 0.0
    %1024 = vmatprep.subr.mxu0 0.0
    %1025 = vmatpush1.msra.mxu0 0.0
    %1026 = vmatprep.subr.mxu0 0.0
    %1027 = vmatpush1.msra.mxu0 0.0
    %1028 = vmatprep.subr.mxu0 0.0
    %1029 = vmatpush1.msra.mxu0 0.0
    %1030 = vmatprep.subr.mxu0 0.0
    %1031 = vmatpush1.msra.mxu0 0.0
    %1032 = vmatprep.subr.mxu0 0.0
    %1033 = vmatpush1.msra.mxu0 0.0
    %1034 = vmatprep.subr.mxu0 0.0
    %1035 = vmatpush1.msra.mxu0 0.0
    %1036 = vmatprep.subr.mxu0 0.0
    %1037 = vmatpush1.msra.mxu0 0.0
    %1038 = vmatprep.subr.mxu0 0.0
    %1039 = vmatpush1.msra.mxu0 0.0
    %1040 = vmatprep.subr.mxu0 0.0
    %1041 = vmatpush1.msra.mxu0 0.0
    %1042 = vmatprep.subr.mxu0 0.0
    %1043 = vmatpush1.msra.mxu0 0.0
    %1044 = vmatprep.subr.mxu0 0.0
    %1045 = vmatpush1.msra.mxu0 0.0
    %1046 = vmatprep.subr.mxu0 0.0
    %1047 = vmatpush1.msra.mxu0 0.0
    %1048 = vmatprep.subr.mxu0 0.0
    %1049 = vmatpush1.msra.mxu0 0.0
    %1050 = vmatprep.mubr.f32.mxu0 0.0
    %1051 = vmatmul.mubr.f32.gmra.mrb[0].mxu0 %v914
    %v1052 = vpop.f32.mrb[0].mxu0
    %v1053 = vadd.f32 0.0, %v1052
    %v1054 = vpop.f32.mrb[0].mxu0
    %v1055 = vadd.f32 0.0, %v1054
    %1056 = vdwg.mxu0
    %1057 = vmatprep.subr.mxu0 %v589
    %1058 = vmatpush1.msra.mxu0 %v588
    %1059 = vmatprep.subr.mxu0 %v593
    %1060 = vmatpush1.msra.mxu0 %v592
    %1061 = vmatprep.subr.mxu0 %v597
    %1062 = vmatpush1.msra.mxu0 %v596
    %1063 = vmatprep.subr.mxu0 %v601
    %1064 = vmatpush1.msra.mxu0 %v600
    %1065 = vmatprep.subr.mxu0 %v605
    %1066 = vmatpush1.msra.mxu0 %v604
    %1067 = vmatprep.subr.mxu0 %v609
    %1068 = vmatpush1.msra.mxu0 %v608
    %1069 = vmatprep.subr.mxu0 %v613
    %1070 = vmatpush1.msra.mxu0 %v612
    %1071 = vmatprep.subr.mxu0 %v617
    %1072 = vmatpush1.msra.mxu0 %v616
    %1073 = vmatprep.subr.mxu0 %v621
    %1074 = vmatpush1.msra.mxu0 %v620
    %1075 = vmatprep.subr.mxu0 %v625
    %1076 = vmatpush1.msra.mxu0 %v624
    %1077 = vmatprep.subr.mxu0 %v629
    %1078 = vmatpush1.msra.mxu0 %v628
    %1079 = vmatprep.subr.mxu0 %v633
    %1080 = vmatpush1.msra.mxu0 %v632
    %1081 = vmatprep.subr.mxu0 %v637
    %1082 = vmatpush1.msra.mxu0 %v636
    %1083 = vmatprep.subr.mxu0 %v641
    %1084 = vmatpush1.msra.mxu0 %v640
    %1085 = vmatprep.subr.mxu0 %v645
    %1086 = vmatpush1.msra.mxu0 %v644
    %1087 = vmatprep.subr.mxu0 %v649
    %1088 = vmatpush1.msra.mxu0 %v648
    %1089 = vmatprep.subr.mxu0 0.0
    %1090 = vmatpush1.msra.mxu0 0.0
    %1091 = vmatprep.subr.mxu0 0.0
    %1092 = vmatpush1.msra.mxu0 0.0
    %1093 = vmatprep.subr.mxu0 0.0
    %1094 = vmatpush1.msra.mxu0 0.0
    %1095 = vmatprep.subr.mxu0 0.0
    %1096 = vmatpush1.msra.mxu0 0.0
    %1097 = vmatprep.subr.mxu0 0.0
    %1098 = vmatpush1.msra.mxu0 0.0
    %1099 = vmatprep.subr.mxu0 0.0
    %1100 = vmatpush1.msra.mxu0 0.0
    %1101 = vmatprep.subr.mxu0 0.0
    %1102 = vmatpush1.msra.mxu0 0.0
    %1103 = vmatprep.subr.mxu0 0.0
    %1104 = vmatpush1.msra.mxu0 0.0
    %1105 = vmatprep.subr.mxu0 0.0
    %1106 = vmatpush1.msra.mxu0 0.0
    %1107 = vmatprep.subr.mxu0 0.0
    %1108 = vmatpush1.msra.mxu0 0.0
    %1109 = vmatprep.subr.mxu0 0.0
    %1110 = vmatpush1.msra.mxu0 0.0
    %1111 = vmatprep.subr.mxu0 0.0
    %1112 = vmatpush1.msra.mxu0 0.0
    %1113 = vmatprep.subr.mxu0 0.0
    %1114 = vmatpush1.msra.mxu0 0.0
    %1115 = vmatprep.subr.mxu0 0.0
    %1116 = vmatpush1.msra.mxu0 0.0
    %1117 = vmatprep.subr.mxu0 0.0
    %1118 = vmatpush1.msra.mxu0 0.0
    %1119 = vmatprep.subr.mxu0 0.0
    %1120 = vmatpush1.msra.mxu0 0.0
    %1121 = vmatprep.mubr.f32.mxu0 0.0
    %1122 = vmatmul.mubr.f32.gmra.mrb[0].mxu0 %v910
    %v1123 = vpop.f32.mrb[0].mxu0
    %v1124 = vadd.f32 %v982, %v1123
    %v1125 = vpop.f32.mrb[0].mxu0
    %v1126 = vadd.f32 %v984, %v1125
    %1127 = vdwg.mxu0
    %1128 = vmatprep.subr.mxu0 %v591
    %1129 = vmatpush1.msra.mxu0 %v590
    %1130 = vmatprep.subr.mxu0 %v595
    %1131 = vmatpush1.msra.mxu0 %v594
    %1132 = vmatprep.subr.mxu0 %v599
    %1133 = vmatpush1.msra.mxu0 %v598
    %1134 = vmatprep.subr.mxu0 %v603
    %1135 = vmatpush1.msra.mxu0 %v602
    %1136 = vmatprep.subr.mxu0 %v607
    %1137 = vmatpush1.msra.mxu0 %v606
    %1138 = vmatprep.subr.mxu0 %v611
    %1139 = vmatpush1.msra.mxu0 %v610
    %1140 = vmatprep.subr.mxu0 %v615
    %1141 = vmatpush1.msra.mxu0 %v614
    %1142 = vmatprep.subr.mxu0 %v619
    %1143 = vmatpush1.msra.mxu0 %v618
    %1144 = vmatprep.subr.mxu0 %v623
    %1145 = vmatpush1.msra.mxu0 %v622
    %1146 = vmatprep.subr.mxu0 %v627
    %1147 = vmatpush1.msra.mxu0 %v626
    %1148 = vmatprep.subr.mxu0 %v631
    %1149 = vmatpush1.msra.mxu0 %v630
    %1150 = vmatprep.subr.mxu0 %v635
    %1151 = vmatpush1.msra.mxu0 %v634
    %1152 = vmatprep.subr.mxu0 %v639
    %1153 = vmatpush1.msra.mxu0 %v638
    %1154 = vmatprep.subr.mxu0 %v643
    %1155 = vmatpush1.msra.mxu0 %v642
    %1156 = vmatprep.subr.mxu0 %v647
    %1157 = vmatpush1.msra.mxu0 %v646
    %1158 = vmatprep.subr.mxu0 %v651
    %1159 = vmatpush1.msra.mxu0 %v650
    %1160 = vmatprep.subr.mxu0 0.0
    %1161 = vmatpush1.msra.mxu0 0.0
    %1162 = vmatprep.subr.mxu0 0.0
    %1163 = vmatpush1.msra.mxu0 0.0
    %1164 = vmatprep.subr.mxu0 0.0
    %1165 = vmatpush1.msra.mxu0 0.0
    %1166 = vmatprep.subr.mxu0 0.0
    %1167 = vmatpush1.msra.mxu0 0.0
    %1168 = vmatprep.subr.mxu0 0.0
    %1169 = vmatpush1.msra.mxu0 0.0
    %1170 = vmatprep.subr.mxu0 0.0
    %1171 = vmatpush1.msra.mxu0 0.0
    %1172 = vmatprep.subr.mxu0 0.0
    %1173 = vmatpush1.msra.mxu0 0.0
    %1174 = vmatprep.subr.mxu0 0.0
    %1175 = vmatpush1.msra.mxu0 0.0
    %1176 = vmatprep.subr.mxu0 0.0
    %1177 = vmatpush1.msra.mxu0 0.0
    %1178 = vmatprep.subr.mxu0 0.0
    %1179 = vmatpush1.msra.mxu0 0.0
    %1180 = vmatprep.subr.mxu0 0.0
    %1181 = vmatpush1.msra.mxu0 0.0
    %1182 = vmatprep.subr.mxu0 0.0
    %1183 = vmatpush1.msra.mxu0 0.0
    %1184 = vmatprep.subr.mxu0 0.0
    %1185 = vmatpush1.msra.mxu0 0.0
    %1186 = vmatprep.subr.mxu0 0.0
    %1187 = vmatpush1.msra.mxu0 0.0
    %1188 = vmatprep.subr.mxu0 0.0
    %1189 = vmatpush1.msra.mxu0 0.0
    %1190 = vmatprep.subr.mxu0 0.0
    %1191 = vmatpush1.msra.mxu0 0.0
    %1192 = vmatprep.mubr.f32.mxu0 0.0
    %1193 = vmatmul.mubr.f32.gmra.mrb[0].mxu0 %v910
    %v1194 = vpop.f32.mrb[0].mxu0
    %v1195 = vadd.f32 %v1053, %v1194
    %v1196 = vpop.f32.mrb[0].mxu0
    %v1197 = vadd.f32 %v1055, %v1196
    %1198 = vdwg.mxu0
    %v1200 = vlaneseq
    %v1201 = vshrl.u32 %v1200, 7
    %v1202 = vsub.s32 0, %v1201
    %v1203 = vrot.slane %v717, %v1202
    %v1204 = vlaneseq
    %v1205 = vshrl.u32 %v1204, 7
    %v1206 = vsub.s32 1, %v1205
    %v1207 = vrot.slane %v717, %v1206
    %v1208 = vlaneseq
    %v1209 = vshrl.u32 %v1208, 7
    %v1210 = vsub.s32 2, %v1209
    %v1211 = vrot.slane %v717, %v1210
    %v1212 = vlaneseq
    %v1213 = vshrl.u32 %v1212, 7
    %v1214 = vsub.s32 3, %v1213
    %v1215 = vrot.slane %v717, %v1214
    %v1220 = vadd.f32 %v1124, %v1203
    %v1221 = vadd.f32 %v1126, %v1207
    %v1222 = vadd.f32 %v1195, %v1211
    %v1223 = vadd.f32 %v1197, %v1215
    %s1224 = scalar_lea.vmem [#allocation14], 8
    %v1225 = vld [vmem:[%s1224] sm:$0xff]
    %v1226 = vxor.u32 %v1220, 2147483648
    %v1227 = vmul.f32 %v1226, 1.442695
    %v1228 = vpow.pop %v1227
    %v1229 = vadd.f32 %v1228, 1.0
    %v1230 = vrcp.pop %v1229
    %v1231 = vmul.f32 1.0, %v1230
    %v1232 = vxor.u32 %v1221, 2147483648
    %v1233 = vmul.f32 %v1232, 1.442695
    %v1234 = vpow.pop %v1233
    %v1235 = vadd.f32 %v1234, 1.0
    %v1236 = vrcp.pop %v1235
    %v1237 = vmul.f32 1.0, %v1236
    %v1238 = vtanh.pop %v1222
    %v1239 = vxor.u32 %v1223, 2147483648
    %v1240 = vmul.f32 %v1239, 1.442695
    %v1241 = vpow.pop %v1240
    %v1242 = vadd.f32 %v1241, 1.0
    %v1243 = vrcp.pop %v1242
    %v1244 = vmul.f32 1.0, %v1243
    %v1245 = vmul.f32 %v1237, %v1225
    %v1246 = vmul.f32 %v1231, %v1238
    %v1247 = vadd.f32 %v1245, %v1246
    %v1248 = vtanh.pop %v1247
    %v1249 = vmul.f32 %v1244, %v1248
    %1250 = vst [vmem:[%s913] sm:$0xff] %v1249
    %1251 = vst [vmem:[%s1224] sm:$0xff] %v1247
    %1252 = vmatprep.subr.mxu0 0.0
    %1253 = vmatpush1.msra.mxu0 %v718
    %1254 = vmatprep.subr.mxu0 0.0
    %1255 = vmatpush1.msra.mxu0 %v719
    %1256 = vmatprep.subr.mxu0 0.0
    %1257 = vmatpush1.msra.mxu0 %v720
    %1258 = vmatprep.subr.mxu0 0.0
    %1259 = vmatpush1.msra.mxu0 %v721
    %1260 = vmatprep.subr.mxu0 0.0
    %1261 = vmatpush1.msra.mxu0 %v722
    %1262 = vmatprep.subr.mxu0 0.0
    %1263 = vmatpush1.msra.mxu0 %v723
    %1264 = vmatprep.subr.mxu0 0.0
    %1265 = vmatpush1.msra.mxu0 %v724
    %1266 = vmatprep.subr.mxu0 0.0
    %1267 = vmatpush1.msra.mxu0 %v725
    %1268 = vmatprep.subr.mxu0 0.0
    %1269 = vmatpush1.msra.mxu0 %v726
    %1270 = vmatprep.subr.mxu0 0.0
    %1271 = vmatpush1.msra.mxu0 %v727
    %1272 = vmatprep.subr.mxu0 0.0
    %1273 = vmatpush1.msra.mxu0 %v728
    %1274 = vmatprep.subr.mxu0 0.0
    %1275 = vmatpush1.msra.mxu0 %v729
    %1276 = vmatprep.subr.mxu0 0.0
    %1277 = vmatpush1.msra.mxu0 %v730
    %1278 = vmatprep.subr.mxu0 0.0
    %1279 = vmatpush1.msra.mxu0 %v731
    %1280 = vmatprep.subr.mxu0 0.0
    %1281 = vmatpush1.msra.mxu0 %v732
    %1282 = vmatprep.subr.mxu0 0.0
    %1283 = vmatpush1.msra.mxu0 %v733
    %1284 = vmatprep.subr.mxu0 0.0
    %1285 = vmatpush1.msra.mxu0 0.0
    %1286 = vmatprep.subr.mxu0 0.0
    %1287 = vmatpush1.msra.mxu0 0.0
    %1288 = vmatprep.subr.mxu0 0.0
    %1289 = vmatpush1.msra.mxu0 0.0
    %1290 = vmatprep.subr.mxu0 0.0
    %1291 = vmatpush1.msra.mxu0 0.0
    %1292 = vmatprep.subr.mxu0 0.0
    %1293 = vmatpush1.msra.mxu0 0.0
    %1294 = vmatprep.subr.mxu0 0.0
    %1295 = vmatpush1.msra.mxu0 0.0
    %1296 = vmatprep.subr.mxu0 0.0
    %1297 = vmatpush1.msra.mxu0 0.0
    %1298 = vmatprep.subr.mxu0 0.0
    %1299 = vmatpush1.msra.mxu0 0.0
    %1300 = vmatprep.subr.mxu0 0.0
    %1301 = vmatpush1.msra.mxu0 0.0
    %1302 = vmatprep.subr.mxu0 0.0
    %1303 = vmatpush1.msra.mxu0 0.0
    %1304 = vmatprep.subr.mxu0 0.0
    %1305 = vmatpush1.msra.mxu0 0.0
    %1306 = vmatprep.subr.mxu0 0.0
    %1307 = vmatpush1.msra.mxu0 0.0
    %1308 = vmatprep.subr.mxu0 0.0
    %1309 = vmatpush1.msra.mxu0 0.0
    %1310 = vmatprep.subr.mxu0 0.0
    %1311 = vmatpush1.msra.mxu0 0.0
    %1312 = vmatprep.subr.mxu0 0.0
    %1313 = vmatpush1.msra.mxu0 0.0
    %1314 = vmatprep.subr.mxu0 0.0
    %1315 = vmatpush1.msra.mxu0 0.0
    %1316 = vmatprep.mubr.f32.mxu0 0.0
    %1317 = vmatmul.mubr.f32.gmra.mrb[0].mxu0 %v1249
    %v1318 = vpop.f32.mrb[0].mxu0
    %v1319 = vadd.f32 %v734, %v1318
    %v1320 = vpop.f32.mrb[0].mxu0
    %1321 = vdwg.mxu0
    %v1322 = vld [vmem:[#allocation3] sm:$0xff]
    %v1323 = vmul.f32 %v1319, 0.5
    %v1324 = vmul.f32 %v1323, 1.442695
    %v1325 = vpow.pop %v1324
    %1327 = vrot.lane.b32.xlu0 %v1325, 112
    %v1328 = vpop.permute.xlu0 %1327
    %v1330 = vmul.f32 %v1322, %v1328
    %v1331 = vadd.f32 %v1330, %v1319
    %1332 = vst.msk [vmem:[#allocation11] sm:$0xff] %vm97, %v1331
    %1334 = vrot.lane.b32.xlu0 %v1319, 16
    %v1335 = vpop.permute.xlu0 %1334
    %vm1337 = vcmask 392320
    %1338 = vst.msk [vmem:[#allocation11] sm:$0xff] %vm1337, %v1335
    %v1339 = vld [vmem:[#allocation2 + $0x20] sm:$0xff]
    %v1340 = vld [vmem:[#allocation2 + $0x28] sm:$0xff]
    %v1341 = vld [vmem:[#allocation2 + $0x30] sm:$0xff]
    %v1342 = vld [vmem:[#allocation2 + $0x38] sm:$0xff]
    %v1343 = vld [vmem:[#allocation12] sm:$0xff]
    %1344 = vmatprep.subr.mxu0 %v525
    %1345 = vmatpush1.msra.mxu0 %v524
    %1346 = vmatprep.subr.mxu0 %v529
    %1347 = vmatpush1.msra.mxu0 %v528
    %1348 = vmatprep.subr.mxu0 %v533
    %1349 = vmatpush1.msra.mxu0 %v532
    %1350 = vmatprep.subr.mxu0 %v537
    %1351 = vmatpush1.msra.mxu0 %v536
    %1352 = vmatprep.subr.mxu0 %v541
    %1353 = vmatpush1.msra.mxu0 %v540
    %1354 = vmatprep.subr.mxu0 %v545
    %1355 = vmatpush1.msra.mxu0 %v544
    %1356 = vmatprep.subr.mxu0 %v549
    %1357 = vmatpush1.msra.mxu0 %v548
    %1358 = vmatprep.subr.mxu0 %v553
    %1359 = vmatpush1.msra.mxu0 %v552
    %1360 = vmatprep.subr.mxu0 %v557
    %1361 = vmatpush1.msra.mxu0 %v556
    %1362 = vmatprep.subr.mxu0 %v561
    %1363 = vmatpush1.msra.mxu0 %v560
    %1364 = vmatprep.subr.mxu0 %v565
    %1365 = vmatpush1.msra.mxu0 %v564
    %1366 = vmatprep.subr.mxu0 %v569
    %1367 = vmatpush1.msra.mxu0 %v568
    %1368 = vmatprep.subr.mxu0 %v573
    %1369 = vmatpush1.msra.mxu0 %v572
    %1370 = vmatprep.subr.mxu0 %v577
    %1371 = vmatpush1.msra.mxu0 %v576
    %1372 = vmatprep.subr.mxu0 %v581
    %1373 = vmatpush1.msra.mxu0 %v580
    %1374 = vmatprep.subr.mxu0 %v585
    %1375 = vmatpush1.msra.mxu0 %v584
    %1376 = vmatprep.subr.mxu0 0.0
    %1377 = vmatpush1.msra.mxu0 0.0
    %1378 = vmatprep.subr.mxu0 0.0
    %1379 = vmatpush1.msra.mxu0 0.0
    %1380 = vmatprep.subr.mxu0 0.0
    %1381 = vmatpush1.msra.mxu0 0.0
    %1382 = vmatprep.subr.mxu0 0.0
    %1383 = vmatpush1.msra.mxu0 0.0
    %1384 = vmatprep.subr.mxu0 0.0
    %1385 = vmatpush1.msra.mxu0 0.0
    %1386 = vmatprep.subr.mxu0 0.0
    %1387 = vmatpush1.msra.mxu0 0.0
    %1388 = vmatprep.subr.mxu0 0.0
    %1389 = vmatpush1.msra.mxu0 0.0
    %1390 = vmatprep.subr.mxu0 0.0
    %1391 = vmatpush1.msra.mxu0 0.0
    %1392 = vmatprep.subr.mxu0 0.0
    %1393 = vmatpush1.msra.mxu0 0.0
    %1394 = vmatprep.subr.mxu0 0.0
    %1395 = vmatpush1.msra.mxu0 0.0
    %1396 = vmatprep.subr.mxu0 0.0
    %1397 = vmatpush1.msra.mxu0 0.0
    %1398 = vmatprep.subr.mxu0 0.0
    %1399 = vmatpush1.msra.mxu0 0.0
    %1400 = vmatprep.subr.mxu0 0.0
    %1401 = vmatpush1.msra.mxu0 0.0
    %1402 = vmatprep.subr.mxu0 0.0
    %1403 = vmatpush1.msra.mxu0 0.0
    %1404 = vmatprep.subr.mxu0 0.0
    %1405 = vmatpush1.msra.mxu0 0.0
    %1406 = vmatprep.subr.mxu0 0.0
    %1407 = vmatpush1.msra.mxu0 0.0
    %1408 = vmatprep.mubr.f32.mxu0 0.0
    %1409 = vmatmul.mubr.f32.gmra.mrb[0].mxu0 %v1343
    %v1410 = vpop.f32.mrb[0].mxu0
    %v1411 = vadd.f32 0.0, %v1410
    %v1412 = vpop.f32.mrb[0].mxu0
    %v1413 = vadd.f32 0.0, %v1412
    %1414 = vdwg.mxu0
    %1415 = vmatprep.subr.mxu0 %v527
    %1416 = vmatpush1.msra.mxu0 %v526
    %1417 = vmatprep.subr.mxu0 %v531
    %1418 = vmatpush1.msra.mxu0 %v530
    %1419 = vmatprep.subr.mxu0 %v535
    %1420 = vmatpush1.msra.mxu0 %v534
    %1421 = vmatprep.subr.mxu0 %v539
    %1422 = vmatpush1.msra.mxu0 %v538
    %1423 = vmatprep.subr.mxu0 %v543
    %1424 = vmatpush1.msra.mxu0 %v542
    %1425 = vmatprep.subr.mxu0 %v547
    %1426 = vmatpush1.msra.mxu0 %v546
    %1427 = vmatprep.subr.mxu0 %v551
    %1428 = vmatpush1.msra.mxu0 %v550
    %1429 = vmatprep.subr.mxu0 %v555
    %1430 = vmatpush1.msra.mxu0 %v554
    %1431 = vmatprep.subr.mxu0 %v559
    %1432 = vmatpush1.msra.mxu0 %v558
    %1433 = vmatprep.subr.mxu0 %v563
    %1434 = vmatpush1.msra.mxu0 %v562
    %1435 = vmatprep.subr.mxu0 %v567
    %1436 = vmatpush1.msra.mxu0 %v566
    %1437 = vmatprep.subr.mxu0 %v571
    %1438 = vmatpush1.msra.mxu0 %v570
    %1439 = vmatprep.subr.mxu0 %v575
    %1440 = vmatpush1.msra.mxu0 %v574
    %1441 = vmatprep.subr.mxu0 %v579
    %1442 = vmatpush1.msra.mxu0 %v578
    %1443 = vmatprep.subr.mxu0 %v583
    %1444 = vmatpush1.msra.mxu0 %v582
    %1445 = vmatprep.subr.mxu0 %v587
    %1446 = vmatpush1.msra.mxu0 %v586
    %1447 = vmatprep.subr.mxu0 0.0
    %1448 = vmatpush1.msra.mxu0 0.0
    %1449 = vmatprep.subr.mxu0 0.0
    %1450 = vmatpush1.msra.mxu0 0.0
    %1451 = vmatprep.subr.mxu0 0.0
    %1452 = vmatpush1.msra.mxu0 0.0
    %1453 = vmatprep.subr.mxu0 0.0
    %1454 = vmatpush1.msra.mxu0 0.0
    %1455 = vmatprep.subr.mxu0 0.0
    %1456 = vmatpush1.msra.mxu0 0.0
    %1457 = vmatprep.subr.mxu0 0.0
    %1458 = vmatpush1.msra.mxu0 0.0
    %1459 = vmatprep.subr.mxu0 0.0
    %1460 = vmatpush1.msra.mxu0 0.0
    %1461 = vmatprep.subr.mxu0 0.0
    %1462 = vmatpush1.msra.mxu0 0.0
    %1463 = vmatprep.subr.mxu0 0.0
    %1464 = vmatpush1.msra.mxu0 0.0
    %1465 = vmatprep.subr.mxu0 0.0
    %1466 = vmatpush1.msra.mxu0 0.0
    %1467 = vmatprep.subr.mxu0 0.0
    %1468 = vmatpush1.msra.mxu0 0.0
    %1469 = vmatprep.subr.mxu0 0.0
    %1470 = vmatpush1.msra.mxu0 0.0
    %1471 = vmatprep.subr.mxu0 0.0
    %1472 = vmatpush1.msra.mxu0 0.0
    %1473 = vmatprep.subr.mxu0 0.0
    %1474 = vmatpush1.msra.mxu0 0.0
    %1475 = vmatprep.subr.mxu0 0.0
    %1476 = vmatpush1.msra.mxu0 0.0
    %1477 = vmatprep.subr.mxu0 0.0
    %1478 = vmatpush1.msra.mxu0 0.0
    %1479 = vmatprep.mubr.f32.mxu0 0.0
    %1480 = vmatmul.mubr.f32.gmra.mrb[0].mxu0 %v1343
    %v1481 = vpop.f32.mrb[0].mxu0
    %v1482 = vadd.f32 0.0, %v1481
    %v1483 = vpop.f32.mrb[0].mxu0
    %v1484 = vadd.f32 0.0, %v1483
    %1485 = vdwg.mxu0
    %v1486 = vadd.f32 %v1339, %v1411
    %v1487 = vadd.f32 %v1340, %v1413
    %v1488 = vadd.f32 %v1341, %v1482
    %v1489 = vadd.f32 %v1342, %v1484
    %v1490 = vld [vmem:[#allocation14] sm:$0xff]
    %v1491 = vxor.u32 %v1486, 2147483648
    %v1492 = vmul.f32 %v1491, 1.442695
    %v1493 = vpow.pop %v1492
    %v1494 = vadd.f32 %v1493, 1.0
    %v1495 = vrcp.pop %v1494
    %v1496 = vmul.f32 1.0, %v1495
    %v1497 = vxor.u32 %v1487, 2147483648
    %v1498 = vmul.f32 %v1497, 1.442695
    %v1499 = vpow.pop %v1498
    %v1500 = vadd.f32 %v1499, 1.0
    %v1501 = vrcp.pop %v1500
    %v1502 = vmul.f32 1.0, %v1501
    %v1503 = vtanh.pop %v1488
    %v1504 = vxor.u32 %v1489, 2147483648
    %v1505 = vmul.f32 %v1504, 1.442695
    %v1506 = vpow.pop %v1505
    %v1507 = vadd.f32 %v1506, 1.0
    %v1508 = vrcp.pop %v1507
    %v1509 = vmul.f32 1.0, %v1508
    %v1510 = vmul.f32 %v1502, %v1490
    %v1511 = vmul.f32 %v1496, %v1503
    %v1512 = vadd.f32 %v1510, %v1511
    %v1513 = vtanh.pop %v1512
    %v1514 = vmul.f32 %v1509, %v1513
    %1515 = vst [vmem:[#allocation12] sm:$0xff] %v1514
    %1516 = vst [vmem:[#allocation14] sm:$0xff] %v1512
    %v1517 = vld [vmem:[%s913] sm:$0xff]
    %1518 = vmatprep.subr.mxu0 %v653
    %1519 = vmatpush1.msra.mxu0 %v652
    %1520 = vmatprep.subr.mxu0 %v657
    %1521 = vmatpush1.msra.mxu0 %v656
    %1522 = vmatprep.subr.mxu0 %v661
    %1523 = vmatpush1.msra.mxu0 %v660
    %1524 = vmatprep.subr.mxu0 %v665
    %1525 = vmatpush1.msra.mxu0 %v664
    %1526 = vmatprep.subr.mxu0 %v669
    %1527 = vmatpush1.msra.mxu0 %v668
    %1528 = vmatprep.subr.mxu0 %v673
    %1529 = vmatpush1.msra.mxu0 %v672
    %1530 = vmatprep.subr.mxu0 %v677
    %1531 = vmatpush1.msra.mxu0 %v676
    %1532 = vmatprep.subr.mxu0 %v681
    %1533 = vmatpush1.msra.mxu0 %v680
    %1534 = vmatprep.subr.mxu0 %v685
    %1535 = vmatpush1.msra.mxu0 %v684
    %1536 = vmatprep.subr.mxu0 %v689
    %1537 = vmatpush1.msra.mxu0 %v688
    %1538 = vmatprep.subr.mxu0 %v693
    %1539 = vmatpush1.msra.mxu0 %v692
    %1540 = vmatprep.subr.mxu0 %v697
    %1541 = vmatpush1.msra.mxu0 %v696
    %1542 = vmatprep.subr.mxu0 %v701
    %1543 = vmatpush1.msra.mxu0 %v700
    %1544 = vmatprep.subr.mxu0 %v705
    %1545 = vmatpush1.msra.mxu0 %v704
    %1546 = vmatprep.subr.mxu0 %v709
    %1547 = vmatpush1.msra.mxu0 %v708
    %1548 = vmatprep.subr.mxu0 %v713
    %1549 = vmatpush1.msra.mxu0 %v712
    %1550 = vmatprep.subr.mxu0 0.0
    %1551 = vmatpush1.msra.mxu0 0.0
    %1552 = vmatprep.subr.mxu0 0.0
    %1553 = vmatpush1.msra.mxu0 0.0
    %1554 = vmatprep.subr.mxu0 0.0
    %1555 = vmatpush1.msra.mxu0 0.0
    %1556 = vmatprep.subr.mxu0 0.0
    %1557 = vmatpush1.msra.mxu0 0.0
    %1558 = vmatprep.subr.mxu0 0.0
    %1559 = vmatpush1.msra.mxu0 0.0
    %1560 = vmatprep.subr.mxu0 0.0
    %1561 = vmatpush1.msra.mxu0 0.0
    %1562 = vmatprep.subr.mxu0 0.0
    %1563 = vmatpush1.msra.mxu0 0.0
    %1564 = vmatprep.subr.mxu0 0.0
    %1565 = vmatpush1.msra.mxu0 0.0
    %1566 = vmatprep.subr.mxu0 0.0
    %1567 = vmatpush1.msra.mxu0 0.0
    %1568 = vmatprep.subr.mxu0 0.0
    %1569 = vmatpush1.msra.mxu0 0.0
    %1570 = vmatprep.subr.mxu0 0.0
    %1571 = vmatpush1.msra.mxu0 0.0
    %1572 = vmatprep.subr.mxu0 0.0
    %1573 = vmatpush1.msra.mxu0 0.0
    %1574 = vmatprep.subr.mxu0 0.0
    %1575 = vmatpush1.msra.mxu0 0.0
    %1576 = vmatprep.subr.mxu0 0.0
    %1577 = vmatpush1.msra.mxu0 0.0
    %1578 = vmatprep.subr.mxu0 0.0
    %1579 = vmatpush1.msra.mxu0 0.0
    %1580 = vmatprep.subr.mxu0 0.0
    %1581 = vmatpush1.msra.mxu0 0.0
    %1582 = vmatprep.mubr.f32.mxu0 0.0
    %1583 = vmatmul.mubr.f32.gmra.mrb[0].mxu0 %v1517
    %v1584 = vpop.f32.mrb[0].mxu0
    %v1585 = vadd.f32 0.0, %v1584
    %v1586 = vpop.f32.mrb[0].mxu0
    %v1587 = vadd.f32 0.0, %v1586
    %1588 = vdwg.mxu0
    %1589 = vmatprep.subr.mxu0 %v655
    %1590 = vmatpush1.msra.mxu0 %v654
    %1591 = vmatprep.subr.mxu0 %v659
    %1592 = vmatpush1.msra.mxu0 %v658
    %1593 = vmatprep.subr.mxu0 %v663
    %1594 = vmatpush1.msra.mxu0 %v662
    %1595 = vmatprep.subr.mxu0 %v667
    %1596 = vmatpush1.msra.mxu0 %v666
    %1597 = vmatprep.subr.mxu0 %v671
    %1598 = vmatpush1.msra.mxu0 %v670
    %1599 = vmatprep.subr.mxu0 %v675
    %1600 = vmatpush1.msra.mxu0 %v674
    %1601 = vmatprep.subr.mxu0 %v679
    %1602 = vmatpush1.msra.mxu0 %v678
    %1603 = vmatprep.subr.mxu0 %v683
    %1604 = vmatpush1.msra.mxu0 %v682
    %1605 = vmatprep.subr.mxu0 %v687
    %1606 = vmatpush1.msra.mxu0 %v686
    %1607 = vmatprep.subr.mxu0 %v691
    %1608 = vmatpush1.msra.mxu0 %v690
    %1609 = vmatprep.subr.mxu0 %v695
    %1610 = vmatpush1.msra.mxu0 %v694
    %1611 = vmatprep.subr.mxu0 %v699
    %1612 = vmatpush1.msra.mxu0 %v698
    %1613 = vmatprep.subr.mxu0 %v703
    %1614 = vmatpush1.msra.mxu0 %v702
    %1615 = vmatprep.subr.mxu0 %v707
    %1616 = vmatpush1.msra.mxu0 %v706
    %1617 = vmatprep.subr.mxu0 %v711
    %1618 = vmatpush1.msra.mxu0 %v710
    %1619 = vmatprep.subr.mxu0 %v715
    %1620 = vmatpush1.msra.mxu0 %v714
    %1621 = vmatprep.subr.mxu0 0.0
    %1622 = vmatpush1.msra.mxu0 0.0
    %1623 = vmatprep.subr.mxu0 0.0
    %1624 = vmatpush1.msra.mxu0 0.0
    %1625 = vmatprep.subr.mxu0 0.0
    %1626 = vmatpush1.msra.mxu0 0.0
    %1627 = vmatprep.subr.mxu0 0.0
    %1628 = vmatpush1.msra.mxu0 0.0
    %1629 = vmatprep.subr.mxu0 0.0
    %1630 = vmatpush1.msra.mxu0 0.0
    %1631 = vmatprep.subr.mxu0 0.0
    %1632 = vmatpush1.msra.mxu0 0.0
    %1633 = vmatprep.subr.mxu0 0.0
    %1634 = vmatpush1.msra.mxu0 0.0
    %1635 = vmatprep.subr.mxu0 0.0
    %1636 = vmatpush1.msra.mxu0 0.0
    %1637 = vmatprep.subr.mxu0 0.0
    %1638 = vmatpush1.msra.mxu0 0.0
    %1639 = vmatprep.subr.mxu0 0.0
    %1640 = vmatpush1.msra.mxu0 0.0
    %1641 = vmatprep.subr.mxu0 0.0
    %1642 = vmatpush1.msra.mxu0 0.0
    %1643 = vmatprep.subr.mxu0 0.0
    %1644 = vmatpush1.msra.mxu0 0.0
    %1645 = vmatprep.subr.mxu0 0.0
    %1646 = vmatpush1.msra.mxu0 0.0
    %1647 = vmatprep.subr.mxu0 0.0
    %1648 = vmatpush1.msra.mxu0 0.0
    %1649 = vmatprep.subr.mxu0 0.0
    %1650 = vmatpush1.msra.mxu0 0.0
    %1651 = vmatprep.subr.mxu0 0.0
    %1652 = vmatpush1.msra.mxu0 0.0
    %1653 = vmatprep.mubr.f32.mxu0 0.0
    %1654 = vmatmul.mubr.f32.gmra.mrb[0].mxu0 %v1517
    %v1655 = vpop.f32.mrb[0].mxu0
    %v1656 = vadd.f32 0.0, %v1655
    %v1657 = vpop.f32.mrb[0].mxu0
    %v1658 = vadd.f32 0.0, %v1657
    %1659 = vdwg.mxu0
    %1660 = vmatprep.subr.mxu0 %v589
    %1661 = vmatpush1.msra.mxu0 %v588
    %1662 = vmatprep.subr.mxu0 %v593
    %1663 = vmatpush1.msra.mxu0 %v592
    %1664 = vmatprep.subr.mxu0 %v597
    %1665 = vmatpush1.msra.mxu0 %v596
    %1666 = vmatprep.subr.mxu0 %v601
    %1667 = vmatpush1.msra.mxu0 %v600
    %1668 = vmatprep.subr.mxu0 %v605
    %1669 = vmatpush1.msra.mxu0 %v604
    %1670 = vmatprep.subr.mxu0 %v609
    %1671 = vmatpush1.msra.mxu0 %v608
    %1672 = vmatprep.subr.mxu0 %v613
    %1673 = vmatpush1.msra.mxu0 %v612
    %1674 = vmatprep.subr.mxu0 %v617
    %1675 = vmatpush1.msra.mxu0 %v616
    %1676 = vmatprep.subr.mxu0 %v621
    %1677 = vmatpush1.msra.mxu0 %v620
    %1678 = vmatprep.subr.mxu0 %v625
    %1679 = vmatpush1.msra.mxu0 %v624
    %1680 = vmatprep.subr.mxu0 %v629
    %1681 = vmatpush1.msra.mxu0 %v628
    %1682 = vmatprep.subr.mxu0 %v633
    %1683 = vmatpush1.msra.mxu0 %v632
    %1684 = vmatprep.subr.mxu0 %v637
    %1685 = vmatpush1.msra.mxu0 %v636
    %1686 = vmatprep.subr.mxu0 %v641
    %1687 = vmatpush1.msra.mxu0 %v640
    %1688 = vmatprep.subr.mxu0 %v645
    %1689 = vmatpush1.msra.mxu0 %v644
    %1690 = vmatprep.subr.mxu0 %v649
    %1691 = vmatpush1.msra.mxu0 %v648
    %1692 = vmatprep.subr.mxu0 0.0
    %1693 = vmatpush1.msra.mxu0 0.0
    %1694 = vmatprep.subr.mxu0 0.0
    %1695 = vmatpush1.msra.mxu0 0.0
    %1696 = vmatprep.subr.mxu0 0.0
    %1697 = vmatpush1.msra.mxu0 0.0
    %1698 = vmatprep.subr.mxu0 0.0
    %1699 = vmatpush1.msra.mxu0 0.0
    %1700 = vmatprep.subr.mxu0 0.0
    %1701 = vmatpush1.msra.mxu0 0.0
    %1702 = vmatprep.subr.mxu0 0.0
    %1703 = vmatpush1.msra.mxu0 0.0
    %1704 = vmatprep.subr.mxu0 0.0
    %1705 = vmatpush1.msra.mxu0 0.0
    %1706 = vmatprep.subr.mxu0 0.0
    %1707 = vmatpush1.msra.mxu0 0.0
    %1708 = vmatprep.subr.mxu0 0.0
    %1709 = vmatpush1.msra.mxu0 0.0
    %1710 = vmatprep.subr.mxu0 0.0
    %1711 = vmatpush1.msra.mxu0 0.0
    %1712 = vmatprep.subr.mxu0 0.0
    %1713 = vmatpush1.msra.mxu0 0.0
    %1714 = vmatprep.subr.mxu0 0.0
    %1715 = vmatpush1.msra.mxu0 0.0
    %1716 = vmatprep.subr.mxu0 0.0
    %1717 = vmatpush1.msra.mxu0 0.0
    %1718 = vmatprep.subr.mxu0 0.0
    %1719 = vmatpush1.msra.mxu0 0.0
    %1720 = vmatprep.subr.mxu0 0.0
    %1721 = vmatpush1.msra.mxu0 0.0
    %1722 = vmatprep.subr.mxu0 0.0
    %1723 = vmatpush1.msra.mxu0 0.0
    %1724 = vmatprep.mubr.f32.mxu0 0.0
    %1725 = vmatmul.mubr.f32.gmra.mrb[0].mxu0 %v1514
    %v1726 = vpop.f32.mrb[0].mxu0
    %v1727 = vadd.f32 %v1585, %v1726
    %v1728 = vpop.f32.mrb[0].mxu0
    %v1729 = vadd.f32 %v1587, %v1728
    %1730 = vdwg.mxu0
    %1731 = vmatprep.subr.mxu0 %v591
    %1732 = vmatpush1.msra.mxu0 %v590
    %1733 = vmatprep.subr.mxu0 %v595
    %1734 = vmatpush1.msra.mxu0 %v594
    %1735 = vmatprep.subr.mxu0 %v599
    %1736 = vmatpush1.msra.mxu0 %v598
    %1737 = vmatprep.subr.mxu0 %v603
    %1738 = vmatpush1.msra.mxu0 %v602
    %1739 = vmatprep.subr.mxu0 %v607
    %1740 = vmatpush1.msra.mxu0 %v606
    %1741 = vmatprep.subr.mxu0 %v611
    %1742 = vmatpush1.msra.mxu0 %v610
    %1743 = vmatprep.subr.mxu0 %v615
    %1744 = vmatpush1.msra.mxu0 %v614
    %1745 = vmatprep.subr.mxu0 %v619
    %1746 = vmatpush1.msra.mxu0 %v618
    %1747 = vmatprep.subr.mxu0 %v623
    %1748 = vmatpush1.msra.mxu0 %v622
    %1749 = vmatprep.subr.mxu0 %v627
    %1750 = vmatpush1.msra.mxu0 %v626
    %1751 = vmatprep.subr.mxu0 %v631
    %1752 = vmatpush1.msra.mxu0 %v630
    %1753 = vmatprep.subr.mxu0 %v635
    %1754 = vmatpush1.msra.mxu0 %v634
    %1755 = vmatprep.subr.mxu0 %v639
    %1756 = vmatpush1.msra.mxu0 %v638
    %1757 = vmatprep.subr.mxu0 %v643
    %1758 = vmatpush1.msra.mxu0 %v642
    %1759 = vmatprep.subr.mxu0 %v647
    %1760 = vmatpush1.msra.mxu0 %v646
    %1761 = vmatprep.subr.mxu0 %v651
    %1762 = vmatpush1.msra.mxu0 %v650
    %1763 = vmatprep.subr.mxu0 0.0
    %1764 = vmatpush1.msra.mxu0 0.0
    %1765 = vmatprep.subr.mxu0 0.0
    %1766 = vmatpush1.msra.mxu0 0.0
    %1767 = vmatprep.subr.mxu0 0.0
    %1768 = vmatpush1.msra.mxu0 0.0
    %1769 = vmatprep.subr.mxu0 0.0
    %1770 = vmatpush1.msra.mxu0 0.0
    %1771 = vmatprep.subr.mxu0 0.0
    %1772 = vmatpush1.msra.mxu0 0.0
    %1773 = vmatprep.subr.mxu0 0.0
    %1774 = vmatpush1.msra.mxu0 0.0
    %1775 = vmatprep.subr.mxu0 0.0
    %1776 = vmatpush1.msra.mxu0 0.0
    %1777 = vmatprep.subr.mxu0 0.0
    %1778 = vmatpush1.msra.mxu0 0.0
    %1779 = vmatprep.subr.mxu0 0.0
    %1780 = vmatpush1.msra.mxu0 0.0
    %1781 = vmatprep.subr.mxu0 0.0
    %1782 = vmatpush1.msra.mxu0 0.0
    %1783 = vmatprep.subr.mxu0 0.0
    %1784 = vmatpush1.msra.mxu0 0.0
    %1785 = vmatprep.subr.mxu0 0.0
    %1786 = vmatpush1.msra.mxu0 0.0
    %1787 = vmatprep.subr.mxu0 0.0
    %1788 = vmatpush1.msra.mxu0 0.0
    %1789 = vmatprep.subr.mxu0 0.0
    %1790 = vmatpush1.msra.mxu0 0.0
    %1791 = vmatprep.subr.mxu0 0.0
    %1792 = vmatpush1.msra.mxu0 0.0
    %1793 = vmatprep.subr.mxu0 0.0
    %1794 = vmatpush1.msra.mxu0 0.0
    %1795 = vmatprep.mubr.f32.mxu0 0.0
    %1796 = vmatmul.mubr.f32.gmra.mrb[0].mxu0 %v1514
    %v1797 = vpop.f32.mrb[0].mxu0
    %v1798 = vadd.f32 %v1656, %v1797
    %v1799 = vpop.f32.mrb[0].mxu0
    %v1800 = vadd.f32 %v1658, %v1799
    %1801 = vdwg.mxu0
    %v1802 = vadd.f32 %v1727, %v1203
    %v1803 = vadd.f32 %v1729, %v1207
    %v1804 = vadd.f32 %v1798, %v1211
    %v1805 = vadd.f32 %v1800, %v1215
    %v1806 = vld [vmem:[%s1224] sm:$0xff]
    %v1807 = vxor.u32 %v1802, 2147483648
    %v1808 = vmul.f32 %v1807, 1.442695
    %v1809 = vpow.pop %v1808
    %v1810 = vadd.f32 %v1809, 1.0
    %v1811 = vrcp.pop %v1810
    %v1812 = vmul.f32 1.0, %v1811
    %v1813 = vxor.u32 %v1803, 2147483648
    %v1814 = vmul.f32 %v1813, 1.442695
    %v1815 = vpow.pop %v1814
    %v1816 = vadd.f32 %v1815, 1.0
    %v1817 = vrcp.pop %v1816
    %v1818 = vmul.f32 1.0, %v1817
    %v1819 = vtanh.pop %v1804
    %v1820 = vxor.u32 %v1805, 2147483648
    %v1821 = vmul.f32 %v1820, 1.442695
    %v1822 = vpow.pop %v1821
    %v1823 = vadd.f32 %v1822, 1.0
    %v1824 = vrcp.pop %v1823
    %v1825 = vmul.f32 1.0, %v1824
    %v1826 = vmul.f32 %v1818, %v1806
    %v1827 = vmul.f32 %v1812, %v1819
    %v1828 = vadd.f32 %v1826, %v1827
    %v1829 = vtanh.pop %v1828
    %v1830 = vmul.f32 %v1825, %v1829
    %1831 = vst [vmem:[%s913] sm:$0xff] %v1830
    %1832 = vst [vmem:[%s1224] sm:$0xff] %v1828
    %1833 = vmatprep.subr.mxu0 0.0
    %1834 = vmatpush1.msra.mxu0 %v718
    %1835 = vmatprep.subr.mxu0 0.0
    %1836 = vmatpush1.msra.mxu0 %v719
    %1837 = vmatprep.subr.mxu0 0.0
    %1838 = vmatpush1.msra.mxu0 %v720
    %1839 = vmatprep.subr.mxu0 0.0
    %1840 = vmatpush1.msra.mxu0 %v721
    %1841 = vmatprep.subr.mxu0 0.0
    %1842 = vmatpush1.msra.mxu0 %v722
    %1843 = vmatprep.subr.mxu0 0.0
    %1844 = vmatpush1.msra.mxu0 %v723
    %1845 = vmatprep.subr.mxu0 0.0
    %1846 = vmatpush1.msra.mxu0 %v724
    %1847 = vmatprep.subr.mxu0 0.0
    %1848 = vmatpush1.msra.mxu0 %v725
    %1849 = vmatprep.subr.mxu0 0.0
    %1850 = vmatpush1.msra.mxu0 %v726
    %1851 = vmatprep.subr.mxu0 0.0
    %1852 = vmatpush1.msra.mxu0 %v727
    %1853 = vmatprep.subr.mxu0 0.0
    %1854 = vmatpush1.msra.mxu0 %v728
    %1855 = vmatprep.subr.mxu0 0.0
    %1856 = vmatpush1.msra.mxu0 %v729
    %1857 = vmatprep.subr.mxu0 0.0
    %1858 = vmatpush1.msra.mxu0 %v730
    %1859 = vmatprep.subr.mxu0 0.0
    %1860 = vmatpush1.msra.mxu0 %v731
    %1861 = vmatprep.subr.mxu0 0.0
    %1862 = vmatpush1.msra.mxu0 %v732
    %1863 = vmatprep.subr.mxu0 0.0
    %1864 = vmatpush1.msra.mxu0 %v733
    %1865 = vmatprep.subr.mxu0 0.0
    %1866 = vmatpush1.msra.mxu0 0.0
    %1867 = vmatprep.subr.mxu0 0.0
    %1868 = vmatpush1.msra.mxu0 0.0
    %1869 = vmatprep.subr.mxu0 0.0
    %1870 = vmatpush1.msra.mxu0 0.0
    %1871 = vmatprep.subr.mxu0 0.0
    %1872 = vmatpush1.msra.mxu0 0.0
    %1873 = vmatprep.subr.mxu0 0.0
    %1874 = vmatpush1.msra.mxu0 0.0
    %1875 = vmatprep.subr.mxu0 0.0
    %1876 = vmatpush1.msra.mxu0 0.0
    %1877 = vmatprep.subr.mxu0 0.0
    %1878 = vmatpush1.msra.mxu0 0.0
    %1879 = vmatprep.subr.mxu0 0.0
    %1880 = vmatpush1.msra.mxu0 0.0
    %1881 = vmatprep.subr.mxu0 0.0
    %1882 = vmatpush1.msra.mxu0 0.0
    %1883 = vmatprep.subr.mxu0 0.0
    %1884 = vmatpush1.msra.mxu0 0.0
    %1885 = vmatprep.subr.mxu0 0.0
    %1886 = vmatpush1.msra.mxu0 0.0
    %1887 = vmatprep.subr.mxu0 0.0
    %1888 = vmatpush1.msra.mxu0 0.0
    %1889 = vmatprep.subr.mxu0 0.0
    %1890 = vmatpush1.msra.mxu0 0.0
    %1891 = vmatprep.subr.mxu0 0.0
    %1892 = vmatpush1.msra.mxu0 0.0
    %1893 = vmatprep.subr.mxu0 0.0
    %1894 = vmatpush1.msra.mxu0 0.0
    %1895 = vmatprep.subr.mxu0 0.0
    %1896 = vmatpush1.msra.mxu0 0.0
    %1897 = vmatprep.mubr.f32.mxu0 0.0
    %1898 = vmatmul.mubr.f32.gmra.mrb[0].mxu0 %v1830
    %v1899 = vpop.f32.mrb[0].mxu0
    %v1900 = vadd.f32 %v734, %v1899
    %v1901 = vpop.f32.mrb[0].mxu0
    %1902 = vdwg.mxu0
    %s1903 = scalar_lea.vmem [#allocation3], 8
    %v1904 = vld [vmem:[%s1903] sm:$0xff]
    %v1905 = vmul.f32 %v1900, 0.5
    %v1906 = vmul.f32 %v1905, 1.442695
    %v1907 = vpow.pop %v1906
    %1909 = vrot.lane.b32.xlu0 %v1907, 112
    %v1910 = vpop.permute.xlu0 %1909
    %v1912 = vmul.f32 %v1904, %v1910
    %v1913 = vadd.f32 %v1912, %v1900
    %s1914 = scalar_lea.vmem [#allocation11], 8
    %1915 = vst.msk [vmem:[%s1914] sm:$0xff] %vm97, %v1913
    %1917 = vrot.lane.b32.xlu0 %v1900, 16
    %v1918 = vpop.permute.xlu0 %1917
    %1920 = vst.msk [vmem:[%s1914] sm:$0xff] %vm1337, %v1918
    %v1921 = vld [vmem:[#allocation2 + $0x40] sm:$0xff]
    %v1922 = vld [vmem:[#allocation2 + $0x48] sm:$0xff]
    %v1923 = vld [vmem:[#allocation2 + $0x50] sm:$0xff]
    %v1924 = vld [vmem:[#allocation2 + $0x58] sm:$0xff]
    %v1925 = vld [vmem:[#allocation12] sm:$0xff]
    %1926 = vmatprep.subr.mxu0 %v525
    %1927 = vmatpush1.msra.mxu0 %v524
    %1928 = vmatprep.subr.mxu0 %v529
    %1929 = vmatpush1.msra.mxu0 %v528
    %1930 = vmatprep.subr.mxu0 %v533
    %1931 = vmatpush1.msra.mxu0 %v532
    %1932 = vmatprep.subr.mxu0 %v537
    %1933 = vmatpush1.msra.mxu0 %v536
    %1934 = vmatprep.subr.mxu0 %v541
    %1935 = vmatpush1.msra.mxu0 %v540
    %1936 = vmatprep.subr.mxu0 %v545
    %1937 = vmatpush1.msra.mxu0 %v544
    %1938 = vmatprep.subr.mxu0 %v549
    %1939 = vmatpush1.msra.mxu0 %v548
    %1940 = vmatprep.subr.mxu0 %v553
    %1941 = vmatpush1.msra.mxu0 %v552
    %1942 = vmatprep.subr.mxu0 %v557
    %1943 = vmatpush1.msra.mxu0 %v556
    %1944 = vmatprep.subr.mxu0 %v561
    %1945 = vmatpush1.msra.mxu0 %v560
    %1946 = vmatprep.subr.mxu0 %v565
    %1947 = vmatpush1.msra.mxu0 %v564
    %1948 = vmatprep.subr.mxu0 %v569
    %1949 = vmatpush1.msra.mxu0 %v568
    %1950 = vmatprep.subr.mxu0 %v573
    %1951 = vmatpush1.msra.mxu0 %v572
    %1952 = vmatprep.subr.mxu0 %v577
    %1953 = vmatpush1.msra.mxu0 %v576
    %1954 = vmatprep.subr.mxu0 %v581
    %1955 = vmatpush1.msra.mxu0 %v580
    %1956 = vmatprep.subr.mxu0 %v585
    %1957 = vmatpush1.msra.mxu0 %v584
    %1958 = vmatprep.subr.mxu0 0.0
    %1959 = vmatpush1.msra.mxu0 0.0
    %1960 = vmatprep.subr.mxu0 0.0
    %1961 = vmatpush1.msra.mxu0 0.0
    %1962 = vmatprep.subr.mxu0 0.0
    %1963 = vmatpush1.msra.mxu0 0.0
    %1964 = vmatprep.subr.mxu0 0.0
    %1965 = vmatpush1.msra.mxu0 0.0
    %1966 = vmatprep.subr.mxu0 0.0
    %1967 = vmatpush1.msra.mxu0 0.0
    %1968 = vmatprep.subr.mxu0 0.0
    %1969 = vmatpush1.msra.mxu0 0.0
    %1970 = vmatprep.subr.mxu0 0.0
    %1971 = vmatpush1.msra.mxu0 0.0
    %1972 = vmatprep.subr.mxu0 0.0
    %1973 = vmatpush1.msra.mxu0 0.0
    %1974 = vmatprep.subr.mxu0 0.0
    %1975 = vmatpush1.msra.mxu0 0.0
    %1976 = vmatprep.subr.mxu0 0.0
    %1977 = vmatpush1.msra.mxu0 0.0
    %1978 = vmatprep.subr.mxu0 0.0
    %1979 = vmatpush1.msra.mxu0 0.0
    %1980 = vmatprep.subr.mxu0 0.0
    %1981 = vmatpush1.msra.mxu0 0.0
    %1982 = vmatprep.subr.mxu0 0.0
    %1983 = vmatpush1.msra.mxu0 0.0
    %1984 = vmatprep.subr.mxu0 0.0
    %1985 = vmatpush1.msra.mxu0 0.0
    %1986 = vmatprep.subr.mxu0 0.0
    %1987 = vmatpush1.msra.mxu0 0.0
    %1988 = vmatprep.subr.mxu0 0.0
    %1989 = vmatpush1.msra.mxu0 0.0
    %1990 = vmatprep.mubr.f32.mxu0 0.0
    %1991 = vmatmul.mubr.f32.gmra.mrb[0].mxu0 %v1925
    %v1992 = vpop.f32.mrb[0].mxu0
    %v1993 = vadd.f32 0.0, %v1992
    %v1994 = vpop.f32.mrb[0].mxu0
    %v1995 = vadd.f32 0.0, %v1994
    %1996 = vdwg.mxu0
    %1997 = vmatprep.subr.mxu0 %v527
    %1998 = vmatpush1.msra.mxu0 %v526
    %1999 = vmatprep.subr.mxu0 %v531
    %2000 = vmatpush1.msra.mxu0 %v530
    %2001 = vmatprep.subr.mxu0 %v535
    %2002 = vmatpush1.msra.mxu0 %v534
    %2003 = vmatprep.subr.mxu0 %v539
    %2004 = vmatpush1.msra.mxu0 %v538
    %2005 = vmatprep.subr.mxu0 %v543
    %2006 = vmatpush1.msra.mxu0 %v542
    %2007 = vmatprep.subr.mxu0 %v547
    %2008 = vmatpush1.msra.mxu0 %v546
    %2009 = vmatprep.subr.mxu0 %v551
    %2010 = vmatpush1.msra.mxu0 %v550
    %2011 = vmatprep.subr.mxu0 %v555
    %2012 = vmatpush1.msra.mxu0 %v554
    %2013 = vmatprep.subr.mxu0 %v559
    %2014 = vmatpush1.msra.mxu0 %v558
    %2015 = vmatprep.subr.mxu0 %v563
    %2016 = vmatpush1.msra.mxu0 %v562
    %2017 = vmatprep.subr.mxu0 %v567
    %2018 = vmatpush1.msra.mxu0 %v566
    %2019 = vmatprep.subr.mxu0 %v571
    %2020 = vmatpush1.msra.mxu0 %v570
    %2021 = vmatprep.subr.mxu0 %v575
    %2022 = vmatpush1.msra.mxu0 %v574
    %2023 = vmatprep.subr.mxu0 %v579
    %2024 = vmatpush1.msra.mxu0 %v578
    %2025 = vmatprep.subr.mxu0 %v583
    %2026 = vmatpush1.msra.mxu0 %v582
    %2027 = vmatprep.subr.mxu0 %v587
    %2028 = vmatpush1.msra.mxu0 %v586
    %2029 = vmatprep.subr.mxu0 0.0
    %2030 = vmatpush1.msra.mxu0 0.0
    %2031 = vmatprep.subr.mxu0 0.0
    %2032 = vmatpush1.msra.mxu0 0.0
    %2033 = vmatprep.subr.mxu0 0.0
    %2034 = vmatpush1.msra.mxu0 0.0
    %2035 = vmatprep.subr.mxu0 0.0
    %2036 = vmatpush1.msra.mxu0 0.0
    %2037 = vmatprep.subr.mxu0 0.0
    %2038 = vmatpush1.msra.mxu0 0.0
    %2039 = vmatprep.subr.mxu0 0.0
    %2040 = vmatpush1.msra.mxu0 0.0
    %2041 = vmatprep.subr.mxu0 0.0
    %2042 = vmatpush1.msra.mxu0 0.0
    %2043 = vmatprep.subr.mxu0 0.0
    %2044 = vmatpush1.msra.mxu0 0.0
    %2045 = vmatprep.subr.mxu0 0.0
    %2046 = vmatpush1.msra.mxu0 0.0
    %2047 = vmatprep.subr.mxu0 0.0
    %2048 = vmatpush1.msra.mxu0 0.0
    %2049 = vmatprep.subr.mxu0 0.0
    %2050 = vmatpush1.msra.mxu0 0.0
    %2051 = vmatprep.subr.mxu0 0.0
    %2052 = vmatpush1.msra.mxu0 0.0
    %2053 = vmatprep.subr.mxu0 0.0
    %2054 = vmatpush1.msra.mxu0 0.0
    %2055 = vmatprep.subr.mxu0 0.0
    %2056 = vmatpush1.msra.mxu0 0.0
    %2057 = vmatprep.subr.mxu0 0.0
    %2058 = vmatpush1.msra.mxu0 0.0
    %2059 = vmatprep.subr.mxu0 0.0
    %2060 = vmatpush1.msra.mxu0 0.0
    %2061 = vmatprep.mubr.f32.mxu0 0.0
    %2062 = vmatmul.mubr.f32.gmra.mrb[0].mxu0 %v1925
    %v2063 = vpop.f32.mrb[0].mxu0
    %v2064 = vadd.f32 0.0, %v2063
    %v2065 = vpop.f32.mrb[0].mxu0
    %v2066 = vadd.f32 0.0, %v2065
    %2067 = vdwg.mxu0
    %v2068 = vadd.f32 %v1921, %v1993
    %v2069 = vadd.f32 %v1922, %v1995
    %v2070 = vadd.f32 %v1923, %v2064
    %v2071 = vadd.f32 %v1924, %v2066
    %v2072 = vld [vmem:[#allocation14] sm:$0xff]
    %v2073 = vxor.u32 %v2068, 2147483648
    %v2074 = vmul.f32 %v2073, 1.442695
    %v2075 = vpow.pop %v2074
    %v2076 = vadd.f32 %v2075, 1.0
    %v2077 = vrcp.pop %v2076
    %v2078 = vmul.f32 1.0, %v2077
    %v2079 = vxor.u32 %v2069, 2147483648
    %v2080 = vmul.f32 %v2079, 1.442695
    %v2081 = vpow.pop %v2080
    %v2082 = vadd.f32 %v2081, 1.0
    %v2083 = vrcp.pop %v2082
    %v2084 = vmul.f32 1.0, %v2083
    %v2085 = vtanh.pop %v2070
    %v2086 = vxor.u32 %v2071, 2147483648
    %v2087 = vmul.f32 %v2086, 1.442695
    %v2088 = vpow.pop %v2087
    %v2089 = vadd.f32 %v2088, 1.0
    %v2090 = vrcp.pop %v2089
    %v2091 = vmul.f32 1.0, %v2090
    %v2092 = vmul.f32 %v2084, %v2072
    %v2093 = vmul.f32 %v2078, %v2085
    %v2094 = vadd.f32 %v2092, %v2093
    %v2095 = vtanh.pop %v2094
    %v2096 = vmul.f32 %v2091, %v2095
    %2097 = vst [vmem:[#allocation12] sm:$0xff] %v2096
    %2098 = vst [vmem:[#allocation14] sm:$0xff] %v2094
    %v2099 = vld [vmem:[%s913] sm:$0xff]
    %2100 = vmatprep.subr.mxu0 %v653
    %2101 = vmatpush1.msra.mxu0 %v652
    %2102 = vmatprep.subr.mxu0 %v657
    %2103 = vmatpush1.msra.mxu0 %v656
    %2104 = vmatprep.subr.mxu0 %v661
    %2105 = vmatpush1.msra.mxu0 %v660
    %2106 = vmatprep.subr.mxu0 %v665
    %2107 = vmatpush1.msra.mxu0 %v664
    %2108 = vmatprep.subr.mxu0 %v669
    %2109 = vmatpush1.msra.mxu0 %v668
    %2110 = vmatprep.subr.mxu0 %v673
    %2111 = vmatpush1.msra.mxu0 %v672
    %2112 = vmatprep.subr.mxu0 %v677
    %2113 = vmatpush1.msra.mxu0 %v676
    %2114 = vmatprep.subr.mxu0 %v681
    %2115 = vmatpush1.msra.mxu0 %v680
    %2116 = vmatprep.subr.mxu0 %v685
    %2117 = vmatpush1.msra.mxu0 %v684
    %2118 = vmatprep.subr.mxu0 %v689
    %2119 = vmatpush1.msra.mxu0 %v688
    %2120 = vmatprep.subr.mxu0 %v693
    %2121 = vmatpush1.msra.mxu0 %v692
    %2122 = vmatprep.subr.mxu0 %v697
    %2123 = vmatpush1.msra.mxu0 %v696
    %2124 = vmatprep.subr.mxu0 %v701
    %2125 = vmatpush1.msra.mxu0 %v700
    %2126 = vmatprep.subr.mxu0 %v705
    %2127 = vmatpush1.msra.mxu0 %v704
    %2128 = vmatprep.subr.mxu0 %v709
    %2129 = vmatpush1.msra.mxu0 %v708
    %2130 = vmatprep.subr.mxu0 %v713
    %2131 = vmatpush1.msra.mxu0 %v712
    %2132 = vmatprep.subr.mxu0 0.0
    %2133 = vmatpush1.msra.mxu0 0.0
    %2134 = vmatprep.subr.mxu0 0.0
    %2135 = vmatpush1.msra.mxu0 0.0
    %2136 = vmatprep.subr.mxu0 0.0
    %2137 = vmatpush1.msra.mxu0 0.0
    %2138 = vmatprep.subr.mxu0 0.0
    %2139 = vmatpush1.msra.mxu0 0.0
    %2140 = vmatprep.subr.mxu0 0.0
    %2141 = vmatpush1.msra.mxu0 0.0
    %2142 = vmatprep.subr.mxu0 0.0
    %2143 = vmatpush1.msra.mxu0 0.0
    %2144 = vmatprep.subr.mxu0 0.0
    %2145 = vmatpush1.msra.mxu0 0.0
    %2146 = vmatprep.subr.mxu0 0.0
    %2147 = vmatpush1.msra.mxu0 0.0
    %2148 = vmatprep.subr.mxu0 0.0
    %2149 = vmatpush1.msra.mxu0 0.0
    %2150 = vmatprep.subr.mxu0 0.0
    %2151 = vmatpush1.msra.mxu0 0.0
    %2152 = vmatprep.subr.mxu0 0.0
    %2153 = vmatpush1.msra.mxu0 0.0
    %2154 = vmatprep.subr.mxu0 0.0
    %2155 = vmatpush1.msra.mxu0 0.0
    %2156 = vmatprep.subr.mxu0 0.0
    %2157 = vmatpush1.msra.mxu0 0.0
    %2158 = vmatprep.subr.mxu0 0.0
    %2159 = vmatpush1.msra.mxu0 0.0
    %2160 = vmatprep.subr.mxu0 0.0
    %2161 = vmatpush1.msra.mxu0 0.0
    %2162 = vmatprep.subr.mxu0 0.0
    %2163 = vmatpush1.msra.mxu0 0.0
    %2164 = vmatprep.mubr.f32.mxu0 0.0
    %2165 = vmatmul.mubr.f32.gmra.mrb[0].mxu0 %v2099
    %v2166 = vpop.f32.mrb[0].mxu0
    %v2167 = vadd.f32 0.0, %v2166
    %v2168 = vpop.f32.mrb[0].mxu0
    %v2169 = vadd.f32 0.0, %v2168
    %2170 = vdwg.mxu0
    %2171 = vmatprep.subr.mxu0 %v655
    %2172 = vmatpush1.msra.mxu0 %v654
    %2173 = vmatprep.subr.mxu0 %v659
    %2174 = vmatpush1.msra.mxu0 %v658
    %2175 = vmatprep.subr.mxu0 %v663
    %2176 = vmatpush1.msra.mxu0 %v662
    %2177 = vmatprep.subr.mxu0 %v667
    %2178 = vmatpush1.msra.mxu0 %v666
    %2179 = vmatprep.subr.mxu0 %v671
    %2180 = vmatpush1.msra.mxu0 %v670
    %2181 = vmatprep.subr.mxu0 %v675
    %2182 = vmatpush1.msra.mxu0 %v674
    %2183 = vmatprep.subr.mxu0 %v679
    %2184 = vmatpush1.msra.mxu0 %v678
    %2185 = vmatprep.subr.mxu0 %v683
    %2186 = vmatpush1.msra.mxu0 %v682
    %2187 = vmatprep.subr.mxu0 %v687
    %2188 = vmatpush1.msra.mxu0 %v686
    %2189 = vmatprep.subr.mxu0 %v691
    %2190 = vmatpush1.msra.mxu0 %v690
    %2191 = vmatprep.subr.mxu0 %v695
    %2192 = vmatpush1.msra.mxu0 %v694
    %2193 = vmatprep.subr.mxu0 %v699
    %2194 = vmatpush1.msra.mxu0 %v698
    %2195 = vmatprep.subr.mxu0 %v703
    %2196 = vmatpush1.msra.mxu0 %v702
    %2197 = vmatprep.subr.mxu0 %v707
    %2198 = vmatpush1.msra.mxu0 %v706
    %2199 = vmatprep.subr.mxu0 %v711
    %2200 = vmatpush1.msra.mxu0 %v710
    %2201 = vmatprep.subr.mxu0 %v715
    %2202 = vmatpush1.msra.mxu0 %v714
    %2203 = vmatprep.subr.mxu0 0.0
    %2204 = vmatpush1.msra.mxu0 0.0
    %2205 = vmatprep.subr.mxu0 0.0
    %2206 = vmatpush1.msra.mxu0 0.0
    %2207 = vmatprep.subr.mxu0 0.0
    %2208 = vmatpush1.msra.mxu0 0.0
    %2209 = vmatprep.subr.mxu0 0.0
    %2210 = vmatpush1.msra.mxu0 0.0
    %2211 = vmatprep.subr.mxu0 0.0
    %2212 = vmatpush1.msra.mxu0 0.0
    %2213 = vmatprep.subr.mxu0 0.0
    %2214 = vmatpush1.msra.mxu0 0.0
    %2215 = vmatprep.subr.mxu0 0.0
    %2216 = vmatpush1.msra.mxu0 0.0
    %2217 = vmatprep.subr.mxu0 0.0
    %2218 = vmatpush1.msra.mxu0 0.0
    %2219 = vmatprep.subr.mxu0 0.0
    %2220 = vmatpush1.msra.mxu0 0.0
    %2221 = vmatprep.subr.mxu0 0.0
    %2222 = vmatpush1.msra.mxu0 0.0
    %2223 = vmatprep.subr.mxu0 0.0
    %2224 = vmatpush1.msra.mxu0 0.0
    %2225 = vmatprep.subr.mxu0 0.0
    %2226 = vmatpush1.msra.mxu0 0.0
    %2227 = vmatprep.subr.mxu0 0.0
    %2228 = vmatpush1.msra.mxu0 0.0
    %2229 = vmatprep.subr.mxu0 0.0
    %2230 = vmatpush1.msra.mxu0 0.0
    %2231 = vmatprep.subr.mxu0 0.0
    %2232 = vmatpush1.msra.mxu0 0.0
    %2233 = vmatprep.subr.mxu0 0.0
    %2234 = vmatpush1.msra.mxu0 0.0
    %2235 = vmatprep.mubr.f32.mxu0 0.0
    %2236 = vmatmul.mubr.f32.gmra.mrb[0].mxu0 %v2099
    %v2237 = vpop.f32.mrb[0].mxu0
    %v2238 = vadd.f32 0.0, %v2237
    %v2239 = vpop.f32.mrb[0].mxu0
    %v2240 = vadd.f32 0.0, %v2239
    %2241 = vdwg.mxu0
    %2242 = vmatprep.subr.mxu0 %v589
    %2243 = vmatpush1.msra.mxu0 %v588
    %2244 = vmatprep.subr.mxu0 %v593
    %2245 = vmatpush1.msra.mxu0 %v592
    %2246 = vmatprep.subr.mxu0 %v597
    %2247 = vmatpush1.msra.mxu0 %v596
    %2248 = vmatprep.subr.mxu0 %v601
    %2249 = vmatpush1.msra.mxu0 %v600
    %2250 = vmatprep.subr.mxu0 %v605
    %2251 = vmatpush1.msra.mxu0 %v604
    %2252 = vmatprep.subr.mxu0 %v609
    %2253 = vmatpush1.msra.mxu0 %v608
    %2254 = vmatprep.subr.mxu0 %v613
    %2255 = vmatpush1.msra.mxu0 %v612
    %2256 = vmatprep.subr.mxu0 %v617
    %2257 = vmatpush1.msra.mxu0 %v616
    %2258 = vmatprep.subr.mxu0 %v621
    %2259 = vmatpush1.msra.mxu0 %v620
    %2260 = vmatprep.subr.mxu0 %v625
    %2261 = vmatpush1.msra.mxu0 %v624
    %2262 = vmatprep.subr.mxu0 %v629
    %2263 = vmatpush1.msra.mxu0 %v628
    %2264 = vmatprep.subr.mxu0 %v633
    %2265 = vmatpush1.msra.mxu0 %v632
    %2266 = vmatprep.subr.mxu0 %v637
    %2267 = vmatpush1.msra.mxu0 %v636
    %2268 = vmatprep.subr.mxu0 %v641
    %2269 = vmatpush1.msra.mxu0 %v640
    %2270 = vmatprep.subr.mxu0 %v645
    %2271 = vmatpush1.msra.mxu0 %v644
    %2272 = vmatprep.subr.mxu0 %v649
    %2273 = vmatpush1.msra.mxu0 %v648
    %2274 = vmatprep.subr.mxu0 0.0
    %2275 = vmatpush1.msra.mxu0 0.0
    %2276 = vmatprep.subr.mxu0 0.0
    %2277 = vmatpush1.msra.mxu0 0.0
    %2278 = vmatprep.subr.mxu0 0.0
    %2279 = vmatpush1.msra.mxu0 0.0
    %2280 = vmatprep.subr.mxu0 0.0
    %2281 = vmatpush1.msra.mxu0 0.0
    %2282 = vmatprep.subr.mxu0 0.0
    %2283 = vmatpush1.msra.mxu0 0.0
    %2284 = vmatprep.subr.mxu0 0.0
    %2285 = vmatpush1.msra.mxu0 0.0
    %2286 = vmatprep.subr.mxu0 0.0
    %2287 = vmatpush1.msra.mxu0 0.0
    %2288 = vmatprep.subr.mxu0 0.0
    %2289 = vmatpush1.msra.mxu0 0.0
    %2290 = vmatprep.subr.mxu0 0.0
    %2291 = vmatpush1.msra.mxu0 0.0
    %2292 = vmatprep.subr.mxu0 0.0
    %2293 = vmatpush1.msra.mxu0 0.0
    %2294 = vmatprep.subr.mxu0 0.0
    %2295 = vmatpush1.msra.mxu0 0.0
    %2296 = vmatprep.subr.mxu0 0.0
    %2297 = vmatpush1.msra.mxu0 0.0
    %2298 = vmatprep.subr.mxu0 0.0
    %2299 = vmatpush1.msra.mxu0 0.0
    %2300 = vmatprep.subr.mxu0 0.0
    %2301 = vmatpush1.msra.mxu0 0.0
    %2302 = vmatprep.subr.mxu0 0.0
    %2303 = vmatpush1.msra.mxu0 0.0
    %2304 = vmatprep.subr.mxu0 0.0
    %2305 = vmatpush1.msra.mxu0 0.0
    %2306 = vmatprep.mubr.f32.mxu0 0.0
    %2307 = vmatmul.mubr.f32.gmra.mrb[0].mxu0 %v2096
    %v2308 = vpop.f32.mrb[0].mxu0
    %v2309 = vadd.f32 %v2167, %v2308
    %v2310 = vpop.f32.mrb[0].mxu0
    %v2311 = vadd.f32 %v2169, %v2310
    %2312 = vdwg.mxu0
    %2313 = vmatprep.subr.mxu0 %v591
    %2314 = vmatpush1.msra.mxu0 %v590
    %2315 = vmatprep.subr.mxu0 %v595
    %2316 = vmatpush1.msra.mxu0 %v594
    %2317 = vmatprep.subr.mxu0 %v599
    %2318 = vmatpush1.msra.mxu0 %v598
    %2319 = vmatprep.subr.mxu0 %v603
    %2320 = vmatpush1.msra.mxu0 %v602
    %2321 = vmatprep.subr.mxu0 %v607
    %2322 = vmatpush1.msra.mxu0 %v606
    %2323 = vmatprep.subr.mxu0 %v611
    %2324 = vmatpush1.msra.mxu0 %v610
    %2325 = vmatprep.subr.mxu0 %v615
    %2326 = vmatpush1.msra.mxu0 %v614
    %2327 = vmatprep.subr.mxu0 %v619
    %2328 = vmatpush1.msra.mxu0 %v618
    %2329 = vmatprep.subr.mxu0 %v623
    %2330 = vmatpush1.msra.mxu0 %v622
    %2331 = vmatprep.subr.mxu0 %v627
    %2332 = vmatpush1.msra.mxu0 %v626
    %2333 = vmatprep.subr.mxu0 %v631
    %2334 = vmatpush1.msra.mxu0 %v630
    %2335 = vmatprep.subr.mxu0 %v635
    %2336 = vmatpush1.msra.mxu0 %v634
    %2337 = vmatprep.subr.mxu0 %v639
    %2338 = vmatpush1.msra.mxu0 %v638
    %2339 = vmatprep.subr.mxu0 %v643
    %2340 = vmatpush1.msra.mxu0 %v642
    %2341 = vmatprep.subr.mxu0 %v647
    %2342 = vmatpush1.msra.mxu0 %v646
    %2343 = vmatprep.subr.mxu0 %v651
    %2344 = vmatpush1.msra.mxu0 %v650
    %2345 = vmatprep.subr.mxu0 0.0
    %2346 = vmatpush1.msra.mxu0 0.0
    %2347 = vmatprep.subr.mxu0 0.0
    %2348 = vmatpush1.msra.mxu0 0.0
    %2349 = vmatprep.subr.mxu0 0.0
    %2350 = vmatpush1.msra.mxu0 0.0
    %2351 = vmatprep.subr.mxu0 0.0
    %2352 = vmatpush1.msra.mxu0 0.0
    %2353 = vmatprep.subr.mxu0 0.0
    %2354 = vmatpush1.msra.mxu0 0.0
    %2355 = vmatprep.subr.mxu0 0.0
    %2356 = vmatpush1.msra.mxu0 0.0
    %2357 = vmatprep.subr.mxu0 0.0
    %2358 = vmatpush1.msra.mxu0 0.0
    %2359 = vmatprep.subr.mxu0 0.0
    %2360 = vmatpush1.msra.mxu0 0.0
    %2361 = vmatprep.subr.mxu0 0.0
    %2362 = vmatpush1.msra.mxu0 0.0
    %2363 = vmatprep.subr.mxu0 0.0
    %2364 = vmatpush1.msra.mxu0 0.0
    %2365 = vmatprep.subr.mxu0 0.0
    %2366 = vmatpush1.msra.mxu0 0.0
    %2367 = vmatprep.subr.mxu0 0.0
    %2368 = vmatpush1.msra.mxu0 0.0
    %2369 = vmatprep.subr.mxu0 0.0
    %2370 = vmatpush1.msra.mxu0 0.0
    %2371 = vmatprep.subr.mxu0 0.0
    %2372 = vmatpush1.msra.mxu0 0.0
    %2373 = vmatprep.subr.mxu0 0.0
    %2374 = vmatpush1.msra.mxu0 0.0
    %2375 = vmatprep.subr.mxu0 0.0
    %2376 = vmatpush1.msra.mxu0 0.0
    %2377 = vmatprep.mubr.f32.mxu0 0.0
    %2378 = vmatmul.mubr.f32.gmra.mrb[0].mxu0 %v2096
    %v2379 = vpop.f32.mrb[0].mxu0
    %v2380 = vadd.f32 %v2238, %v2379
    %v2381 = vpop.f32.mrb[0].mxu0
    %v2382 = vadd.f32 %v2240, %v2381
    %2383 = vdwg.mxu0
    %v2384 = vadd.f32 %v2309, %v1203
    %v2385 = vadd.f32 %v2311, %v1207
    %v2386 = vadd.f32 %v2380, %v1211
    %v2387 = vadd.f32 %v2382, %v1215
    %v2388 = vld [vmem:[%s1224] sm:$0xff]
    %v2389 = vxor.u32 %v2384, 2147483648
    %v2390 = vmul.f32 %v2389, 1.442695
    %v2391 = vpow.pop %v2390
    %v2392 = vadd.f32 %v2391, 1.0
    %v2393 = vrcp.pop %v2392
    %v2394 = vmul.f32 1.0, %v2393
    %v2395 = vxor.u32 %v2385, 2147483648
    %v2396 = vmul.f32 %v2395, 1.442695
    %v2397 = vpow.pop %v2396
    %v2398 = vadd.f32 %v2397, 1.0
    %v2399 = vrcp.pop %v2398
    %v2400 = vmul.f32 1.0, %v2399
    %v2401 = vtanh.pop %v2386
    %v2402 = vxor.u32 %v2387, 2147483648
    %v2403 = vmul.f32 %v2402, 1.442695
    %v2404 = vpow.pop %v2403
    %v2405 = vadd.f32 %v2404, 1.0
    %v2406 = vrcp.pop %v2405
    %v2407 = vmul.f32 1.0, %v2406
    %v2408 = vmul.f32 %v2400, %v2388
    %v2409 = vmul.f32 %v2394, %v2401
    %v2410 = vadd.f32 %v2408, %v2409
    %v2411 = vtanh.pop %v2410
    %v2412 = vmul.f32 %v2407, %v2411
    %2413 = vst [vmem:[%s913] sm:$0xff] %v2412
    %2414 = vst [vmem:[%s1224] sm:$0xff] %v2410
    %2415 = vmatprep.subr.mxu0 0.0
    %2416 = vmatpush1.msra.mxu0 %v718
    %2417 = vmatprep.subr.mxu0 0.0
    %2418 = vmatpush1.msra.mxu0 %v719
    %2419 = vmatprep.subr.mxu0 0.0
    %2420 = vmatpush1.msra.mxu0 %v720
    %2421 = vmatprep.subr.mxu0 0.0
    %2422 = vmatpush1.msra.mxu0 %v721
    %2423 = vmatprep.subr.mxu0 0.0
    %2424 = vmatpush1.msra.mxu0 %v722
    %2425 = vmatprep.subr.mxu0 0.0
    %2426 = vmatpush1.msra.mxu0 %v723
    %2427 = vmatprep.subr.mxu0 0.0
    %2428 = vmatpush1.msra.mxu0 %v724
    %2429 = vmatprep.subr.mxu0 0.0
    %2430 = vmatpush1.msra.mxu0 %v725
    %2431 = vmatprep.subr.mxu0 0.0
    %2432 = vmatpush1.msra.mxu0 %v726
    %2433 = vmatprep.subr.mxu0 0.0
    %2434 = vmatpush1.msra.mxu0 %v727
    %2435 = vmatprep.subr.mxu0 0.0
    %2436 = vmatpush1.msra.mxu0 %v728
    %2437 = vmatprep.subr.mxu0 0.0
    %2438 = vmatpush1.msra.mxu0 %v729
    %2439 = vmatprep.subr.mxu0 0.0
    %2440 = vmatpush1.msra.mxu0 %v730
    %2441 = vmatprep.subr.mxu0 0.0
    %2442 = vmatpush1.msra.mxu0 %v731
    %2443 = vmatprep.subr.mxu0 0.0
    %2444 = vmatpush1.msra.mxu0 %v732
    %2445 = vmatprep.subr.mxu0 0.0
    %2446 = vmatpush1.msra.mxu0 %v733
    %2447 = vmatprep.subr.mxu0 0.0
    %2448 = vmatpush1.msra.mxu0 0.0
    %2449 = vmatprep.subr.mxu0 0.0
    %2450 = vmatpush1.msra.mxu0 0.0
    %2451 = vmatprep.subr.mxu0 0.0
    %2452 = vmatpush1.msra.mxu0 0.0
    %2453 = vmatprep.subr.mxu0 0.0
    %2454 = vmatpush1.msra.mxu0 0.0
    %2455 = vmatprep.subr.mxu0 0.0
    %2456 = vmatpush1.msra.mxu0 0.0
    %2457 = vmatprep.subr.mxu0 0.0
    %2458 = vmatpush1.msra.mxu0 0.0
    %2459 = vmatprep.subr.mxu0 0.0
    %2460 = vmatpush1.msra.mxu0 0.0
    %2461 = vmatprep.subr.mxu0 0.0
    %2462 = vmatpush1.msra.mxu0 0.0
    %2463 = vmatprep.subr.mxu0 0.0
    %2464 = vmatpush1.msra.mxu0 0.0
    %2465 = vmatprep.subr.mxu0 0.0
    %2466 = vmatpush1.msra.mxu0 0.0
    %2467 = vmatprep.subr.mxu0 0.0
    %2468 = vmatpush1.msra.mxu0 0.0
    %2469 = vmatprep.subr.mxu0 0.0
    %2470 = vmatpush1.msra.mxu0 0.0
    %2471 = vmatprep.subr.mxu0 0.0
    %2472 = vmatpush1.msra.mxu0 0.0
    %2473 = vmatprep.subr.mxu0 0.0
    %2474 = vmatpush1.msra.mxu0 0.0
    %2475 = vmatprep.subr.mxu0 0.0
    %2476 = vmatpush1.msra.mxu0 0.0
    %2477 = vmatprep.subr.mxu0 0.0
    %2478 = vmatpush1.msra.mxu0 0.0
    %2479 = vmatprep.mubr.f32.mxu0 0.0
    %2480 = vmatmul.mubr.f32.gmra.mrb[0].mxu0 %v2412
    %v2481 = vpop.f32.mrb[0].mxu0
    %v2482 = vadd.f32 %v734, %v2481
    %v2483 = vpop.f32.mrb[0].mxu0
    %2484 = vdwg.mxu0
    %s2485 = scalar_lea.vmem [#allocation3], 16
    %v2486 = vld [vmem:[%s2485] sm:$0xff]
    %v2487 = vmul.f32 %v2482, 0.5
    %v2488 = vmul.f32 %v2487, 1.442695
    %v2489 = vpow.pop %v2488
    %2491 = vrot.lane.b32.xlu0 %v2489, 112
    %v2492 = vpop.permute.xlu0 %2491
    %v2494 = vmul.f32 %v2486, %v2492
    %v2495 = vadd.f32 %v2494, %v2482
    %s2496 = scalar_lea.vmem [#allocation11], 16
    %2497 = vst.msk [vmem:[%s2496] sm:$0xff] %vm97, %v2495
    %2499 = vrot.lane.b32.xlu0 %v2482, 16
    %v2500 = vpop.permute.xlu0 %2499
    %2502 = vst.msk [vmem:[%s2496] sm:$0xff] %vm1337, %v2500
    %v2503 = vld [vmem:[#allocation2 + $0x60] sm:$0xff]
    %v2504 = vld [vmem:[#allocation2 + $0x68] sm:$0xff]
    %v2505 = vld [vmem:[#allocation2 + $0x70] sm:$0xff]
    %v2506 = vld [vmem:[#allocation2 + $0x78] sm:$0xff]
    %v2507 = vld [vmem:[#allocation12] sm:$0xff]
    %2508 = vmatprep.subr.mxu0 %v525
    %2509 = vmatpush1.msra.mxu0 %v524
    %2510 = vmatprep.subr.mxu0 %v529
    %2511 = vmatpush1.msra.mxu0 %v528
    %2512 = vmatprep.subr.mxu0 %v533
    %2513 = vmatpush1.msra.mxu0 %v532
    %2514 = vmatprep.subr.mxu0 %v537
    %2515 = vmatpush1.msra.mxu0 %v536
    %2516 = vmatprep.subr.mxu0 %v541
    %2517 = vmatpush1.msra.mxu0 %v540
    %2518 = vmatprep.subr.mxu0 %v545
    %2519 = vmatpush1.msra.mxu0 %v544
    %2520 = vmatprep.subr.mxu0 %v549
    %2521 = vmatpush1.msra.mxu0 %v548
    %2522 = vmatprep.subr.mxu0 %v553
    %2523 = vmatpush1.msra.mxu0 %v552
    %2524 = vmatprep.subr.mxu0 %v557
    %2525 = vmatpush1.msra.mxu0 %v556
    %2526 = vmatprep.subr.mxu0 %v561
    %2527 = vmatpush1.msra.mxu0 %v560
    %2528 = vmatprep.subr.mxu0 %v565
    %2529 = vmatpush1.msra.mxu0 %v564
    %2530 = vmatprep.subr.mxu0 %v569
    %2531 = vmatpush1.msra.mxu0 %v568
    %2532 = vmatprep.subr.mxu0 %v573
    %2533 = vmatpush1.msra.mxu0 %v572
    %2534 = vmatprep.subr.mxu0 %v577
    %2535 = vmatpush1.msra.mxu0 %v576
    %2536 = vmatprep.subr.mxu0 %v581
    %2537 = vmatpush1.msra.mxu0 %v580
    %2538 = vmatprep.subr.mxu0 %v585
    %2539 = vmatpush1.msra.mxu0 %v584
    %2540 = vmatprep.subr.mxu0 0.0
    %2541 = vmatpush1.msra.mxu0 0.0
    %2542 = vmatprep.subr.mxu0 0.0
    %2543 = vmatpush1.msra.mxu0 0.0
    %2544 = vmatprep.subr.mxu0 0.0
    %2545 = vmatpush1.msra.mxu0 0.0
    %2546 = vmatprep.subr.mxu0 0.0
    %2547 = vmatpush1.msra.mxu0 0.0
    %2548 = vmatprep.subr.mxu0 0.0
    %2549 = vmatpush1.msra.mxu0 0.0
    %2550 = vmatprep.subr.mxu0 0.0
    %2551 = vmatpush1.msra.mxu0 0.0
    %2552 = vmatprep.subr.mxu0 0.0
    %2553 = vmatpush1.msra.mxu0 0.0
    %2554 = vmatprep.subr.mxu0 0.0
    %2555 = vmatpush1.msra.mxu0 0.0
    %2556 = vmatprep.subr.mxu0 0.0
    %2557 = vmatpush1.msra.mxu0 0.0
    %2558 = vmatprep.subr.mxu0 0.0
    %2559 = vmatpush1.msra.mxu0 0.0
    %2560 = vmatprep.subr.mxu0 0.0
    %2561 = vmatpush1.msra.mxu0 0.0
    %2562 = vmatprep.subr.mxu0 0.0
    %2563 = vmatpush1.msra.mxu0 0.0
    %2564 = vmatprep.subr.mxu0 0.0
    %2565 = vmatpush1.msra.mxu0 0.0
    %2566 = vmatprep.subr.mxu0 0.0
    %2567 = vmatpush1.msra.mxu0 0.0
    %2568 = vmatprep.subr.mxu0 0.0
    %2569 = vmatpush1.msra.mxu0 0.0
    %2570 = vmatprep.subr.mxu0 0.0
    %2571 = vmatpush1.msra.mxu0 0.0
    %2572 = vmatprep.mubr.f32.mxu0 0.0
    %2573 = vmatmul.mubr.f32.gmra.mrb[0].mxu0 %v2507
    %v2574 = vpop.f32.mrb[0].mxu0
    %v2575 = vadd.f32 0.0, %v2574
    %v2576 = vpop.f32.mrb[0].mxu0
    %v2577 = vadd.f32 0.0, %v2576
    %2578 = vdwg.mxu0
    %2579 = vmatprep.subr.mxu0 %v527
    %2580 = vmatpush1.msra.mxu0 %v526
    %2581 = vmatprep.subr.mxu0 %v531
    %2582 = vmatpush1.msra.mxu0 %v530
    %2583 = vmatprep.subr.mxu0 %v535
    %2584 = vmatpush1.msra.mxu0 %v534
    %2585 = vmatprep.subr.mxu0 %v539
    %2586 = vmatpush1.msra.mxu0 %v538
    %2587 = vmatprep.subr.mxu0 %v543
    %2588 = vmatpush1.msra.mxu0 %v542
    %2589 = vmatprep.subr.mxu0 %v547
    %2590 = vmatpush1.msra.mxu0 %v546
    %2591 = vmatprep.subr.mxu0 %v551
    %2592 = vmatpush1.msra.mxu0 %v550
    %2593 = vmatprep.subr.mxu0 %v555
    %2594 = vmatpush1.msra.mxu0 %v554
    %2595 = vmatprep.subr.mxu0 %v559
    %2596 = vmatpush1.msra.mxu0 %v558
    %2597 = vmatprep.subr.mxu0 %v563
    %2598 = vmatpush1.msra.mxu0 %v562
    %2599 = vmatprep.subr.mxu0 %v567
    %2600 = vmatpush1.msra.mxu0 %v566
    %2601 = vmatprep.subr.mxu0 %v571
    %2602 = vmatpush1.msra.mxu0 %v570
    %2603 = vmatprep.subr.mxu0 %v575
    %2604 = vmatpush1.msra.mxu0 %v574
    %2605 = vmatprep.subr.mxu0 %v579
    %2606 = vmatpush1.msra.mxu0 %v578
    %2607 = vmatprep.subr.mxu0 %v583
    %2608 = vmatpush1.msra.mxu0 %v582
    %2609 = vmatprep.subr.mxu0 %v587
    %2610 = vmatpush1.msra.mxu0 %v586
    %2611 = vmatprep.subr.mxu0 0.0
    %2612 = vmatpush1.msra.mxu0 0.0
    %2613 = vmatprep.subr.mxu0 0.0
    %2614 = vmatpush1.msra.mxu0 0.0
    %2615 = vmatprep.subr.mxu0 0.0
    %2616 = vmatpush1.msra.mxu0 0.0
    %2617 = vmatprep.subr.mxu0 0.0
    %2618 = vmatpush1.msra.mxu0 0.0
    %2619 = vmatprep.subr.mxu0 0.0
    %2620 = vmatpush1.msra.mxu0 0.0
    %2621 = vmatprep.subr.mxu0 0.0
    %2622 = vmatpush1.msra.mxu0 0.0
    %2623 = vmatprep.subr.mxu0 0.0
    %2624 = vmatpush1.msra.mxu0 0.0
    %2625 = vmatprep.subr.mxu0 0.0
    %2626 = vmatpush1.msra.mxu0 0.0
    %2627 = vmatprep.subr.mxu0 0.0
    %2628 = vmatpush1.msra.mxu0 0.0
    %2629 = vmatprep.subr.mxu0 0.0
    %2630 = vmatpush1.msra.mxu0 0.0
    %2631 = vmatprep.subr.mxu0 0.0
    %2632 = vmatpush1.msra.mxu0 0.0
    %2633 = vmatprep.subr.mxu0 0.0
    %2634 = vmatpush1.msra.mxu0 0.0
    %2635 = vmatprep.subr.mxu0 0.0
    %2636 = vmatpush1.msra.mxu0 0.0
    %2637 = vmatprep.subr.mxu0 0.0
    %2638 = vmatpush1.msra.mxu0 0.0
    %2639 = vmatprep.subr.mxu0 0.0
    %2640 = vmatpush1.msra.mxu0 0.0
    %2641 = vmatprep.subr.mxu0 0.0
    %2642 = vmatpush1.msra.mxu0 0.0
    %2643 = vmatprep.mubr.f32.mxu0 0.0
    %2644 = vmatmul.mubr.f32.gmra.mrb[0].mxu0 %v2507
    %v2645 = vpop.f32.mrb[0].mxu0
    %v2646 = vadd.f32 0.0, %v2645
    %v2647 = vpop.f32.mrb[0].mxu0
    %v2648 = vadd.f32 0.0, %v2647
    %2649 = vdwg.mxu0
    %v2650 = vadd.f32 %v2503, %v2575
    %v2651 = vadd.f32 %v2504, %v2577
    %v2652 = vadd.f32 %v2505, %v2646
    %v2653 = vadd.f32 %v2506, %v2648
    %v2654 = vld [vmem:[#allocation14] sm:$0xff]
    %v2655 = vxor.u32 %v2650, 2147483648
    %v2656 = vmul.f32 %v2655, 1.442695
    %v2657 = vpow.pop %v2656
    %v2658 = vadd.f32 %v2657, 1.0
    %v2659 = vrcp.pop %v2658
    %v2660 = vmul.f32 1.0, %v2659
    %v2661 = vxor.u32 %v2651, 2147483648
    %v2662 = vmul.f32 %v2661, 1.442695
    %v2663 = vpow.pop %v2662
    %v2664 = vadd.f32 %v2663, 1.0
    %v2665 = vrcp.pop %v2664
    %v2666 = vmul.f32 1.0, %v2665
    %v2667 = vtanh.pop %v2652
    %v2668 = vxor.u32 %v2653, 2147483648
    %v2669 = vmul.f32 %v2668, 1.442695
    %v2670 = vpow.pop %v2669
    %v2671 = vadd.f32 %v2670, 1.0
    %v2672 = vrcp.pop %v2671
    %v2673 = vmul.f32 1.0, %v2672
    %v2674 = vmul.f32 %v2666, %v2654
    %v2675 = vmul.f32 %v2660, %v2667
    %v2676 = vadd.f32 %v2674, %v2675
    %v2677 = vtanh.pop %v2676
    %v2678 = vmul.f32 %v2673, %v2677
    %2679 = vst [vmem:[#allocation12] sm:$0xff] %v2678
    %2680 = vst [vmem:[#allocation14] sm:$0xff] %v2676
    %v2681 = vld [vmem:[%s913] sm:$0xff]
    %2682 = vmatprep.subr.mxu0 %v653
    %2683 = vmatpush1.msra.mxu0 %v652
    %2684 = vmatprep.subr.mxu0 %v657
    %2685 = vmatpush1.msra.mxu0 %v656
    %2686 = vmatprep.subr.mxu0 %v661
    %2687 = vmatpush1.msra.mxu0 %v660
    %2688 = vmatprep.subr.mxu0 %v665
    %2689 = vmatpush1.msra.mxu0 %v664
    %2690 = vmatprep.subr.mxu0 %v669
    %2691 = vmatpush1.msra.mxu0 %v668
    %2692 = vmatprep.subr.mxu0 %v673
    %2693 = vmatpush1.msra.mxu0 %v672
    %2694 = vmatprep.subr.mxu0 %v677
    %2695 = vmatpush1.msra.mxu0 %v676
    %2696 = vmatprep.subr.mxu0 %v681
    %2697 = vmatpush1.msra.mxu0 %v680
    %2698 = vmatprep.subr.mxu0 %v685
    %2699 = vmatpush1.msra.mxu0 %v684
    %2700 = vmatprep.subr.mxu0 %v689
    %2701 = vmatpush1.msra.mxu0 %v688
    %2702 = vmatprep.subr.mxu0 %v693
    %2703 = vmatpush1.msra.mxu0 %v692
    %2704 = vmatprep.subr.mxu0 %v697
    %2705 = vmatpush1.msra.mxu0 %v696
    %2706 = vmatprep.subr.mxu0 %v701
    %2707 = vmatpush1.msra.mxu0 %v700
    %2708 = vmatprep.subr.mxu0 %v705
    %2709 = vmatpush1.msra.mxu0 %v704
    %2710 = vmatprep.subr.mxu0 %v709
    %2711 = vmatpush1.msra.mxu0 %v708
    %2712 = vmatprep.subr.mxu0 %v713
    %2713 = vmatpush1.msra.mxu0 %v712
    %2714 = vmatprep.subr.mxu0 0.0
    %2715 = vmatpush1.msra.mxu0 0.0
    %2716 = vmatprep.subr.mxu0 0.0
    %2717 = vmatpush1.msra.mxu0 0.0
    %2718 = vmatprep.subr.mxu0 0.0
    %2719 = vmatpush1.msra.mxu0 0.0
    %2720 = vmatprep.subr.mxu0 0.0
    %2721 = vmatpush1.msra.mxu0 0.0
    %2722 = vmatprep.subr.mxu0 0.0
    %2723 = vmatpush1.msra.mxu0 0.0
    %2724 = vmatprep.subr.mxu0 0.0
    %2725 = vmatpush1.msra.mxu0 0.0
    %2726 = vmatprep.subr.mxu0 0.0
    %2727 = vmatpush1.msra.mxu0 0.0
    %2728 = vmatprep.subr.mxu0 0.0
    %2729 = vmatpush1.msra.mxu0 0.0
    %2730 = vmatprep.subr.mxu0 0.0
    %2731 = vmatpush1.msra.mxu0 0.0
    %2732 = vmatprep.subr.mxu0 0.0
    %2733 = vmatpush1.msra.mxu0 0.0
    %2734 = vmatprep.subr.mxu0 0.0
    %2735 = vmatpush1.msra.mxu0 0.0
    %2736 = vmatprep.subr.mxu0 0.0
    %2737 = vmatpush1.msra.mxu0 0.0
    %2738 = vmatprep.subr.mxu0 0.0
    %2739 = vmatpush1.msra.mxu0 0.0
    %2740 = vmatprep.subr.mxu0 0.0
    %2741 = vmatpush1.msra.mxu0 0.0
    %2742 = vmatprep.subr.mxu0 0.0
    %2743 = vmatpush1.msra.mxu0 0.0
    %2744 = vmatprep.subr.mxu0 0.0
    %2745 = vmatpush1.msra.mxu0 0.0
    %2746 = vmatprep.mubr.f32.mxu0 0.0
    %2747 = vmatmul.mubr.f32.gmra.mrb[0].mxu0 %v2681
    %v2748 = vpop.f32.mrb[0].mxu0
    %v2749 = vadd.f32 0.0, %v2748
    %v2750 = vpop.f32.mrb[0].mxu0
    %v2751 = vadd.f32 0.0, %v2750
    %2752 = vdwg.mxu0
    %2753 = vmatprep.subr.mxu0 %v655
    %2754 = vmatpush1.msra.mxu0 %v654
    %2755 = vmatprep.subr.mxu0 %v659
    %2756 = vmatpush1.msra.mxu0 %v658
    %2757 = vmatprep.subr.mxu0 %v663
    %2758 = vmatpush1.msra.mxu0 %v662
    %2759 = vmatprep.subr.mxu0 %v667
    %2760 = vmatpush1.msra.mxu0 %v666
    %2761 = vmatprep.subr.mxu0 %v671
    %2762 = vmatpush1.msra.mxu0 %v670
    %2763 = vmatprep.subr.mxu0 %v675
    %2764 = vmatpush1.msra.mxu0 %v674
    %2765 = vmatprep.subr.mxu0 %v679
    %2766 = vmatpush1.msra.mxu0 %v678
    %2767 = vmatprep.subr.mxu0 %v683
    %2768 = vmatpush1.msra.mxu0 %v682
    %2769 = vmatprep.subr.mxu0 %v687
    %2770 = vmatpush1.msra.mxu0 %v686
    %2771 = vmatprep.subr.mxu0 %v691
    %2772 = vmatpush1.msra.mxu0 %v690
    %2773 = vmatprep.subr.mxu0 %v695
    %2774 = vmatpush1.msra.mxu0 %v694
    %2775 = vmatprep.subr.mxu0 %v699
    %2776 = vmatpush1.msra.mxu0 %v698
    %2777 = vmatprep.subr.mxu0 %v703
    %2778 = vmatpush1.msra.mxu0 %v702
    %2779 = vmatprep.subr.mxu0 %v707
    %2780 = vmatpush1.msra.mxu0 %v706
    %2781 = vmatprep.subr.mxu0 %v711
    %2782 = vmatpush1.msra.mxu0 %v710
    %2783 = vmatprep.subr.mxu0 %v715
    %2784 = vmatpush1.msra.mxu0 %v714
    %2785 = vmatprep.subr.mxu0 0.0
    %2786 = vmatpush1.msra.mxu0 0.0
    %2787 = vmatprep.subr.mxu0 0.0
    %2788 = vmatpush1.msra.mxu0 0.0
    %2789 = vmatprep.subr.mxu0 0.0
    %2790 = vmatpush1.msra.mxu0 0.0
    %2791 = vmatprep.subr.mxu0 0.0
    %2792 = vmatpush1.msra.mxu0 0.0
    %2793 = vmatprep.subr.mxu0 0.0
    %2794 = vmatpush1.msra.mxu0 0.0
    %2795 = vmatprep.subr.mxu0 0.0
    %2796 = vmatpush1.msra.mxu0 0.0
    %2797 = vmatprep.subr.mxu0 0.0
    %2798 = vmatpush1.msra.mxu0 0.0
    %2799 = vmatprep.subr.mxu0 0.0
    %2800 = vmatpush1.msra.mxu0 0.0
    %2801 = vmatprep.subr.mxu0 0.0
    %2802 = vmatpush1.msra.mxu0 0.0
    %2803 = vmatprep.subr.mxu0 0.0
    %2804 = vmatpush1.msra.mxu0 0.0
    %2805 = vmatprep.subr.mxu0 0.0
    %2806 = vmatpush1.msra.mxu0 0.0
    %2807 = vmatprep.subr.mxu0 0.0
    %2808 = vmatpush1.msra.mxu0 0.0
    %2809 = vmatprep.subr.mxu0 0.0
    %2810 = vmatpush1.msra.mxu0 0.0
    %2811 = vmatprep.subr.mxu0 0.0
    %2812 = vmatpush1.msra.mxu0 0.0
    %2813 = vmatprep.subr.mxu0 0.0
    %2814 = vmatpush1.msra.mxu0 0.0
    %2815 = vmatprep.subr.mxu0 0.0
    %2816 = vmatpush1.msra.mxu0 0.0
    %2817 = vmatprep.mubr.f32.mxu0 0.0
    %2818 = vmatmul.mubr.f32.gmra.mrb[0].mxu0 %v2681
    %v2819 = vpop.f32.mrb[0].mxu0
    %v2820 = vadd.f32 0.0, %v2819
    %v2821 = vpop.f32.mrb[0].mxu0
    %v2822 = vadd.f32 0.0, %v2821
    %2823 = vdwg.mxu0
    %2824 = vmatprep.subr.mxu0 %v589
    %2825 = vmatpush1.msra.mxu0 %v588
    %2826 = vmatprep.subr.mxu0 %v593
    %2827 = vmatpush1.msra.mxu0 %v592
    %2828 = vmatprep.subr.mxu0 %v597
    %2829 = vmatpush1.msra.mxu0 %v596
    %2830 = vmatprep.subr.mxu0 %v601
    %2831 = vmatpush1.msra.mxu0 %v600
    %2832 = vmatprep.subr.mxu0 %v605
    %2833 = vmatpush1.msra.mxu0 %v604
    %2834 = vmatprep.subr.mxu0 %v609
    %2835 = vmatpush1.msra.mxu0 %v608
    %2836 = vmatprep.subr.mxu0 %v613
    %2837 = vmatpush1.msra.mxu0 %v612
    %2838 = vmatprep.subr.mxu0 %v617
    %2839 = vmatpush1.msra.mxu0 %v616
    %2840 = vmatprep.subr.mxu0 %v621
    %2841 = vmatpush1.msra.mxu0 %v620
    %2842 = vmatprep.subr.mxu0 %v625
    %2843 = vmatpush1.msra.mxu0 %v624
    %2844 = vmatprep.subr.mxu0 %v629
    %2845 = vmatpush1.msra.mxu0 %v628
    %2846 = vmatprep.subr.mxu0 %v633
    %2847 = vmatpush1.msra.mxu0 %v632
    %2848 = vmatprep.subr.mxu0 %v637
    %2849 = vmatpush1.msra.mxu0 %v636
    %2850 = vmatprep.subr.mxu0 %v641
    %2851 = vmatpush1.msra.mxu0 %v640
    %2852 = vmatprep.subr.mxu0 %v645
    %2853 = vmatpush1.msra.mxu0 %v644
    %2854 = vmatprep.subr.mxu0 %v649
    %2855 = vmatpush1.msra.mxu0 %v648
    %2856 = vmatprep.subr.mxu0 0.0
    %2857 = vmatpush1.msra.mxu0 0.0
    %2858 = vmatprep.subr.mxu0 0.0
    %2859 = vmatpush1.msra.mxu0 0.0
    %2860 = vmatprep.subr.mxu0 0.0
    %2861 = vmatpush1.msra.mxu0 0.0
    %2862 = vmatprep.subr.mxu0 0.0
    %2863 = vmatpush1.msra.mxu0 0.0
    %2864 = vmatprep.subr.mxu0 0.0
    %2865 = vmatpush1.msra.mxu0 0.0
    %2866 = vmatprep.subr.mxu0 0.0
    %2867 = vmatpush1.msra.mxu0 0.0
    %2868 = vmatprep.subr.mxu0 0.0
    %2869 = vmatpush1.msra.mxu0 0.0
    %2870 = vmatprep.subr.mxu0 0.0
    %2871 = vmatpush1.msra.mxu0 0.0
    %2872 = vmatprep.subr.mxu0 0.0
    %2873 = vmatpush1.msra.mxu0 0.0
    %2874 = vmatprep.subr.mxu0 0.0
    %2875 = vmatpush1.msra.mxu0 0.0
    %2876 = vmatprep.subr.mxu0 0.0
    %2877 = vmatpush1.msra.mxu0 0.0
    %2878 = vmatprep.subr.mxu0 0.0
    %2879 = vmatpush1.msra.mxu0 0.0
    %2880 = vmatprep.subr.mxu0 0.0
    %2881 = vmatpush1.msra.mxu0 0.0
    %2882 = vmatprep.subr.mxu0 0.0
    %2883 = vmatpush1.msra.mxu0 0.0
    %2884 = vmatprep.subr.mxu0 0.0
    %2885 = vmatpush1.msra.mxu0 0.0
    %2886 = vmatprep.subr.mxu0 0.0
    %2887 = vmatpush1.msra.mxu0 0.0
    %2888 = vmatprep.mubr.f32.mxu0 0.0
    %2889 = vmatmul.mubr.f32.gmra.mrb[0].mxu0 %v2678
    %v2890 = vpop.f32.mrb[0].mxu0
    %v2891 = vadd.f32 %v2749, %v2890
    %v2892 = vpop.f32.mrb[0].mxu0
    %v2893 = vadd.f32 %v2751, %v2892
    %2894 = vdwg.mxu0
    %2895 = vmatprep.subr.mxu0 %v591
    %2896 = vmatpush1.msra.mxu0 %v590
    %2897 = vmatprep.subr.mxu0 %v595
    %2898 = vmatpush1.msra.mxu0 %v594
    %2899 = vmatprep.subr.mxu0 %v599
    %2900 = vmatpush1.msra.mxu0 %v598
    %2901 = vmatprep.subr.mxu0 %v603
    %2902 = vmatpush1.msra.mxu0 %v602
    %2903 = vmatprep.subr.mxu0 %v607
    %2904 = vmatpush1.msra.mxu0 %v606
    %2905 = vmatprep.subr.mxu0 %v611
    %2906 = vmatpush1.msra.mxu0 %v610
    %2907 = vmatprep.subr.mxu0 %v615
    %2908 = vmatpush1.msra.mxu0 %v614
    %2909 = vmatprep.subr.mxu0 %v619
    %2910 = vmatpush1.msra.mxu0 %v618
    %2911 = vmatprep.subr.mxu0 %v623
    %2912 = vmatpush1.msra.mxu0 %v622
    %2913 = vmatprep.subr.mxu0 %v627
    %2914 = vmatpush1.msra.mxu0 %v626
    %2915 = vmatprep.subr.mxu0 %v631
    %2916 = vmatpush1.msra.mxu0 %v630
    %2917 = vmatprep.subr.mxu0 %v635
    %2918 = vmatpush1.msra.mxu0 %v634
    %2919 = vmatprep.subr.mxu0 %v639
    %2920 = vmatpush1.msra.mxu0 %v638
    %2921 = vmatprep.subr.mxu0 %v643
    %2922 = vmatpush1.msra.mxu0 %v642
    %2923 = vmatprep.subr.mxu0 %v647
    %2924 = vmatpush1.msra.mxu0 %v646
    %2925 = vmatprep.subr.mxu0 %v651
    %2926 = vmatpush1.msra.mxu0 %v650
    %2927 = vmatprep.subr.mxu0 0.0
    %2928 = vmatpush1.msra.mxu0 0.0
    %2929 = vmatprep.subr.mxu0 0.0
    %2930 = vmatpush1.msra.mxu0 0.0
    %2931 = vmatprep.subr.mxu0 0.0
    %2932 = vmatpush1.msra.mxu0 0.0
    %2933 = vmatprep.subr.mxu0 0.0
    %2934 = vmatpush1.msra.mxu0 0.0
    %2935 = vmatprep.subr.mxu0 0.0
    %2936 = vmatpush1.msra.mxu0 0.0
    %2937 = vmatprep.subr.mxu0 0.0
    %2938 = vmatpush1.msra.mxu0 0.0
    %2939 = vmatprep.subr.mxu0 0.0
    %2940 = vmatpush1.msra.mxu0 0.0
    %2941 = vmatprep.subr.mxu0 0.0
    %2942 = vmatpush1.msra.mxu0 0.0
    %2943 = vmatprep.subr.mxu0 0.0
    %2944 = vmatpush1.msra.mxu0 0.0
    %2945 = vmatprep.subr.mxu0 0.0
    %2946 = vmatpush1.msra.mxu0 0.0
    %2947 = vmatprep.subr.mxu0 0.0
    %2948 = vmatpush1.msra.mxu0 0.0
    %2949 = vmatprep.subr.mxu0 0.0
    %2950 = vmatpush1.msra.mxu0 0.0
    %2951 = vmatprep.subr.mxu0 0.0
    %2952 = vmatpush1.msra.mxu0 0.0
    %2953 = vmatprep.subr.mxu0 0.0
    %2954 = vmatpush1.msra.mxu0 0.0
    %2955 = vmatprep.subr.mxu0 0.0
    %2956 = vmatpush1.msra.mxu0 0.0
    %2957 = vmatprep.subr.mxu0 0.0
    %2958 = vmatpush1.msra.mxu0 0.0
    %2959 = vmatprep.mubr.f32.mxu0 0.0
    %2960 = vmatmul.mubr.f32.gmra.mrb[0].mxu0 %v2678
    %v2961 = vpop.f32.mrb[0].mxu0
    %v2962 = vadd.f32 %v2820, %v2961
    %v2963 = vpop.f32.mrb[0].mxu0
    %v2964 = vadd.f32 %v2822, %v2963
    %2965 = vdwg.mxu0
    %v2966 = vadd.f32 %v2891, %v1203
    %v2967 = vadd.f32 %v2893, %v1207
    %v2968 = vadd.f32 %v2962, %v1211
    %v2969 = vadd.f32 %v2964, %v1215
    %v2970 = vld [vmem:[%s1224] sm:$0xff]
    %v2971 = vxor.u32 %v2966, 2147483648
    %v2972 = vmul.f32 %v2971, 1.442695
    %v2973 = vpow.pop %v2972
    %v2974 = vadd.f32 %v2973, 1.0
    %v2975 = vrcp.pop %v2974
    %v2976 = vmul.f32 1.0, %v2975
    %v2977 = vxor.u32 %v2967, 2147483648
    %v2978 = vmul.f32 %v2977, 1.442695
    %v2979 = vpow.pop %v2978
    %v2980 = vadd.f32 %v2979, 1.0
    %v2981 = vrcp.pop %v2980
    %v2982 = vmul.f32 1.0, %v2981
    %v2983 = vtanh.pop %v2968
    %v2984 = vxor.u32 %v2969, 2147483648
    %v2985 = vmul.f32 %v2984, 1.442695
    %v2986 = vpow.pop %v2985
    %v2987 = vadd.f32 %v2986, 1.0
    %v2988 = vrcp.pop %v2987
    %v2989 = vmul.f32 1.0, %v2988
    %v2990 = vmul.f32 %v2982, %v2970
    %v2991 = vmul.f32 %v2976, %v2983
    %v2992 = vadd.f32 %v2990, %v2991
    %v2993 = vtanh.pop %v2992
    %v2994 = vmul.f32 %v2989, %v2993
    %2995 = vst [vmem:[%s913] sm:$0xff] %v2994
    %2996 = vst [vmem:[%s1224] sm:$0xff] %v2992
    %2997 = vmatprep.subr.mxu0 0.0
    %2998 = vmatpush1.msra.mxu0 %v718
    %2999 = vmatprep.subr.mxu0 0.0
    %3000 = vmatpush1.msra.mxu0 %v719
    %3001 = vmatprep.subr.mxu0 0.0
    %3002 = vmatpush1.msra.mxu0 %v720
    %3003 = vmatprep.subr.mxu0 0.0
    %3004 = vmatpush1.msra.mxu0 %v721
    %3005 = vmatprep.subr.mxu0 0.0
    %3006 = vmatpush1.msra.mxu0 %v722
    %3007 = vmatprep.subr.mxu0 0.0
    %3008 = vmatpush1.msra.mxu0 %v723
    %3009 = vmatprep.subr.mxu0 0.0
    %3010 = vmatpush1.msra.mxu0 %v724
    %3011 = vmatprep.subr.mxu0 0.0
    %3012 = vmatpush1.msra.mxu0 %v725
    %3013 = vmatprep.subr.mxu0 0.0
    %3014 = vmatpush1.msra.mxu0 %v726
    %3015 = vmatprep.subr.mxu0 0.0
    %3016 = vmatpush1.msra.mxu0 %v727
    %3017 = vmatprep.subr.mxu0 0.0
    %3018 = vmatpush1.msra.mxu0 %v728
    %3019 = vmatprep.subr.mxu0 0.0
    %3020 = vmatpush1.msra.mxu0 %v729
    %3021 = vmatprep.subr.mxu0 0.0
    %3022 = vmatpush1.msra.mxu0 %v730
    %3023 = vmatprep.subr.mxu0 0.0
    %3024 = vmatpush1.msra.mxu0 %v731
    %3025 = vmatprep.subr.mxu0 0.0
    %3026 = vmatpush1.msra.mxu0 %v732
    %3027 = vmatprep.subr.mxu0 0.0
    %3028 = vmatpush1.msra.mxu0 %v733
    %3029 = vmatprep.subr.mxu0 0.0
    %3030 = vmatpush1.msra.mxu0 0.0
    %3031 = vmatprep.subr.mxu0 0.0
    %3032 = vmatpush1.msra.mxu0 0.0
    %3033 = vmatprep.subr.mxu0 0.0
    %3034 = vmatpush1.msra.mxu0 0.0
    %3035 = vmatprep.subr.mxu0 0.0
    %3036 = vmatpush1.msra.mxu0 0.0
    %3037 = vmatprep.subr.mxu0 0.0
    %3038 = vmatpush1.msra.mxu0 0.0
    %3039 = vmatprep.subr.mxu0 0.0
    %3040 = vmatpush1.msra.mxu0 0.0
    %3041 = vmatprep.subr.mxu0 0.0
    %3042 = vmatpush1.msra.mxu0 0.0
    %3043 = vmatprep.subr.mxu0 0.0
    %3044 = vmatpush1.msra.mxu0 0.0
    %3045 = vmatprep.subr.mxu0 0.0
    %3046 = vmatpush1.msra.mxu0 0.0
    %3047 = vmatprep.subr.mxu0 0.0
    %3048 = vmatpush1.msra.mxu0 0.0
    %3049 = vmatprep.subr.mxu0 0.0
    %3050 = vmatpush1.msra.mxu0 0.0
    %3051 = vmatprep.subr.mxu0 0.0
    %3052 = vmatpush1.msra.mxu0 0.0
    %3053 = vmatprep.subr.mxu0 0.0
    %3054 = vmatpush1.msra.mxu0 0.0
    %3055 = vmatprep.subr.mxu0 0.0
    %3056 = vmatpush1.msra.mxu0 0.0
    %3057 = vmatprep.subr.mxu0 0.0
    %3058 = vmatpush1.msra.mxu0 0.0
    %3059 = vmatprep.subr.mxu0 0.0
    %3060 = vmatpush1.msra.mxu0 0.0
    %3061 = vmatprep.mubr.f32.mxu0 0.0
    %3062 = vmatmul.mubr.f32.gmra.mrb[0].mxu0 %v2994
    %v3063 = vpop.f32.mrb[0].mxu0
    %v3064 = vadd.f32 %v734, %v3063
    %v3065 = vpop.f32.mrb[0].mxu0
    %3066 = vdwg.mxu0
    %s3067 = scalar_lea.vmem [#allocation3], 24
    %v3068 = vld [vmem:[%s3067] sm:$0xff]
    %v3069 = vmul.f32 %v3064, 0.5
    %v3070 = vmul.f32 %v3069, 1.442695
    %v3071 = vpow.pop %v3070
    %3073 = vrot.lane.b32.xlu0 %v3071, 112
    %v3074 = vpop.permute.xlu0 %3073
    %v3076 = vmul.f32 %v3068, %v3074
    %v3077 = vadd.f32 %v3076, %v3064
    %s3078 = scalar_lea.vmem [#allocation11], 24
    %3079 = vst.msk [vmem:[%s3078] sm:$0xff] %vm97, %v3077
    %3081 = vrot.lane.b32.xlu0 %v3064, 16
    %v3082 = vpop.permute.xlu0 %3081
    %3084 = vst.msk [vmem:[%s3078] sm:$0xff] %vm1337, %v3082
    %v3085 = vld [vmem:[#allocation2 + $0x80] sm:$0xff]
    %v3086 = vld [vmem:[#allocation2 + $0x88] sm:$0xff]
    %v3087 = vld [vmem:[#allocation2 + $0x90] sm:$0xff]
    %v3088 = vld [vmem:[#allocation2 + $0x98] sm:$0xff]
    %v3089 = vld [vmem:[#allocation12] sm:$0xff]
    %3090 = vmatprep.subr.mxu0 %v525
    %3091 = vmatpush1.msra.mxu0 %v524
    %3092 = vmatprep.subr.mxu0 %v529
    %3093 = vmatpush1.msra.mxu0 %v528
    %3094 = vmatprep.subr.mxu0 %v533
    %3095 = vmatpush1.msra.mxu0 %v532
    %3096 = vmatprep.subr.mxu0 %v537
    %3097 = vmatpush1.msra.mxu0 %v536
    %3098 = vmatprep.subr.mxu0 %v541
    %3099 = vmatpush1.msra.mxu0 %v540
    %3100 = vmatprep.subr.mxu0 %v545
    %3101 = vmatpush1.msra.mxu0 %v544
    %3102 = vmatprep.subr.mxu0 %v549
    %3103 = vmatpush1.msra.mxu0 %v548
    %3104 = vmatprep.subr.mxu0 %v553
    %3105 = vmatpush1.msra.mxu0 %v552
    %3106 = vmatprep.subr.mxu0 %v557
    %3107 = vmatpush1.msra.mxu0 %v556
    %3108 = vmatprep.subr.mxu0 %v561
    %3109 = vmatpush1.msra.mxu0 %v560
    %3110 = vmatprep.subr.mxu0 %v565
    %3111 = vmatpush1.msra.mxu0 %v564
    %3112 = vmatprep.subr.mxu0 %v569
    %3113 = vmatpush1.msra.mxu0 %v568
    %3114 = vmatprep.subr.mxu0 %v573
    %3115 = vmatpush1.msra.mxu0 %v572
    %3116 = vmatprep.subr.mxu0 %v577
    %3117 = vmatpush1.msra.mxu0 %v576
    %3118 = vmatprep.subr.mxu0 %v581
    %3119 = vmatpush1.msra.mxu0 %v580
    %3120 = vmatprep.subr.mxu0 %v585
    %3121 = vmatpush1.msra.mxu0 %v584
    %3122 = vmatprep.subr.mxu0 0.0
    %3123 = vmatpush1.msra.mxu0 0.0
    %3124 = vmatprep.subr.mxu0 0.0
    %3125 = vmatpush1.msra.mxu0 0.0
    %3126 = vmatprep.subr.mxu0 0.0
    %3127 = vmatpush1.msra.mxu0 0.0
    %3128 = vmatprep.subr.mxu0 0.0
    %3129 = vmatpush1.msra.mxu0 0.0
    %3130 = vmatprep.subr.mxu0 0.0
    %3131 = vmatpush1.msra.mxu0 0.0
    %3132 = vmatprep.subr.mxu0 0.0
    %3133 = vmatpush1.msra.mxu0 0.0
    %3134 = vmatprep.subr.mxu0 0.0
    %3135 = vmatpush1.msra.mxu0 0.0
    %3136 = vmatprep.subr.mxu0 0.0
    %3137 = vmatpush1.msra.mxu0 0.0
    %3138 = vmatprep.subr.mxu0 0.0
    %3139 = vmatpush1.msra.mxu0 0.0
    %3140 = vmatprep.subr.mxu0 0.0
    %3141 = vmatpush1.msra.mxu0 0.0
    %3142 = vmatprep.subr.mxu0 0.0
    %3143 = vmatpush1.msra.mxu0 0.0
    %3144 = vmatprep.subr.mxu0 0.0
    %3145 = vmatpush1.msra.mxu0 0.0
    %3146 = vmatprep.subr.mxu0 0.0
    %3147 = vmatpush1.msra.mxu0 0.0
    %3148 = vmatprep.subr.mxu0 0.0
    %3149 = vmatpush1.msra.mxu0 0.0
    %3150 = vmatprep.subr.mxu0 0.0
    %3151 = vmatpush1.msra.mxu0 0.0
    %3152 = vmatprep.subr.mxu0 0.0
    %3153 = vmatpush1.msra.mxu0 0.0
    %3154 = vmatprep.mubr.f32.mxu0 0.0
    %3155 = vmatmul.mubr.f32.gmra.mrb[0].mxu0 %v3089
    %v3156 = vpop.f32.mrb[0].mxu0
    %v3157 = vadd.f32 0.0, %v3156
    %v3158 = vpop.f32.mrb[0].mxu0
    %v3159 = vadd.f32 0.0, %v3158
    %3160 = vdwg.mxu0
    %3161 = vmatprep.subr.mxu0 %v527
    %3162 = vmatpush1.msra.mxu0 %v526
    %3163 = vmatprep.subr.mxu0 %v531
    %3164 = vmatpush1.msra.mxu0 %v530
    %3165 = vmatprep.subr.mxu0 %v535
    %3166 = vmatpush1.msra.mxu0 %v534
    %3167 = vmatprep.subr.mxu0 %v539
    %3168 = vmatpush1.msra.mxu0 %v538
    %3169 = vmatprep.subr.mxu0 %v543
    %3170 = vmatpush1.msra.mxu0 %v542
    %3171 = vmatprep.subr.mxu0 %v547
    %3172 = vmatpush1.msra.mxu0 %v546
    %3173 = vmatprep.subr.mxu0 %v551
    %3174 = vmatpush1.msra.mxu0 %v550
    %3175 = vmatprep.subr.mxu0 %v555
    %3176 = vmatpush1.msra.mxu0 %v554
    %3177 = vmatprep.subr.mxu0 %v559
    %3178 = vmatpush1.msra.mxu0 %v558
    %3179 = vmatprep.subr.mxu0 %v563
    %3180 = vmatpush1.msra.mxu0 %v562
    %3181 = vmatprep.subr.mxu0 %v567
    %3182 = vmatpush1.msra.mxu0 %v566
    %3183 = vmatprep.subr.mxu0 %v571
    %3184 = vmatpush1.msra.mxu0 %v570
    %3185 = vmatprep.subr.mxu0 %v575
    %3186 = vmatpush1.msra.mxu0 %v574
    %3187 = vmatprep.subr.mxu0 %v579
    %3188 = vmatpush1.msra.mxu0 %v578
    %3189 = vmatprep.subr.mxu0 %v583
    %3190 = vmatpush1.msra.mxu0 %v582
    %3191 = vmatprep.subr.mxu0 %v587
    %3192 = vmatpush1.msra.mxu0 %v586
    %3193 = vmatprep.subr.mxu0 0.0
    %3194 = vmatpush1.msra.mxu0 0.0
    %3195 = vmatprep.subr.mxu0 0.0
    %3196 = vmatpush1.msra.mxu0 0.0
    %3197 = vmatprep.subr.mxu0 0.0
    %3198 = vmatpush1.msra.mxu0 0.0
    %3199 = vmatprep.subr.mxu0 0.0
    %3200 = vmatpush1.msra.mxu0 0.0
    %3201 = vmatprep.subr.mxu0 0.0
    %3202 = vmatpush1.msra.mxu0 0.0
    %3203 = vmatprep.subr.mxu0 0.0
    %3204 = vmatpush1.msra.mxu0 0.0
    %3205 = vmatprep.subr.mxu0 0.0
    %3206 = vmatpush1.msra.mxu0 0.0
    %3207 = vmatprep.subr.mxu0 0.0
    %3208 = vmatpush1.msra.mxu0 0.0
    %3209 = vmatprep.subr.mxu0 0.0
    %3210 = vmatpush1.msra.mxu0 0.0
    %3211 = vmatprep.subr.mxu0 0.0
    %3212 = vmatpush1.msra.mxu0 0.0
    %3213 = vmatprep.subr.mxu0 0.0
    %3214 = vmatpush1.msra.mxu0 0.0
    %3215 = vmatprep.subr.mxu0 0.0
    %3216 = vmatpush1.msra.mxu0 0.0
    %3217 = vmatprep.subr.mxu0 0.0
    %3218 = vmatpush1.msra.mxu0 0.0
    %3219 = vmatprep.subr.mxu0 0.0
    %3220 = vmatpush1.msra.mxu0 0.0
    %3221 = vmatprep.subr.mxu0 0.0
    %3222 = vmatpush1.msra.mxu0 0.0
    %3223 = vmatprep.subr.mxu0 0.0
    %3224 = vmatpush1.msra.mxu0 0.0
    %3225 = vmatprep.mubr.f32.mxu0 0.0
    %3226 = vmatmul.mubr.f32.gmra.mrb[0].mxu0 %v3089
    %v3227 = vpop.f32.mrb[0].mxu0
    %v3228 = vadd.f32 0.0, %v3227
    %v3229 = vpop.f32.mrb[0].mxu0
    %v3230 = vadd.f32 0.0, %v3229
    %3231 = vdwg.mxu0
    %v3232 = vadd.f32 %v3085, %v3157
    %v3233 = vadd.f32 %v3086, %v3159
    %v3234 = vadd.f32 %v3087, %v3228
    %v3235 = vadd.f32 %v3088, %v3230
    %v3236 = vld [vmem:[#allocation14] sm:$0xff]
    %v3237 = vxor.u32 %v3232, 2147483648
    %v3238 = vmul.f32 %v3237, 1.442695
    %v3239 = vpow.pop %v3238
    %v3240 = vadd.f32 %v3239, 1.0
    %v3241 = vrcp.pop %v3240
    %v3242 = vmul.f32 1.0, %v3241
    %v3243 = vxor.u32 %v3233, 2147483648
    %v3244 = vmul.f32 %v3243, 1.442695
    %v3245 = vpow.pop %v3244
    %v3246 = vadd.f32 %v3245, 1.0
    %v3247 = vrcp.pop %v3246
    %v3248 = vmul.f32 1.0, %v3247
    %v3249 = vtanh.pop %v3234
    %v3250 = vxor.u32 %v3235, 2147483648
    %v3251 = vmul.f32 %v3250, 1.442695
    %v3252 = vpow.pop %v3251
    %v3253 = vadd.f32 %v3252, 1.0
    %v3254 = vrcp.pop %v3253
    %v3255 = vmul.f32 1.0, %v3254
    %v3256 = vmul.f32 %v3248, %v3236
    %v3257 = vmul.f32 %v3242, %v3249
    %v3258 = vadd.f32 %v3256, %v3257
    %v3259 = vtanh.pop %v3258
    %v3260 = vmul.f32 %v3255, %v3259
    %3261 = vst [vmem:[#allocation12] sm:$0xff] %v3260
    %3262 = vst [vmem:[#allocation14] sm:$0xff] %v3258
    %v3263 = vld [vmem:[%s913] sm:$0xff]
    %3264 = vmatprep.subr.mxu0 %v653
    %3265 = vmatpush1.msra.mxu0 %v652
    %3266 = vmatprep.subr.mxu0 %v657
    %3267 = vmatpush1.msra.mxu0 %v656
    %3268 = vmatprep.subr.mxu0 %v661
    %3269 = vmatpush1.msra.mxu0 %v660
    %3270 = vmatprep.subr.mxu0 %v665
    %3271 = vmatpush1.msra.mxu0 %v664
    %3272 = vmatprep.subr.mxu0 %v669
    %3273 = vmatpush1.msra.mxu0 %v668
    %3274 = vmatprep.subr.mxu0 %v673
    %3275 = vmatpush1.msra.mxu0 %v672
    %3276 = vmatprep.subr.mxu0 %v677
    %3277 = vmatpush1.msra.mxu0 %v676
    %3278 = vmatprep.subr.mxu0 %v681
    %3279 = vmatpush1.msra.mxu0 %v680
    %3280 = vmatprep.subr.mxu0 %v685
    %3281 = vmatpush1.msra.mxu0 %v684
    %3282 = vmatprep.subr.mxu0 %v689
    %3283 = vmatpush1.msra.mxu0 %v688
    %3284 = vmatprep.subr.mxu0 %v693
    %3285 = vmatpush1.msra.mxu0 %v692
    %3286 = vmatprep.subr.mxu0 %v697
    %3287 = vmatpush1.msra.mxu0 %v696
    %3288 = vmatprep.subr.mxu0 %v701
    %3289 = vmatpush1.msra.mxu0 %v700
    %3290 = vmatprep.subr.mxu0 %v705
    %3291 = vmatpush1.msra.mxu0 %v704
    %3292 = vmatprep.subr.mxu0 %v709
    %3293 = vmatpush1.msra.mxu0 %v708
    %3294 = vmatprep.subr.mxu0 %v713
    %3295 = vmatpush1.msra.mxu0 %v712
    %3296 = vmatprep.subr.mxu0 0.0
    %3297 = vmatpush1.msra.mxu0 0.0
    %3298 = vmatprep.subr.mxu0 0.0
    %3299 = vmatpush1.msra.mxu0 0.0
    %3300 = vmatprep.subr.mxu0 0.0
    %3301 = vmatpush1.msra.mxu0 0.0
    %3302 = vmatprep.subr.mxu0 0.0
    %3303 = vmatpush1.msra.mxu0 0.0
    %3304 = vmatprep.subr.mxu0 0.0
    %3305 = vmatpush1.msra.mxu0 0.0
    %3306 = vmatprep.subr.mxu0 0.0
    %3307 = vmatpush1.msra.mxu0 0.0
    %3308 = vmatprep.subr.mxu0 0.0
    %3309 = vmatpush1.msra.mxu0 0.0
    %3310 = vmatprep.subr.mxu0 0.0
    %3311 = vmatpush1.msra.mxu0 0.0
    %3312 = vmatprep.subr.mxu0 0.0
    %3313 = vmatpush1.msra.mxu0 0.0
    %3314 = vmatprep.subr.mxu0 0.0
    %3315 = vmatpush1.msra.mxu0 0.0
    %3316 = vmatprep.subr.mxu0 0.0
    %3317 = vmatpush1.msra.mxu0 0.0
    %3318 = vmatprep.subr.mxu0 0.0
    %3319 = vmatpush1.msra.mxu0 0.0
    %3320 = vmatprep.subr.mxu0 0.0
    %3321 = vmatpush1.msra.mxu0 0.0
    %3322 = vmatprep.subr.mxu0 0.0
    %3323 = vmatpush1.msra.mxu0 0.0
    %3324 = vmatprep.subr.mxu0 0.0
    %3325 = vmatpush1.msra.mxu0 0.0
    %3326 = vmatprep.subr.mxu0 0.0
    %3327 = vmatpush1.msra.mxu0 0.0
    %3328 = vmatprep.mubr.f32.mxu0 0.0
    %3329 = vmatmul.mubr.f32.gmra.mrb[0].mxu0 %v3263
    %v3330 = vpop.f32.mrb[0].mxu0
    %v3331 = vadd.f32 0.0, %v3330
    %v3332 = vpop.f32.mrb[0].mxu0
    %v3333 = vadd.f32 0.0, %v3332
    %3334 = vdwg.mxu0
    %3335 = vmatprep.subr.mxu0 %v655
    %3336 = vmatpush1.msra.mxu0 %v654
    %3337 = vmatprep.subr.mxu0 %v659
    %3338 = vmatpush1.msra.mxu0 %v658
    %3339 = vmatprep.subr.mxu0 %v663
    %3340 = vmatpush1.msra.mxu0 %v662
    %3341 = vmatprep.subr.mxu0 %v667
    %3342 = vmatpush1.msra.mxu0 %v666
    %3343 = vmatprep.subr.mxu0 %v671
    %3344 = vmatpush1.msra.mxu0 %v670
    %3345 = vmatprep.subr.mxu0 %v675
    %3346 = vmatpush1.msra.mxu0 %v674
    %3347 = vmatprep.subr.mxu0 %v679
    %3348 = vmatpush1.msra.mxu0 %v678
    %3349 = vmatprep.subr.mxu0 %v683
    %3350 = vmatpush1.msra.mxu0 %v682
    %3351 = vmatprep.subr.mxu0 %v687
    %3352 = vmatpush1.msra.mxu0 %v686
    %3353 = vmatprep.subr.mxu0 %v691
    %3354 = vmatpush1.msra.mxu0 %v690
    %3355 = vmatprep.subr.mxu0 %v695
    %3356 = vmatpush1.msra.mxu0 %v694
    %3357 = vmatprep.subr.mxu0 %v699
    %3358 = vmatpush1.msra.mxu0 %v698
    %3359 = vmatprep.subr.mxu0 %v703
    %3360 = vmatpush1.msra.mxu0 %v702
    %3361 = vmatprep.subr.mxu0 %v707
    %3362 = vmatpush1.msra.mxu0 %v706
    %3363 = vmatprep.subr.mxu0 %v711
    %3364 = vmatpush1.msra.mxu0 %v710
    %3365 = vmatprep.subr.mxu0 %v715
    %3366 = vmatpush1.msra.mxu0 %v714
    %3367 = vmatprep.subr.mxu0 0.0
    %3368 = vmatpush1.msra.mxu0 0.0
    %3369 = vmatprep.subr.mxu0 0.0
    %3370 = vmatpush1.msra.mxu0 0.0
    %3371 = vmatprep.subr.mxu0 0.0
    %3372 = vmatpush1.msra.mxu0 0.0
    %3373 = vmatprep.subr.mxu0 0.0
    %3374 = vmatpush1.msra.mxu0 0.0
    %3375 = vmatprep.subr.mxu0 0.0
    %3376 = vmatpush1.msra.mxu0 0.0
    %3377 = vmatprep.subr.mxu0 0.0
    %3378 = vmatpush1.msra.mxu0 0.0
    %3379 = vmatprep.subr.mxu0 0.0
    %3380 = vmatpush1.msra.mxu0 0.0
    %3381 = vmatprep.subr.mxu0 0.0
    %3382 = vmatpush1.msra.mxu0 0.0
    %3383 = vmatprep.subr.mxu0 0.0
    %3384 = vmatpush1.msra.mxu0 0.0
    %3385 = vmatprep.subr.mxu0 0.0
    %3386 = vmatpush1.msra.mxu0 0.0
    %3387 = vmatprep.subr.mxu0 0.0
    %3388 = vmatpush1.msra.mxu0 0.0
    %3389 = vmatprep.subr.mxu0 0.0
    %3390 = vmatpush1.msra.mxu0 0.0
    %3391 = vmatprep.subr.mxu0 0.0
    %3392 = vmatpush1.msra.mxu0 0.0
    %3393 = vmatprep.subr.mxu0 0.0
    %3394 = vmatpush1.msra.mxu0 0.0
    %3395 = vmatprep.subr.mxu0 0.0
    %3396 = vmatpush1.msra.mxu0 0.0
    %3397 = vmatprep.subr.mxu0 0.0
    %3398 = vmatpush1.msra.mxu0 0.0
    %3399 = vmatprep.mubr.f32.mxu0 0.0
    %3400 = vmatmul.mubr.f32.gmra.mrb[0].mxu0 %v3263
    %v3401 = vpop.f32.mrb[0].mxu0
    %v3402 = vadd.f32 0.0, %v3401
    %v3403 = vpop.f32.mrb[0].mxu0
    %v3404 = vadd.f32 0.0, %v3403
    %3405 = vdwg.mxu0
    %3406 = vmatprep.subr.mxu0 %v589
    %3407 = vmatpush1.msra.mxu0 %v588
    %3408 = vmatprep.subr.mxu0 %v593
    %3409 = vmatpush1.msra.mxu0 %v592
    %3410 = vmatprep.subr.mxu0 %v597
    %3411 = vmatpush1.msra.mxu0 %v596
    %3412 = vmatprep.subr.mxu0 %v601
    %3413 = vmatpush1.msra.mxu0 %v600
    %3414 = vmatprep.subr.mxu0 %v605
    %3415 = vmatpush1.msra.mxu0 %v604
    %3416 = vmatprep.subr.mxu0 %v609
    %3417 = vmatpush1.msra.mxu0 %v608
    %3418 = vmatprep.subr.mxu0 %v613
    %3419 = vmatpush1.msra.mxu0 %v612
    %3420 = vmatprep.subr.mxu0 %v617
    %3421 = vmatpush1.msra.mxu0 %v616
    %3422 = vmatprep.subr.mxu0 %v621
    %3423 = vmatpush1.msra.mxu0 %v620
    %3424 = vmatprep.subr.mxu0 %v625
    %3425 = vmatpush1.msra.mxu0 %v624
    %3426 = vmatprep.subr.mxu0 %v629
    %3427 = vmatpush1.msra.mxu0 %v628
    %3428 = vmatprep.subr.mxu0 %v633
    %3429 = vmatpush1.msra.mxu0 %v632
    %3430 = vmatprep.subr.mxu0 %v637
    %3431 = vmatpush1.msra.mxu0 %v636
    %3432 = vmatprep.subr.mxu0 %v641
    %3433 = vmatpush1.msra.mxu0 %v640
    %3434 = vmatprep.subr.mxu0 %v645
    %3435 = vmatpush1.msra.mxu0 %v644
    %3436 = vmatprep.subr.mxu0 %v649
    %3437 = vmatpush1.msra.mxu0 %v648
    %3438 = vmatprep.subr.mxu0 0.0
    %3439 = vmatpush1.msra.mxu0 0.0
    %3440 = vmatprep.subr.mxu0 0.0
    %3441 = vmatpush1.msra.mxu0 0.0
    %3442 = vmatprep.subr.mxu0 0.0
    %3443 = vmatpush1.msra.mxu0 0.0
    %3444 = vmatprep.subr.mxu0 0.0
    %3445 = vmatpush1.msra.mxu0 0.0
    %3446 = vmatprep.subr.mxu0 0.0
    %3447 = vmatpush1.msra.mxu0 0.0
    %3448 = vmatprep.subr.mxu0 0.0
    %3449 = vmatpush1.msra.mxu0 0.0
    %3450 = vmatprep.subr.mxu0 0.0
    %3451 = vmatpush1.msra.mxu0 0.0
    %3452 = vmatprep.subr.mxu0 0.0
    %3453 = vmatpush1.msra.mxu0 0.0
    %3454 = vmatprep.subr.mxu0 0.0
    %3455 = vmatpush1.msra.mxu0 0.0
    %3456 = vmatprep.subr.mxu0 0.0
    %3457 = vmatpush1.msra.mxu0 0.0
    %3458 = vmatprep.subr.mxu0 0.0
    %3459 = vmatpush1.msra.mxu0 0.0
    %3460 = vmatprep.subr.mxu0 0.0
    %3461 = vmatpush1.msra.mxu0 0.0
    %3462 = vmatprep.subr.mxu0 0.0
    %3463 = vmatpush1.msra.mxu0 0.0
    %3464 = vmatprep.subr.mxu0 0.0
    %3465 = vmatpush1.msra.mxu0 0.0
    %3466 = vmatprep.subr.mxu0 0.0
    %3467 = vmatpush1.msra.mxu0 0.0
    %3468 = vmatprep.subr.mxu0 0.0
    %3469 = vmatpush1.msra.mxu0 0.0
    %3470 = vmatprep.mubr.f32.mxu0 0.0
    %3471 = vmatmul.mubr.f32.gmra.mrb[0].mxu0 %v3260
    %v3472 = vpop.f32.mrb[0].mxu0
    %v3473 = vadd.f32 %v3331, %v3472
    %v3474 = vpop.f32.mrb[0].mxu0
    %v3475 = vadd.f32 %v3333, %v3474
    %3476 = vdwg.mxu0
    %3477 = vmatprep.subr.mxu0 %v591
    %3478 = vmatpush1.msra.mxu0 %v590
    %3479 = vmatprep.subr.mxu0 %v595
    %3480 = vmatpush1.msra.mxu0 %v594
    %3481 = vmatprep.subr.mxu0 %v599
    %3482 = vmatpush1.msra.mxu0 %v598
    %3483 = vmatprep.subr.mxu0 %v603
    %3484 = vmatpush1.msra.mxu0 %v602
    %3485 = vmatprep.subr.mxu0 %v607
    %3486 = vmatpush1.msra.mxu0 %v606
    %3487 = vmatprep.subr.mxu0 %v611
    %3488 = vmatpush1.msra.mxu0 %v610
    %3489 = vmatprep.subr.mxu0 %v615
    %3490 = vmatpush1.msra.mxu0 %v614
    %3491 = vmatprep.subr.mxu0 %v619
    %3492 = vmatpush1.msra.mxu0 %v618
    %3493 = vmatprep.subr.mxu0 %v623
    %3494 = vmatpush1.msra.mxu0 %v622
    %3495 = vmatprep.subr.mxu0 %v627
    %3496 = vmatpush1.msra.mxu0 %v626
    %3497 = vmatprep.subr.mxu0 %v631
    %3498 = vmatpush1.msra.mxu0 %v630
    %3499 = vmatprep.subr.mxu0 %v635
    %3500 = vmatpush1.msra.mxu0 %v634
    %3501 = vmatprep.subr.mxu0 %v639
    %3502 = vmatpush1.msra.mxu0 %v638
    %3503 = vmatprep.subr.mxu0 %v643
    %3504 = vmatpush1.msra.mxu0 %v642
    %3505 = vmatprep.subr.mxu0 %v647
    %3506 = vmatpush1.msra.mxu0 %v646
    %3507 = vmatprep.subr.mxu0 %v651
    %3508 = vmatpush1.msra.mxu0 %v650
    %3509 = vmatprep.subr.mxu0 0.0
    %3510 = vmatpush1.msra.mxu0 0.0
    %3511 = vmatprep.subr.mxu0 0.0
    %3512 = vmatpush1.msra.mxu0 0.0
    %3513 = vmatprep.subr.mxu0 0.0
    %3514 = vmatpush1.msra.mxu0 0.0
    %3515 = vmatprep.subr.mxu0 0.0
    %3516 = vmatpush1.msra.mxu0 0.0
    %3517 = vmatprep.subr.mxu0 0.0
    %3518 = vmatpush1.msra.mxu0 0.0
    %3519 = vmatprep.subr.mxu0 0.0
    %3520 = vmatpush1.msra.mxu0 0.0
    %3521 = vmatprep.subr.mxu0 0.0
    %3522 = vmatpush1.msra.mxu0 0.0
    %3523 = vmatprep.subr.mxu0 0.0
    %3524 = vmatpush1.msra.mxu0 0.0
    %3525 = vmatprep.subr.mxu0 0.0
    %3526 = vmatpush1.msra.mxu0 0.0
    %3527 = vmatprep.subr.mxu0 0.0
    %3528 = vmatpush1.msra.mxu0 0.0
    %3529 = vmatprep.subr.mxu0 0.0
    %3530 = vmatpush1.msra.mxu0 0.0
    %3531 = vmatprep.subr.mxu0 0.0
    %3532 = vmatpush1.msra.mxu0 0.0
    %3533 = vmatprep.subr.mxu0 0.0
    %3534 = vmatpush1.msra.mxu0 0.0
    %3535 = vmatprep.subr.mxu0 0.0
    %3536 = vmatpush1.msra.mxu0 0.0
    %3537 = vmatprep.subr.mxu0 0.0
    %3538 = vmatpush1.msra.mxu0 0.0
    %3539 = vmatprep.subr.mxu0 0.0
    %3540 = vmatpush1.msra.mxu0 0.0
    %3541 = vmatprep.mubr.f32.mxu0 0.0
    %3542 = vmatmul.mubr.f32.gmra.mrb[0].mxu0 %v3260
    %v3543 = vpop.f32.mrb[0].mxu0
    %v3544 = vadd.f32 %v3402, %v3543
    %v3545 = vpop.f32.mrb[0].mxu0
    %v3546 = vadd.f32 %v3404, %v3545
    %3547 = vdwg.mxu0
    %v3548 = vadd.f32 %v3473, %v1203
    %v3549 = vadd.f32 %v3475, %v1207
    %v3550 = vadd.f32 %v3544, %v1211
    %v3551 = vadd.f32 %v3546, %v1215
    %v3552 = vld [vmem:[%s1224] sm:$0xff]
    %v3553 = vxor.u32 %v3548, 2147483648
    %v3554 = vmul.f32 %v3553, 1.442695
    %v3555 = vpow.pop %v3554
    %v3556 = vadd.f32 %v3555, 1.0
    %v3557 = vrcp.pop %v3556
    %v3558 = vmul.f32 1.0, %v3557
    %v3559 = vxor.u32 %v3549, 2147483648
    %v3560 = vmul.f32 %v3559, 1.442695
    %v3561 = vpow.pop %v3560
    %v3562 = vadd.f32 %v3561, 1.0
    %v3563 = vrcp.pop %v3562
    %v3564 = vmul.f32 1.0, %v3563
    %v3565 = vtanh.pop %v3550
    %v3566 = vxor.u32 %v3551, 2147483648
    %v3567 = vmul.f32 %v3566, 1.442695
    %v3568 = vpow.pop %v3567
    %v3569 = vadd.f32 %v3568, 1.0
    %v3570 = vrcp.pop %v3569
    %v3571 = vmul.f32 1.0, %v3570
    %v3572 = vmul.f32 %v3564, %v3552
    %v3573 = vmul.f32 %v3558, %v3565
    %v3574 = vadd.f32 %v3572, %v3573
    %v3575 = vtanh.pop %v3574
    %v3576 = vmul.f32 %v3571, %v3575
    %3577 = vst [vmem:[%s913] sm:$0xff] %v3576
    %3578 = vst [vmem:[%s1224] sm:$0xff] %v3574
    %3579 = vmatprep.subr.mxu0 0.0
    %3580 = vmatpush1.msra.mxu0 %v718
    %3581 = vmatprep.subr.mxu0 0.0
    %3582 = vmatpush1.msra.mxu0 %v719
    %3583 = vmatprep.subr.mxu0 0.0
    %3584 = vmatpush1.msra.mxu0 %v720
    %3585 = vmatprep.subr.mxu0 0.0
    %3586 = vmatpush1.msra.mxu0 %v721
    %3587 = vmatprep.subr.mxu0 0.0
    %3588 = vmatpush1.msra.mxu0 %v722
    %3589 = vmatprep.subr.mxu0 0.0
    %3590 = vmatpush1.msra.mxu0 %v723
    %3591 = vmatprep.subr.mxu0 0.0
    %3592 = vmatpush1.msra.mxu0 %v724
    %3593 = vmatprep.subr.mxu0 0.0
    %3594 = vmatpush1.msra.mxu0 %v725
    %3595 = vmatprep.subr.mxu0 0.0
    %3596 = vmatpush1.msra.mxu0 %v726
    %3597 = vmatprep.subr.mxu0 0.0
    %3598 = vmatpush1.msra.mxu0 %v727
    %3599 = vmatprep.subr.mxu0 0.0
    %3600 = vmatpush1.msra.mxu0 %v728
    %3601 = vmatprep.subr.mxu0 0.0
    %3602 = vmatpush1.msra.mxu0 %v729
    %3603 = vmatprep.subr.mxu0 0.0
    %3604 = vmatpush1.msra.mxu0 %v730
    %3605 = vmatprep.subr.mxu0 0.0
    %3606 = vmatpush1.msra.mxu0 %v731
    %3607 = vmatprep.subr.mxu0 0.0
    %3608 = vmatpush1.msra.mxu0 %v732
    %3609 = vmatprep.subr.mxu0 0.0
    %3610 = vmatpush1.msra.mxu0 %v733
    %3611 = vmatprep.subr.mxu0 0.0
    %3612 = vmatpush1.msra.mxu0 0.0
    %3613 = vmatprep.subr.mxu0 0.0
    %3614 = vmatpush1.msra.mxu0 0.0
    %3615 = vmatprep.subr.mxu0 0.0
    %3616 = vmatpush1.msra.mxu0 0.0
    %3617 = vmatprep.subr.mxu0 0.0
    %3618 = vmatpush1.msra.mxu0 0.0
    %3619 = vmatprep.subr.mxu0 0.0
    %3620 = vmatpush1.msra.mxu0 0.0
    %3621 = vmatprep.subr.mxu0 0.0
    %3622 = vmatpush1.msra.mxu0 0.0
    %3623 = vmatprep.subr.mxu0 0.0
    %3624 = vmatpush1.msra.mxu0 0.0
    %3625 = vmatprep.subr.mxu0 0.0
    %3626 = vmatpush1.msra.mxu0 0.0
    %3627 = vmatprep.subr.mxu0 0.0
    %3628 = vmatpush1.msra.mxu0 0.0
    %3629 = vmatprep.subr.mxu0 0.0
    %3630 = vmatpush1.msra.mxu0 0.0
    %3631 = vmatprep.subr.mxu0 0.0
    %3632 = vmatpush1.msra.mxu0 0.0
    %3633 = vmatprep.subr.mxu0 0.0
    %3634 = vmatpush1.msra.mxu0 0.0
    %3635 = vmatprep.subr.mxu0 0.0
    %3636 = vmatpush1.msra.mxu0 0.0
    %3637 = vmatprep.subr.mxu0 0.0
    %3638 = vmatpush1.msra.mxu0 0.0
    %3639 = vmatprep.subr.mxu0 0.0
    %3640 = vmatpush1.msra.mxu0 0.0
    %3641 = vmatprep.subr.mxu0 0.0
    %3642 = vmatpush1.msra.mxu0 0.0
    %3643 = vmatprep.mubr.f32.mxu0 0.0
    %3644 = vmatmul.mubr.f32.gmra.mrb[0].mxu0 %v3576
    %v3645 = vpop.f32.mrb[0].mxu0
    %v3646 = vadd.f32 %v734, %v3645
    %v3647 = vpop.f32.mrb[0].mxu0
    %3648 = vdwg.mxu0
    %s3649 = scalar_lea.vmem [#allocation3], 32
    %v3650 = vld [vmem:[%s3649] sm:$0xff]
    %v3651 = vmul.f32 %v3646, 0.5
    %v3652 = vmul.f32 %v3651, 1.442695
    %v3653 = vpow.pop %v3652
    %3655 = vrot.lane.b32.xlu0 %v3653, 112
    %v3656 = vpop.permute.xlu0 %3655
    %v3658 = vmul.f32 %v3650, %v3656
    %v3659 = vadd.f32 %v3658, %v3646
    %s3660 = scalar_lea.vmem [#allocation11], 32
    %3661 = vst.msk [vmem:[%s3660] sm:$0xff] %vm97, %v3659
    %3663 = vrot.lane.b32.xlu0 %v3646, 16
    %v3664 = vpop.permute.xlu0 %3663
    %3666 = vst.msk [vmem:[%s3660] sm:$0xff] %vm1337, %v3664
    %v3667 = vld [vmem:[#allocation2 + $0xa0] sm:$0xff]
    %v3668 = vld [vmem:[#allocation2 + $0xa8] sm:$0xff]
    %v3669 = vld [vmem:[#allocation2 + $0xb0] sm:$0xff]
    %v3670 = vld [vmem:[#allocation2 + $0xb8] sm:$0xff]
    %v3671 = vld [vmem:[#allocation12] sm:$0xff]
    %3672 = vmatprep.subr.mxu0 %v525
    %3673 = vmatpush1.msra.mxu0 %v524
    %3674 = vmatprep.subr.mxu0 %v529
    %3675 = vmatpush1.msra.mxu0 %v528
    %3676 = vmatprep.subr.mxu0 %v533
    %3677 = vmatpush1.msra.mxu0 %v532
    %3678 = vmatprep.subr.mxu0 %v537
    %3679 = vmatpush1.msra.mxu0 %v536
    %3680 = vmatprep.subr.mxu0 %v541
    %3681 = vmatpush1.msra.mxu0 %v540
    %3682 = vmatprep.subr.mxu0 %v545
    %3683 = vmatpush1.msra.mxu0 %v544
    %3684 = vmatprep.subr.mxu0 %v549
    %3685 = vmatpush1.msra.mxu0 %v548
    %3686 = vmatprep.subr.mxu0 %v553
    %3687 = vmatpush1.msra.mxu0 %v552
    %3688 = vmatprep.subr.mxu0 %v557
    %3689 = vmatpush1.msra.mxu0 %v556
    %3690 = vmatprep.subr.mxu0 %v561
    %3691 = vmatpush1.msra.mxu0 %v560
    %3692 = vmatprep.subr.mxu0 %v565
    %3693 = vmatpush1.msra.mxu0 %v564
    %3694 = vmatprep.subr.mxu0 %v569
    %3695 = vmatpush1.msra.mxu0 %v568
    %3696 = vmatprep.subr.mxu0 %v573
    %3697 = vmatpush1.msra.mxu0 %v572
    %3698 = vmatprep.subr.mxu0 %v577
    %3699 = vmatpush1.msra.mxu0 %v576
    %3700 = vmatprep.subr.mxu0 %v581
    %3701 = vmatpush1.msra.mxu0 %v580
    %3702 = vmatprep.subr.mxu0 %v585
    %3703 = vmatpush1.msra.mxu0 %v584
    %3704 = vmatprep.subr.mxu0 0.0
    %3705 = vmatpush1.msra.mxu0 0.0
    %3706 = vmatprep.subr.mxu0 0.0
    %3707 = vmatpush1.msra.mxu0 0.0
    %3708 = vmatprep.subr.mxu0 0.0
    %3709 = vmatpush1.msra.mxu0 0.0
    %3710 = vmatprep.subr.mxu0 0.0
    %3711 = vmatpush1.msra.mxu0 0.0
    %3712 = vmatprep.subr.mxu0 0.0
    %3713 = vmatpush1.msra.mxu0 0.0
    %3714 = vmatprep.subr.mxu0 0.0
    %3715 = vmatpush1.msra.mxu0 0.0
    %3716 = vmatprep.subr.mxu0 0.0
    %3717 = vmatpush1.msra.mxu0 0.0
    %3718 = vmatprep.subr.mxu0 0.0
    %3719 = vmatpush1.msra.mxu0 0.0
    %3720 = vmatprep.subr.mxu0 0.0
    %3721 = vmatpush1.msra.mxu0 0.0
    %3722 = vmatprep.subr.mxu0 0.0
    %3723 = vmatpush1.msra.mxu0 0.0
    %3724 = vmatprep.subr.mxu0 0.0
    %3725 = vmatpush1.msra.mxu0 0.0
    %3726 = vmatprep.subr.mxu0 0.0
    %3727 = vmatpush1.msra.mxu0 0.0
    %3728 = vmatprep.subr.mxu0 0.0
    %3729 = vmatpush1.msra.mxu0 0.0
    %3730 = vmatprep.subr.mxu0 0.0
    %3731 = vmatpush1.msra.mxu0 0.0
    %3732 = vmatprep.subr.mxu0 0.0
    %3733 = vmatpush1.msra.mxu0 0.0
    %3734 = vmatprep.subr.mxu0 0.0
    %3735 = vmatpush1.msra.mxu0 0.0
    %3736 = vmatprep.mubr.f32.mxu0 0.0
    %3737 = vmatmul.mubr.f32.gmra.mrb[0].mxu0 %v3671
    %v3738 = vpop.f32.mrb[0].mxu0
    %v3739 = vadd.f32 0.0, %v3738
    %v3740 = vpop.f32.mrb[0].mxu0
    %v3741 = vadd.f32 0.0, %v3740
    %3742 = vdwg.mxu0
    %3743 = vmatprep.subr.mxu0 %v527
    %3744 = vmatpush1.msra.mxu0 %v526
    %3745 = vmatprep.subr.mxu0 %v531
    %3746 = vmatpush1.msra.mxu0 %v530
    %3747 = vmatprep.subr.mxu0 %v535
    %3748 = vmatpush1.msra.mxu0 %v534
    %3749 = vmatprep.subr.mxu0 %v539
    %3750 = vmatpush1.msra.mxu0 %v538
    %3751 = vmatprep.subr.mxu0 %v543
    %3752 = vmatpush1.msra.mxu0 %v542
    %3753 = vmatprep.subr.mxu0 %v547
    %3754 = vmatpush1.msra.mxu0 %v546
    %3755 = vmatprep.subr.mxu0 %v551
    %3756 = vmatpush1.msra.mxu0 %v550
    %3757 = vmatprep.subr.mxu0 %v555
    %3758 = vmatpush1.msra.mxu0 %v554
    %3759 = vmatprep.subr.mxu0 %v559
    %3760 = vmatpush1.msra.mxu0 %v558
    %3761 = vmatprep.subr.mxu0 %v563
    %3762 = vmatpush1.msra.mxu0 %v562
    %3763 = vmatprep.subr.mxu0 %v567
    %3764 = vmatpush1.msra.mxu0 %v566
    %3765 = vmatprep.subr.mxu0 %v571
    %3766 = vmatpush1.msra.mxu0 %v570
    %3767 = vmatprep.subr.mxu0 %v575
    %3768 = vmatpush1.msra.mxu0 %v574
    %3769 = vmatprep.subr.mxu0 %v579
    %3770 = vmatpush1.msra.mxu0 %v578
    %3771 = vmatprep.subr.mxu0 %v583
    %3772 = vmatpush1.msra.mxu0 %v582
    %3773 = vmatprep.subr.mxu0 %v587
    %3774 = vmatpush1.msra.mxu0 %v586
    %3775 = vmatprep.subr.mxu0 0.0
    %3776 = vmatpush1.msra.mxu0 0.0
    %3777 = vmatprep.subr.mxu0 0.0
    %3778 = vmatpush1.msra.mxu0 0.0
    %3779 = vmatprep.subr.mxu0 0.0
    %3780 = vmatpush1.msra.mxu0 0.0
    %3781 = vmatprep.subr.mxu0 0.0
    %3782 = vmatpush1.msra.mxu0 0.0
    %3783 = vmatprep.subr.mxu0 0.0
    %3784 = vmatpush1.msra.mxu0 0.0
    %3785 = vmatprep.subr.mxu0 0.0
    %3786 = vmatpush1.msra.mxu0 0.0
    %3787 = vmatprep.subr.mxu0 0.0
    %3788 = vmatpush1.msra.mxu0 0.0
    %3789 = vmatprep.subr.mxu0 0.0
    %3790 = vmatpush1.msra.mxu0 0.0
    %3791 = vmatprep.subr.mxu0 0.0
    %3792 = vmatpush1.msra.mxu0 0.0
    %3793 = vmatprep.subr.mxu0 0.0
    %3794 = vmatpush1.msra.mxu0 0.0
    %3795 = vmatprep.subr.mxu0 0.0
    %3796 = vmatpush1.msra.mxu0 0.0
    %3797 = vmatprep.subr.mxu0 0.0
    %3798 = vmatpush1.msra.mxu0 0.0
    %3799 = vmatprep.subr.mxu0 0.0
    %3800 = vmatpush1.msra.mxu0 0.0
    %3801 = vmatprep.subr.mxu0 0.0
    %3802 = vmatpush1.msra.mxu0 0.0
    %3803 = vmatprep.subr.mxu0 0.0
    %3804 = vmatpush1.msra.mxu0 0.0
    %3805 = vmatprep.subr.mxu0 0.0
    %3806 = vmatpush1.msra.mxu0 0.0
    %3807 = vmatprep.mubr.f32.mxu0 0.0
    %3808 = vmatmul.mubr.f32.gmra.mrb[0].mxu0 %v3671
    %v3809 = vpop.f32.mrb[0].mxu0
    %v3810 = vadd.f32 0.0, %v3809
    %v3811 = vpop.f32.mrb[0].mxu0
    %v3812 = vadd.f32 0.0, %v3811
    %3813 = vdwg.mxu0
    %v3814 = vadd.f32 %v3667, %v3739
    %v3815 = vadd.f32 %v3668, %v3741
    %v3816 = vadd.f32 %v3669, %v3810
    %v3817 = vadd.f32 %v3670, %v3812
    %v3818 = vld [vmem:[#allocation14] sm:$0xff]
    %v3819 = vxor.u32 %v3814, 2147483648
    %v3820 = vmul.f32 %v3819, 1.442695
    %v3821 = vpow.pop %v3820
    %v3822 = vadd.f32 %v3821, 1.0
    %v3823 = vrcp.pop %v3822
    %v3824 = vmul.f32 1.0, %v3823
    %v3825 = vxor.u32 %v3815, 2147483648
    %v3826 = vmul.f32 %v3825, 1.442695
    %v3827 = vpow.pop %v3826
    %v3828 = vadd.f32 %v3827, 1.0
    %v3829 = vrcp.pop %v3828
    %v3830 = vmul.f32 1.0, %v3829
    %v3831 = vtanh.pop %v3816
    %v3832 = vxor.u32 %v3817, 2147483648
    %v3833 = vmul.f32 %v3832, 1.442695
    %v3834 = vpow.pop %v3833
    %v3835 = vadd.f32 %v3834, 1.0
    %v3836 = vrcp.pop %v3835
    %v3837 = vmul.f32 1.0, %v3836
    %v3838 = vmul.f32 %v3830, %v3818
    %v3839 = vmul.f32 %v3824, %v3831
    %v3840 = vadd.f32 %v3838, %v3839
    %v3841 = vtanh.pop %v3840
    %v3842 = vmul.f32 %v3837, %v3841
    %3843 = vst [vmem:[#allocation12] sm:$0xff] %v3842
    %3844 = vst [vmem:[#allocation14] sm:$0xff] %v3840
    %v3845 = vld [vmem:[%s913] sm:$0xff]
    %3846 = vmatprep.subr.mxu0 %v653
    %3847 = vmatpush1.msra.mxu0 %v652
    %3848 = vmatprep.subr.mxu0 %v657
    %3849 = vmatpush1.msra.mxu0 %v656
    %3850 = vmatprep.subr.mxu0 %v661
    %3851 = vmatpush1.msra.mxu0 %v660
    %3852 = vmatprep.subr.mxu0 %v665
    %3853 = vmatpush1.msra.mxu0 %v664
    %3854 = vmatprep.subr.mxu0 %v669
    %3855 = vmatpush1.msra.mxu0 %v668
    %3856 = vmatprep.subr.mxu0 %v673
    %3857 = vmatpush1.msra.mxu0 %v672
    %3858 = vmatprep.subr.mxu0 %v677
    %3859 = vmatpush1.msra.mxu0 %v676
    %3860 = vmatprep.subr.mxu0 %v681
    %3861 = vmatpush1.msra.mxu0 %v680
    %3862 = vmatprep.subr.mxu0 %v685
    %3863 = vmatpush1.msra.mxu0 %v684
    %3864 = vmatprep.subr.mxu0 %v689
    %3865 = vmatpush1.msra.mxu0 %v688
    %3866 = vmatprep.subr.mxu0 %v693
    %3867 = vmatpush1.msra.mxu0 %v692
    %3868 = vmatprep.subr.mxu0 %v697
    %3869 = vmatpush1.msra.mxu0 %v696
    %3870 = vmatprep.subr.mxu0 %v701
    %3871 = vmatpush1.msra.mxu0 %v700
    %3872 = vmatprep.subr.mxu0 %v705
    %3873 = vmatpush1.msra.mxu0 %v704
    %3874 = vmatprep.subr.mxu0 %v709
    %3875 = vmatpush1.msra.mxu0 %v708
    %3876 = vmatprep.subr.mxu0 %v713
    %3877 = vmatpush1.msra.mxu0 %v712
    %3878 = vmatprep.subr.mxu0 0.0
    %3879 = vmatpush1.msra.mxu0 0.0
    %3880 = vmatprep.subr.mxu0 0.0
    %3881 = vmatpush1.msra.mxu0 0.0
    %3882 = vmatprep.subr.mxu0 0.0
    %3883 = vmatpush1.msra.mxu0 0.0
    %3884 = vmatprep.subr.mxu0 0.0
    %3885 = vmatpush1.msra.mxu0 0.0
    %3886 = vmatprep.subr.mxu0 0.0
    %3887 = vmatpush1.msra.mxu0 0.0
    %3888 = vmatprep.subr.mxu0 0.0
    %3889 = vmatpush1.msra.mxu0 0.0
    %3890 = vmatprep.subr.mxu0 0.0
    %3891 = vmatpush1.msra.mxu0 0.0
    %3892 = vmatprep.subr.mxu0 0.0
    %3893 = vmatpush1.msra.mxu0 0.0
    %3894 = vmatprep.subr.mxu0 0.0
    %3895 = vmatpush1.msra.mxu0 0.0
    %3896 = vmatprep.subr.mxu0 0.0
    %3897 = vmatpush1.msra.mxu0 0.0
    %3898 = vmatprep.subr.mxu0 0.0
    %3899 = vmatpush1.msra.mxu0 0.0
    %3900 = vmatprep.subr.mxu0 0.0
    %3901 = vmatpush1.msra.mxu0 0.0
    %3902 = vmatprep.subr.mxu0 0.0
    %3903 = vmatpush1.msra.mxu0 0.0
    %3904 = vmatprep.subr.mxu0 0.0
    %3905 = vmatpush1.msra.mxu0 0.0
    %3906 = vmatprep.subr.mxu0 0.0
    %3907 = vmatpush1.msra.mxu0 0.0
    %3908 = vmatprep.subr.mxu0 0.0
    %3909 = vmatpush1.msra.mxu0 0.0
    %3910 = vmatprep.mubr.f32.mxu0 0.0
    %3911 = vmatmul.mubr.f32.gmra.mrb[0].mxu0 %v3845
    %v3912 = vpop.f32.mrb[0].mxu0
    %v3913 = vadd.f32 0.0, %v3912
    %v3914 = vpop.f32.mrb[0].mxu0
    %v3915 = vadd.f32 0.0, %v3914
    %3916 = vdwg.mxu0
    %3917 = vmatprep.subr.mxu0 %v655
    %3918 = vmatpush1.msra.mxu0 %v654
    %3919 = vmatprep.subr.mxu0 %v659
    %3920 = vmatpush1.msra.mxu0 %v658
    %3921 = vmatprep.subr.mxu0 %v663
    %3922 = vmatpush1.msra.mxu0 %v662
    %3923 = vmatprep.subr.mxu0 %v667
    %3924 = vmatpush1.msra.mxu0 %v666
    %3925 = vmatprep.subr.mxu0 %v671
    %3926 = vmatpush1.msra.mxu0 %v670
    %3927 = vmatprep.subr.mxu0 %v675
    %3928 = vmatpush1.msra.mxu0 %v674
    %3929 = vmatprep.subr.mxu0 %v679
    %3930 = vmatpush1.msra.mxu0 %v678
    %3931 = vmatprep.subr.mxu0 %v683
    %3932 = vmatpush1.msra.mxu0 %v682
    %3933 = vmatprep.subr.mxu0 %v687
    %3934 = vmatpush1.msra.mxu0 %v686
    %3935 = vmatprep.subr.mxu0 %v691
    %3936 = vmatpush1.msra.mxu0 %v690
    %3937 = vmatprep.subr.mxu0 %v695
    %3938 = vmatpush1.msra.mxu0 %v694
    %3939 = vmatprep.subr.mxu0 %v699
    %3940 = vmatpush1.msra.mxu0 %v698
    %3941 = vmatprep.subr.mxu0 %v703
    %3942 = vmatpush1.msra.mxu0 %v702
    %3943 = vmatprep.subr.mxu0 %v707
    %3944 = vmatpush1.msra.mxu0 %v706
    %3945 = vmatprep.subr.mxu0 %v711
    %3946 = vmatpush1.msra.mxu0 %v710
    %3947 = vmatprep.subr.mxu0 %v715
    %3948 = vmatpush1.msra.mxu0 %v714
    %3949 = vmatprep.subr.mxu0 0.0
    %3950 = vmatpush1.msra.mxu0 0.0
    %3951 = vmatprep.subr.mxu0 0.0
    %3952 = vmatpush1.msra.mxu0 0.0
    %3953 = vmatprep.subr.mxu0 0.0
    %3954 = vmatpush1.msra.mxu0 0.0
    %3955 = vmatprep.subr.mxu0 0.0
    %3956 = vmatpush1.msra.mxu0 0.0
    %3957 = vmatprep.subr.mxu0 0.0
    %3958 = vmatpush1.msra.mxu0 0.0
    %3959 = vmatprep.subr.mxu0 0.0
    %3960 = vmatpush1.msra.mxu0 0.0
    %3961 = vmatprep.subr.mxu0 0.0
    %3962 = vmatpush1.msra.mxu0 0.0
    %3963 = vmatprep.subr.mxu0 0.0
    %3964 = vmatpush1.msra.mxu0 0.0
    %3965 = vmatprep.subr.mxu0 0.0
    %3966 = vmatpush1.msra.mxu0 0.0
    %3967 = vmatprep.subr.mxu0 0.0
    %3968 = vmatpush1.msra.mxu0 0.0
    %3969 = vmatprep.subr.mxu0 0.0
    %3970 = vmatpush1.msra.mxu0 0.0
    %3971 = vmatprep.subr.mxu0 0.0
    %3972 = vmatpush1.msra.mxu0 0.0
    %3973 = vmatprep.subr.mxu0 0.0
    %3974 = vmatpush1.msra.mxu0 0.0
    %3975 = vmatprep.subr.mxu0 0.0
    %3976 = vmatpush1.msra.mxu0 0.0
    %3977 = vmatprep.subr.mxu0 0.0
    %3978 = vmatpush1.msra.mxu0 0.0
    %3979 = vmatprep.subr.mxu0 0.0
    %3980 = vmatpush1.msra.mxu0 0.0
    %3981 = vmatprep.mubr.f32.mxu0 0.0
    %3982 = vmatmul.mubr.f32.gmra.mrb[0].mxu0 %v3845
    %v3983 = vpop.f32.mrb[0].mxu0
    %v3984 = vadd.f32 0.0, %v3983
    %v3985 = vpop.f32.mrb[0].mxu0
    %v3986 = vadd.f32 0.0, %v3985
    %3987 = vdwg.mxu0
    %3988 = vmatprep.subr.mxu0 %v589
    %3989 = vmatpush1.msra.mxu0 %v588
    %3990 = vmatprep.subr.mxu0 %v593
    %3991 = vmatpush1.msra.mxu0 %v592
    %3992 = vmatprep.subr.mxu0 %v597
    %3993 = vmatpush1.msra.mxu0 %v596
    %3994 = vmatprep.subr.mxu0 %v601
    %3995 = vmatpush1.msra.mxu0 %v600
    %3996 = vmatprep.subr.mxu0 %v605
    %3997 = vmatpush1.msra.mxu0 %v604
    %3998 = vmatprep.subr.mxu0 %v609
    %3999 = vmatpush1.msra.mxu0 %v608
    %4000 = vmatprep.subr.mxu0 %v613
    %4001 = vmatpush1.msra.mxu0 %v612
    %4002 = vmatprep.subr.mxu0 %v617
    %4003 = vmatpush1.msra.mxu0 %v616
    %4004 = vmatprep.subr.mxu0 %v621
    %4005 = vmatpush1.msra.mxu0 %v620
    %4006 = vmatprep.subr.mxu0 %v625
    %4007 = vmatpush1.msra.mxu0 %v624
    %4008 = vmatprep.subr.mxu0 %v629
    %4009 = vmatpush1.msra.mxu0 %v628
    %4010 = vmatprep.subr.mxu0 %v633
    %4011 = vmatpush1.msra.mxu0 %v632
    %4012 = vmatprep.subr.mxu0 %v637
    %4013 = vmatpush1.msra.mxu0 %v636
    %4014 = vmatprep.subr.mxu0 %v641
    %4015 = vmatpush1.msra.mxu0 %v640
    %4016 = vmatprep.subr.mxu0 %v645
    %4017 = vmatpush1.msra.mxu0 %v644
    %4018 = vmatprep.subr.mxu0 %v649
    %4019 = vmatpush1.msra.mxu0 %v648
    %4020 = vmatprep.subr.mxu0 0.0
    %4021 = vmatpush1.msra.mxu0 0.0
    %4022 = vmatprep.subr.mxu0 0.0
    %4023 = vmatpush1.msra.mxu0 0.0
    %4024 = vmatprep.subr.mxu0 0.0
    %4025 = vmatpush1.msra.mxu0 0.0
    %4026 = vmatprep.subr.mxu0 0.0
    %4027 = vmatpush1.msra.mxu0 0.0
    %4028 = vmatprep.subr.mxu0 0.0
    %4029 = vmatpush1.msra.mxu0 0.0
    %4030 = vmatprep.subr.mxu0 0.0
    %4031 = vmatpush1.msra.mxu0 0.0
    %4032 = vmatprep.subr.mxu0 0.0
    %4033 = vmatpush1.msra.mxu0 0.0
    %4034 = vmatprep.subr.mxu0 0.0
    %4035 = vmatpush1.msra.mxu0 0.0
    %4036 = vmatprep.subr.mxu0 0.0
    %4037 = vmatpush1.msra.mxu0 0.0
    %4038 = vmatprep.subr.mxu0 0.0
    %4039 = vmatpush1.msra.mxu0 0.0
    %4040 = vmatprep.subr.mxu0 0.0
    %4041 = vmatpush1.msra.mxu0 0.0
    %4042 = vmatprep.subr.mxu0 0.0
    %4043 = vmatpush1.msra.mxu0 0.0
    %4044 = vmatprep.subr.mxu0 0.0
    %4045 = vmatpush1.msra.mxu0 0.0
    %4046 = vmatprep.subr.mxu0 0.0
    %4047 = vmatpush1.msra.mxu0 0.0
    %4048 = vmatprep.subr.mxu0 0.0
    %4049 = vmatpush1.msra.mxu0 0.0
    %4050 = vmatprep.subr.mxu0 0.0
    %4051 = vmatpush1.msra.mxu0 0.0
    %4052 = vmatprep.mubr.f32.mxu0 0.0
    %4053 = vmatmul.mubr.f32.gmra.mrb[0].mxu0 %v3842
    %v4054 = vpop.f32.mrb[0].mxu0
    %v4055 = vadd.f32 %v3913, %v4054
    %v4056 = vpop.f32.mrb[0].mxu0
    %v4057 = vadd.f32 %v3915, %v4056
    %4058 = vdwg.mxu0
    %4059 = vmatprep.subr.mxu0 %v591
    %4060 = vmatpush1.msra.mxu0 %v590
    %4061 = vmatprep.subr.mxu0 %v595
    %4062 = vmatpush1.msra.mxu0 %v594
    %4063 = vmatprep.subr.mxu0 %v599
    %4064 = vmatpush1.msra.mxu0 %v598
    %4065 = vmatprep.subr.mxu0 %v603
    %4066 = vmatpush1.msra.mxu0 %v602
    %4067 = vmatprep.subr.mxu0 %v607
    %4068 = vmatpush1.msra.mxu0 %v606
    %4069 = vmatprep.subr.mxu0 %v611
    %4070 = vmatpush1.msra.mxu0 %v610
    %4071 = vmatprep.subr.mxu0 %v615
    %4072 = vmatpush1.msra.mxu0 %v614
    %4073 = vmatprep.subr.mxu0 %v619
    %4074 = vmatpush1.msra.mxu0 %v618
    %4075 = vmatprep.subr.mxu0 %v623
    %4076 = vmatpush1.msra.mxu0 %v622
    %4077 = vmatprep.subr.mxu0 %v627
    %4078 = vmatpush1.msra.mxu0 %v626
    %4079 = vmatprep.subr.mxu0 %v631
    %4080 = vmatpush1.msra.mxu0 %v630
    %4081 = vmatprep.subr.mxu0 %v635
    %4082 = vmatpush1.msra.mxu0 %v634
    %4083 = vmatprep.subr.mxu0 %v639
    %4084 = vmatpush1.msra.mxu0 %v638
    %4085 = vmatprep.subr.mxu0 %v643
    %4086 = vmatpush1.msra.mxu0 %v642
    %4087 = vmatprep.subr.mxu0 %v647
    %4088 = vmatpush1.msra.mxu0 %v646
    %4089 = vmatprep.subr.mxu0 %v651
    %4090 = vmatpush1.msra.mxu0 %v650
    %4091 = vmatprep.subr.mxu0 0.0
    %4092 = vmatpush1.msra.mxu0 0.0
    %4093 = vmatprep.subr.mxu0 0.0
    %4094 = vmatpush1.msra.mxu0 0.0
    %4095 = vmatprep.subr.mxu0 0.0
    %4096 = vmatpush1.msra.mxu0 0.0
    %4097 = vmatprep.subr.mxu0 0.0
    %4098 = vmatpush1.msra.mxu0 0.0
    %4099 = vmatprep.subr.mxu0 0.0
    %4100 = vmatpush1.msra.mxu0 0.0
    %4101 = vmatprep.subr.mxu0 0.0
    %4102 = vmatpush1.msra.mxu0 0.0
    %4103 = vmatprep.subr.mxu0 0.0
    %4104 = vmatpush1.msra.mxu0 0.0
    %4105 = vmatprep.subr.mxu0 0.0
    %4106 = vmatpush1.msra.mxu0 0.0
    %4107 = vmatprep.subr.mxu0 0.0
    %4108 = vmatpush1.msra.mxu0 0.0
    %4109 = vmatprep.subr.mxu0 0.0
    %4110 = vmatpush1.msra.mxu0 0.0
    %4111 = vmatprep.subr.mxu0 0.0
    %4112 = vmatpush1.msra.mxu0 0.0
    %4113 = vmatprep.subr.mxu0 0.0
    %4114 = vmatpush1.msra.mxu0 0.0
    %4115 = vmatprep.subr.mxu0 0.0
    %4116 = vmatpush1.msra.mxu0 0.0
    %4117 = vmatprep.subr.mxu0 0.0
    %4118 = vmatpush1.msra.mxu0 0.0
    %4119 = vmatprep.subr.mxu0 0.0
    %4120 = vmatpush1.msra.mxu0 0.0
    %4121 = vmatprep.subr.mxu0 0.0
    %4122 = vmatpush1.msra.mxu0 0.0
    %4123 = vmatprep.mubr.f32.mxu0 0.0
    %4124 = vmatmul.mubr.f32.gmra.mrb[0].mxu0 %v3842
    %v4125 = vpop.f32.mrb[0].mxu0
    %v4126 = vadd.f32 %v3984, %v4125
    %v4127 = vpop.f32.mrb[0].mxu0
    %v4128 = vadd.f32 %v3986, %v4127
    %4129 = vdwg.mxu0
    %v4130 = vadd.f32 %v4055, %v1203
    %v4131 = vadd.f32 %v4057, %v1207
    %v4132 = vadd.f32 %v4126, %v1211
    %v4133 = vadd.f32 %v4128, %v1215
    %v4134 = vld [vmem:[%s1224] sm:$0xff]
    %v4135 = vxor.u32 %v4130, 2147483648
    %v4136 = vmul.f32 %v4135, 1.442695
    %v4137 = vpow.pop %v4136
    %v4138 = vadd.f32 %v4137, 1.0
    %v4139 = vrcp.pop %v4138
    %v4140 = vmul.f32 1.0, %v4139
    %v4141 = vxor.u32 %v4131, 2147483648
    %v4142 = vmul.f32 %v4141, 1.442695
    %v4143 = vpow.pop %v4142
    %v4144 = vadd.f32 %v4143, 1.0
    %v4145 = vrcp.pop %v4144
    %v4146 = vmul.f32 1.0, %v4145
    %v4147 = vtanh.pop %v4132
    %v4148 = vxor.u32 %v4133, 2147483648
    %v4149 = vmul.f32 %v4148, 1.442695
    %v4150 = vpow.pop %v4149
    %v4151 = vadd.f32 %v4150, 1.0
    %v4152 = vrcp.pop %v4151
    %v4153 = vmul.f32 1.0, %v4152
    %v4154 = vmul.f32 %v4146, %v4134
    %v4155 = vmul.f32 %v4140, %v4147
    %v4156 = vadd.f32 %v4154, %v4155
    %v4157 = vtanh.pop %v4156
    %v4158 = vmul.f32 %v4153, %v4157
    %4159 = vst [vmem:[%s913] sm:$0xff] %v4158
    %4160 = vst [vmem:[%s1224] sm:$0xff] %v4156
    %4161 = vmatprep.subr.mxu0 0.0
    %4162 = vmatpush1.msra.mxu0 %v718
    %4163 = vmatprep.subr.mxu0 0.0
    %4164 = vmatpush1.msra.mxu0 %v719
    %4165 = vmatprep.subr.mxu0 0.0
    %4166 = vmatpush1.msra.mxu0 %v720
    %4167 = vmatprep.subr.mxu0 0.0
    %4168 = vmatpush1.msra.mxu0 %v721
    %4169 = vmatprep.subr.mxu0 0.0
    %4170 = vmatpush1.msra.mxu0 %v722
    %4171 = vmatprep.subr.mxu0 0.0
    %4172 = vmatpush1.msra.mxu0 %v723
    %4173 = vmatprep.subr.mxu0 0.0
    %4174 = vmatpush1.msra.mxu0 %v724
    %4175 = vmatprep.subr.mxu0 0.0
    %4176 = vmatpush1.msra.mxu0 %v725
    %4177 = vmatprep.subr.mxu0 0.0
    %4178 = vmatpush1.msra.mxu0 %v726
    %4179 = vmatprep.subr.mxu0 0.0
    %4180 = vmatpush1.msra.mxu0 %v727
    %4181 = vmatprep.subr.mxu0 0.0
    %4182 = vmatpush1.msra.mxu0 %v728
    %4183 = vmatprep.subr.mxu0 0.0
    %4184 = vmatpush1.msra.mxu0 %v729
    %4185 = vmatprep.subr.mxu0 0.0
    %4186 = vmatpush1.msra.mxu0 %v730
    %4187 = vmatprep.subr.mxu0 0.0
    %4188 = vmatpush1.msra.mxu0 %v731
    %4189 = vmatprep.subr.mxu0 0.0
    %4190 = vmatpush1.msra.mxu0 %v732
    %4191 = vmatprep.subr.mxu0 0.0
    %4192 = vmatpush1.msra.mxu0 %v733
    %4193 = vmatprep.subr.mxu0 0.0
    %4194 = vmatpush1.msra.mxu0 0.0
    %4195 = vmatprep.subr.mxu0 0.0
    %4196 = vmatpush1.msra.mxu0 0.0
    %4197 = vmatprep.subr.mxu0 0.0
    %4198 = vmatpush1.msra.mxu0 0.0
    %4199 = vmatprep.subr.mxu0 0.0
    %4200 = vmatpush1.msra.mxu0 0.0
    %4201 = vmatprep.subr.mxu0 0.0
    %4202 = vmatpush1.msra.mxu0 0.0
    %4203 = vmatprep.subr.mxu0 0.0
    %4204 = vmatpush1.msra.mxu0 0.0
    %4205 = vmatprep.subr.mxu0 0.0
    %4206 = vmatpush1.msra.mxu0 0.0
    %4207 = vmatprep.subr.mxu0 0.0
    %4208 = vmatpush1.msra.mxu0 0.0
    %4209 = vmatprep.subr.mxu0 0.0
    %4210 = vmatpush1.msra.mxu0 0.0
    %4211 = vmatprep.subr.mxu0 0.0
    %4212 = vmatpush1.msra.mxu0 0.0
    %4213 = vmatprep.subr.mxu0 0.0
    %4214 = vmatpush1.msra.mxu0 0.0
    %4215 = vmatprep.subr.mxu0 0.0
    %4216 = vmatpush1.msra.mxu0 0.0
    %4217 = vmatprep.subr.mxu0 0.0
    %4218 = vmatpush1.msra.mxu0 0.0
    %4219 = vmatprep.subr.mxu0 0.0
    %4220 = vmatpush1.msra.mxu0 0.0
    %4221 = vmatprep.subr.mxu0 0.0
    %4222 = vmatpush1.msra.mxu0 0.0
    %4223 = vmatprep.subr.mxu0 0.0
    %4224 = vmatpush1.msra.mxu0 0.0
    %4225 = vmatprep.mubr.f32.mxu0 0.0
    %4226 = vmatmul.mubr.f32.gmra.mrb[0].mxu0 %v4158
    %v4227 = vpop.f32.mrb[0].mxu0
    %v4228 = vadd.f32 %v734, %v4227
    %v4229 = vpop.f32.mrb[0].mxu0
    %4230 = vdwg.mxu0
    %s4231 = scalar_lea.vmem [#allocation3], 40
    %v4232 = vld [vmem:[%s4231] sm:$0xff]
    %v4233 = vmul.f32 %v4228, 0.5
    %v4234 = vmul.f32 %v4233, 1.442695
    %v4235 = vpow.pop %v4234
    %4237 = vrot.lane.b32.xlu0 %v4235, 112
    %v4238 = vpop.permute.xlu0 %4237
    %v4240 = vmul.f32 %v4232, %v4238
    %v4241 = vadd.f32 %v4240, %v4228
    %s4242 = scalar_lea.vmem [#allocation11], 40
    %4243 = vst.msk [vmem:[%s4242] sm:$0xff] %vm97, %v4241
    %4245 = vrot.lane.b32.xlu0 %v4228, 16
    %v4246 = vpop.permute.xlu0 %4245
    %4248 = vst.msk [vmem:[%s4242] sm:$0xff] %vm1337, %v4246
    // Predicated region
    $region38: #{tpu_custom_call.1} parent=1 // pred_check
      _
    $region39: #{tpu_custom_call.1} parent=1 // pred_check_branch
      %4250 = sbr.rel (0) target = $region41
    $region40: #{tpu_custom_call.1} parent=1 // pred_region
      %s4252 = ssub.s32 768, 768
      %4253 = vsyncadd [#allocation5], %s4252
      %s4254 = sshll.u32 [#allocation11], 4
      %s4255 = int_to_ptr.vmem [resolvable:$true] %s4254
      %4260 = dma.vmem_to_hbm [thread:$0]  %s4255, 768, %s5, [#allocation5], 128, 128, 8
    $region41: #{tpu_custom_call.1} parent=1 // pred_fallthru
      _
    // Predicated region
    $region42: #{tpu_custom_call.1} parent=1 // pred_check
      _
    $region43: #{tpu_custom_call.1} parent=1 // pred_check_branch
      %4262 = sbr.rel (0) target = $region45
    $region44: #{tpu_custom_call.1} parent=1 // pred_region
      %s4264 = ssub.s32 256, 256
      %4265 = vsyncadd [#allocation13], %s4264
      %s4266 = sshll.u32 [#allocation12], 4
      %s4267 = int_to_ptr.vmem [resolvable:$true] %s4266
      %4272 = dma.vmem_to_hbm [thread:$0]  %s4267, 256, %s6, [#allocation13], 128, 128, 8
    $region45: #{tpu_custom_call.1} parent=1 // pred_fallthru
      _
    // Predicated region
    $region46: #{tpu_custom_call.1} parent=1 // pred_check
      _
    $region47: #{tpu_custom_call.1} parent=1 // pred_check_branch
      %4274 = sbr.rel (0) target = $region49
    $region48: #{tpu_custom_call.1} parent=1 // pred_region
      %s4276 = ssub.s32 256, 256
      %4277 = vsyncadd [#allocation13], %s4276
      %s4278 = sshll.u32 [#allocation14], 4
      %s4279 = int_to_ptr.vmem [resolvable:$true] %s4278
      %4284 = dma.vmem_to_hbm [thread:$0]  %s4279, 256, %s7, [#allocation13], 128, 128, 8
    $region49: #{tpu_custom_call.1} parent=1 // pred_fallthru
      _
    // Predicated region
    $region50: #{tpu_custom_call.1} parent=1 // pred_check
      _
    $region51: #{tpu_custom_call.1} parent=1 // pred_check_branch
      %4286 = sbr.rel (0) target = $region53
    $region52: #{tpu_custom_call.1} parent=1 // pred_region
      %4287 = dma.done [#allocation5], 768
    $region53: #{tpu_custom_call.1} parent=1 // pred_fallthru
      _
    // Predicated region
    $region54: #{tpu_custom_call.1} parent=1 // pred_check
      _
    $region55: #{tpu_custom_call.1} parent=1 // pred_check_branch
      %4289 = sbr.rel (0) target = $region57
    $region56: #{tpu_custom_call.1} parent=1 // pred_region
      %4290 = dma.done [#allocation13], 256
    $region57: #{tpu_custom_call.1} parent=1 // pred_fallthru
      _
    // Predicated region
    $region58: #{tpu_custom_call.1} parent=1 // pred_check
      _
    $region59: #{tpu_custom_call.1} parent=1 // pred_check_branch
      %4292 = sbr.rel (0) target = $region61
    $region60: #{tpu_custom_call.1} parent=1 // pred_region
      %4293 = dma.done [#allocation13], 256
    $region61: #{tpu_custom_call.1} parent=1 // pred_fallthru
      _
    %4294 = vsyncpa [#allocation4], 1
    %4295 = vsyncpa [#allocation7], 1
    %4296 = vsyncpa [#allocation10], 1
    %4297 = vsyncpa [#allocation5], 1
    %4298 = vsyncpa [#allocation13], 1

</llo_original>
